<compile_context>
chip_gen: v7x
topology: tpu7x:2x2x1
jax: 0.10.0
libtpu: 0.0.40
codegen_flags: <defaults>
</compile_context>

<pallas_src>
import functools
import numpy as np
import jax
import jax.numpy as jnp
from jax import lax
from jax.experimental import pallas as pl
from jax.experimental.pallas import tpu as pltpu


# name, Cin, Cout, spatial (D=H=W), mode, relu  -- spatial sizes fixed by the
# architecture: 64^3 input, four stride-2 pools -> 4^3*16 = 1024 latent feats.
ENC_LAYERS = [
    ("e1", 1, 16, 64, "pool", True),
    ("e2", 16, 32, 32, "pool", True),
    ("e3", 32, 64, 16, "pool", True),
    ("e4", 64, 16, 8, "pool", True),
]
DEC_LAYERS = [
    ("d1", 16, 16, 4, "up", True),
    ("d2", 16, 64, 8, "up", True),
    ("d3", 64, 32, 16, "up", True),
    ("d4", 32, 16, 32, "up", True),
    ("dr", 16, 1, 64, "none", False),
]


# ----------------------------- layout helpers ------------------------------

def to_padded(x):
    """(B, D, H, W, C) -> (B, D, H+2, (W+2)*C): zero H/W borders, lane-dense."""
    B, D, H, W, C = x.shape
    xp = jnp.pad(x, ((0, 0), (0, 0), (1, 1), (1, 1), (0, 0)))
    return xp.reshape(B, D, H + 2, (W + 2) * C)


def from_padded(xp, C):
    """Inverse of to_padded: -> (B, D, H, W, C)."""
    B, D, Hp, WpC = xp.shape
    Wp = WpC // C
    return xp.reshape(B, D, Hp, Wp, C)[:, :, 1:Hp - 1, 1:Wp - 1, :]


def banded_weight(w, W):
    """(3,3,3,Cin,Cout) conv weight -> (9*(W+2)*Cin, (W+2)*Cout) banded matrix.

    Row block j = kd*3 + kh holds, for padded input column wi and padded output
    column wo, the tap w[kd, kh, wi - wo + 1] (zero outside the 3-wide band and
    for the border output columns).  A plain matmul of a W-padded, channel-
    flattened row with this matrix performs the kw taps + Cin contraction of
    the 'same' zero-padded convolution.
    """
    Cin, Cout = w.shape[3], w.shape[4]
    Wp = W + 2
    wi = jnp.arange(Wp)[:, None]
    wo = jnp.arange(Wp)[None, :]
    valid_o = (wo >= 1) & (wo <= W)
    blocks = []
    for kd in range(3):
        for kh in range(3):
            m = jnp.zeros((Wp, Cin, Wp, Cout), jnp.float32)
            for kw in range(3):
                sel = ((wi == wo - 1 + kw) & valid_o).astype(jnp.float32)
                m = m + sel[:, None, :, None] * \
                    w[kd, kh, kw].astype(jnp.float32)[None, :, None, :]
            blocks.append(m.reshape(Wp * Cin, Wp * Cout))
    return jnp.concatenate(blocks, axis=0)


def padded_bias(b, W):
    """(Cout,) bias -> (1, (W+2)*Cout) f32 row, zero on the W borders."""
    Cout = b.shape[0]
    Wp = W + 2
    valid = ((jnp.arange(Wp) >= 1) & (jnp.arange(Wp) <= W)).astype(jnp.float32)
    return (valid[:, None] * b.astype(jnp.float32)[None, :]).reshape(1, Wp * Cout)


# ------------------------------ Pallas kernel -------------------------------

def _conv_kernel(xprev_ref, xmid_ref, xnext_ref, w_ref, b_ref, o_ref, *,
                 TD, n_groups, H, W, Cout, mode, relu):
    """Fused conv(+ReLU)(+pool/upsample) for TD output depth slices."""
    g = pl.program_id(1)
    K = xmid_ref.shape[-1]              # (W+2)*Cin
    N = (W + 2) * Cout

    # Depth window [d0-1, d0+TD] with zeroed halo at the volume edges.
    lead = xprev_ref[0]
    lead = jnp.where(g > 0, lead, jnp.zeros_like(lead))
    tail = xnext_ref[0]
    tail = jnp.where(g < n_groups - 1, tail, jnp.zeros_like(tail))
    win = jnp.concatenate([lead[None], xmid_ref[...], tail[None]], axis=0)

    # im2col of the 9 (kd, kh) taps along the contraction dim -> ONE matmul.
    parts = [win[kd:kd + TD, kh:kh + H, :].reshape(TD * H, K)
             for kd in range(3) for kh in range(3)]
    lhs = jnp.concatenate(parts, axis=-1)                       # (TD*H, 9K)

    acc = jnp.dot(lhs, w_ref[...], preferred_element_type=jnp.float32)
    acc = acc.reshape(TD, H, N) + b_ref[...].reshape(1, 1, N)
    if relu:
        acc = jnp.maximum(acc, 0.0)
    img = acc[:, :, Cout:(W + 1) * Cout]                        # (TD, H, W*Cout)

    if mode == "none":
        o_ref[...] = img.astype(o_ref.dtype)
    elif mode == "pool":                                        # MaxPool3d(2)
        Ho, Wo = H // 2, W // 2
        p = img.reshape(TD // 2, 2, H, W * Cout).max(axis=1)          # depth
        p = p.reshape(TD // 2, Ho, 2, W * Cout).max(axis=2)           # rows
        p = p.reshape(TD // 2, Ho, Wo, 2 * Cout)
        p = jnp.maximum(p[..., :Cout], p[..., Cout:])                 # cols
        p = p.reshape(TD // 2, Ho, Wo * Cout)
        o_ref[...] = jnp.zeros((TD // 2, Ho + 2, (Wo + 2) * Cout), o_ref.dtype)
        o_ref[:, 1:Ho + 1, Cout:(Wo + 1) * Cout] = p.astype(o_ref.dtype)
    else:                                                        # Upsample x2
        L = 2 * W * Cout
        a = img.reshape(TD, H, W, Cout)
        a = jnp.concatenate([a, a], axis=-1).reshape(TD, H, L)        # W x2
        a = jnp.concatenate([a.reshape(TD, H, 1, L)] * 2, axis=2)
        a = a.reshape(TD, 2 * H, L)                                   # H x2
        a = jnp.concatenate([a.reshape(TD, 1, 2 * H, L)] * 2, axis=1)
        a = a.reshape(2 * TD, 2 * H, L)                               # D x2
        o_ref[...] = jnp.zeros((2 * TD, 2 * H + 2, (2 * W + 2) * Cout),
                               o_ref.dtype)
        o_ref[:, 1:2 * H + 1, Cout:(2 * W + 1) * Cout] = a.astype(o_ref.dtype)


def _pick_td(D, H, K, itemsize, mode):
    """Depth slices per grid step, sized from the per-slice im2col footprint."""
    per_slice = H * 9 * K * itemsize           # lhs bytes contributed per slice
    if per_slice <= 100_000:
        td = 16                                # tiny contraction (e.g. Cin=1)
    elif per_slice <= 400_000:
        td = 8
    else:
        td = 4
    td = min(td, D)
    while D % td or (mode == "pool" and td % 2):
        td //= 2
    return max(td, 2 if mode == "pool" else 1)


def conv_block(x, wbig, brow, *, D, H, W, Cin, Cout, mode, relu,
               out_dtype=jnp.bfloat16):
    """x: (B, D, H+2, (W+2)*Cin); wbig: (9*(W+2)*Cin, (W+2)*Cout); brow: (1, (W+2)*Cout)."""
    B = x.shape[0]
    Hp = H + 2
    K = (W + 2) * Cin
    N = (W + 2) * Cout

    TD = _pick_td(D, H, K, x.dtype.itemsize, mode)
    assert D % TD == 0
    if mode == "pool":
        assert TD % 2 == 0 and H % 2 == 0 and W % 2 == 0
    n_groups = D // TD

    if mode == "pool":
        out_shape = jax.ShapeDtypeStruct(
            (B, D // 2, H // 2 + 2, (W // 2 + 2) * Cout), out_dtype)
        out_spec = pl.BlockSpec((None, TD // 2, H // 2 + 2, (W // 2 + 2) * Cout),
                                lambda bi, gi: (bi, gi, 0, 0))
    elif mode == "up":
        out_shape = jax.ShapeDtypeStruct(
            (B, 2 * D, 2 * H + 2, (2 * W + 2) * Cout), out_dtype)
        out_spec = pl.BlockSpec((None, 2 * TD, 2 * H + 2, (2 * W + 2) * Cout),
                                lambda bi, gi: (bi, gi, 0, 0))
    else:
        out_shape = jax.ShapeDtypeStruct((B, D, H, W * Cout), out_dtype)
        out_spec = pl.BlockSpec((None, TD, H, W * Cout),
                                lambda bi, gi: (bi, gi, 0, 0))

    kernel = functools.partial(_conv_kernel, TD=TD, n_groups=n_groups,
                               H=H, W=W, Cout=Cout, mode=mode, relu=relu)

    return pl.pallas_call(
        kernel,
        out_shape=out_shape,
        grid=(B, n_groups),
        in_specs=[
            # previous depth slice (halo), clamped at the volume edge
            pl.BlockSpec((None, 1, Hp, K),
                         lambda bi, gi: (bi, jnp.maximum(gi * TD - 1, 0), 0, 0)),
            # TD depth slices of this group
            pl.BlockSpec((None, TD, Hp, K), lambda bi, gi: (bi, gi, 0, 0)),
            # next depth slice (halo), clamped
            pl.BlockSpec((None, 1, Hp, K),
                         lambda bi, gi: (bi, jnp.minimum(gi * TD + TD, D - 1), 0, 0)),
            pl.BlockSpec((9 * K, N), lambda bi, gi: (0, 0)),
            pl.BlockSpec((1, N), lambda bi, gi: (0, 0)),
        ],
        out_specs=out_spec,
        compiler_params=pltpu.CompilerParams(
            dimension_semantics=("parallel", "parallel"),
            vmem_limit_bytes=48 * 1024 * 1024),
    )(x, x, x, wbig, brow)


# ------------------------- parameters (torch-like init) ---------------------

def _uniform(key, shape, fan_in):
    bound = 1.0 / np.sqrt(fan_in)
    return jax.random.uniform(key, shape, jnp.float32, -bound, bound)


def init_raw_params(key, len_z=32):
    keys = iter(jax.random.split(key, 64))
    p = {}
    for name, cin, cout, _, _, _ in ENC_LAYERS:
        w = _uniform(next(keys), (cout, cin, 3, 3, 3), cin * 27)   # torch Conv3d
        b = _uniform(next(keys), (cout,), cin * 27)
        p[name] = (w.transpose(2, 3, 4, 1, 0), b)                  # (3,3,3,Cin,Cout)
    for name, cin, cout, _, _, _ in DEC_LAYERS:
        w = _uniform(next(keys), (cin, cout, 3, 3, 3), cout * 27)  # torch ConvTranspose3d
        b = _uniform(next(keys), (cout,), cout * 27)
        # convT(k=3, s=1, p=1) == conv with spatially flipped kernel, channels swapped
        p[name] = (jnp.flip(w, axis=(2, 3, 4)).transpose(2, 3, 4, 0, 1), b)
    we = _uniform(next(keys), (len_z, 1024), 1024)
    be = _uniform(next(keys), (len_z,), 1024)
    wd = _uniform(next(keys), (1024, len_z), len_z)
    bd = _uniform(next(keys), (1024,), len_z)
    p["e_lin"] = (we.T, be)                                        # stored (in, out)
    p["d_lin"] = (wd.T, bd)
    return p


@jax.jit
def prepare_params(raw):
    """One-time reparameterization: banded bf16 conv weights + padded f32 bias rows."""
    prep = {}
    for name, cin, cout, S, _, _ in ENC_LAYERS + DEC_LAYERS:
        w, b = raw[name]
        prep[name] = (banded_weight(w, S).astype(jnp.bfloat16), padded_bias(b, S))
    prep["e_lin"] = raw["e_lin"]
    prep["d_lin"] = raw["d_lin"]
    return prep


# ------------------------------- AE forward ---------------------------------

def ae_forward(params, x1):
    """x1: (B, 1, 64, 64, 64) NCDHW float32 -> (z1, r1) like the torch AE."""
    B = x1.shape[0]
    x = jnp.transpose(x1, (0, 2, 3, 4, 1))                 # NDHWC
    h = to_padded(x).astype(jnp.bfloat16)                  # (B, 64, 66, 66)

    for name, cin, cout, S, mode, relu in ENC_LAYERS:
        w, b = params[name]
        h = conv_block(h, w, b, D=S, H=S, W=S, Cin=cin, Cout=cout,
                       mode=mode, relu=relu)

    # flatten exactly like torch .view on (B, 16, 4, 4, 4) NCDHW
    feat = from_padded(h, 16).astype(jnp.float32)          # (B, 4, 4, 4, 16)
    flat = jnp.transpose(feat, (0, 4, 1, 2, 3)).reshape(B, 1024)
    we, be = params["e_lin"]
    z1 = flat @ we + be                                    # tiny: plain XLA matmul

    wd, bd = params["d_lin"]
    d = z1 @ wd + bd                                       # (B, 1024)
    d = d.reshape(B, 16, 4, 4, 4).transpose(0, 2, 3, 4, 1) # torch .view -> NDHWC
    h = to_padded(d).astype(jnp.bfloat16)                  # (B, 4, 6, 96)

    for name, cin, cout, S, mode, relu in DEC_LAYERS:
        w, b = params[name]
        out_dtype = jnp.float32 if mode == "none" else jnp.bfloat16
        h = conv_block(h, w, b, D=S, H=S, W=S, Cin=cin, Cout=cout,
                       mode=mode, relu=relu, out_dtype=out_dtype)

    r1 = h.reshape(B, 1, 64, 64, 64)                       # back to NCDHW (C=1)
    return z1, r1


# --------------------------- small correctness checks ------------------------

def _self_test():
    """Check the fused conv kernel (all 3 modes) against lax references."""
    key = jax.random.PRNGKey(42)
    kx, kw, kb = jax.random.split(key, 3)
    B, S, Ci, Co = 1, 16, 8, 16
    x = jax.random.normal(kx, (B, S, S, S, Ci), jnp.float32)
    w = jax.random.normal(kw, (3, 3, 3, Ci, Co), jnp.float32) * 0.1
    b = jax.random.normal(kb, (Co,), jnp.float32)

    conv_ref = lax.conv_general_dilated(
        x, w, (1, 1, 1), "SAME",
        dimension_numbers=("NDHWC", "DHWIO", "NDHWC"),
        precision=lax.Precision.HIGHEST) + b
    relu_ref = jnp.maximum(conv_ref, 0.0)

    xp = to_padded(x)
    wbig = banded_weight(w, S)
    brow = padded_bias(b, S)

    def run(mode, relu):
        return conv_block(xp, wbig, brow, D=S, H=S, W=S, Cin=Ci, Cout=Co,
                          mode=mode, relu=relu, out_dtype=jnp.float32)

    got = run("none", False).reshape(B, S, S, S, Co)
    err = float(jnp.max(jnp.abs(got - conv_ref)))
    assert err < 5e-2, f"conv check failed: max abs err {err}"

    got = from_padded(run("pool", True), Co)
    ref = lax.reduce_window(relu_ref, -jnp.inf, lax.max,
                            (1, 2, 2, 2, 1), (1, 2, 2, 2, 1), "VALID")
    err = float(jnp.max(jnp.abs(got - ref)))
    assert err < 5e-2, f"conv+pool check failed: max abs err {err}"

    got = from_padded(run("up", True), Co)
    ref = jnp.repeat(jnp.repeat(jnp.repeat(relu_ref, 2, 1), 2, 2), 2, 3)
    err = float(jnp.max(jnp.abs(got - ref)))
    assert err < 5e-2, f"conv+upsample check failed: max abs err {err}"


# ---------------------------------- main -------------------------------------

if __name__ == "__main__":
    _self_test()

    key = jax.random.PRNGKey(0)
    pkey, xkey = jax.random.split(key)
    LEN_Z = 32                       # module default is 512; latent kept small
    raw = init_raw_params(pkey, len_z=LEN_Z)
    params = prepare_params(raw)

    # Architecture requires a 64^3 input (four MaxPool3d(2) -> 4^3 * 16 = 1024).
    x1 = jax.random.normal(xkey, (1, 1, 64, 64, 64), jnp.float32)

    fwd = jax.jit(ae_forward)
    z1, r1 = fwd(params, x1)
    jax.block_until_ready((z1, r1))

    assert z1.shape == (1, LEN_Z)
    assert r1.shape == (1, 1, 64, 64, 64)
    assert bool(jnp.all(jnp.isfinite(z1))) and bool(jnp.all(jnp.isfinite(r1)))
    print("KERNEL_OK")
</pallas_src>

<mosaic_0001>
module attributes {stable_mosaic.version = 11 : i64} {
  func.func @_conv_kernel(%arg0: i32, %arg1: i32, %arg2: memref<1x1x18x144xf32, #tpu.memory_space<vmem>>, %arg3: memref<1x16x18x144xf32, #tpu.memory_space<vmem>>, %arg4: memref<1x1x18x144xf32, #tpu.memory_space<vmem>>, %arg5: memref<1296x288xf32, #tpu.memory_space<vmem>>, %arg6: memref<1x288xf32, #tpu.memory_space<vmem>>, %arg7: memref<1x16x16x256xf32, #tpu.memory_space<vmem>>) attributes {dimension_semantics = [#tpu.dimension_semantics<parallel>, #tpu.dimension_semantics<parallel>], iteration_bounds = array<i64: 1, 1>, scalar_prefetch = 0 : i64, scratch_operands = 0 : i64, tpu.core_type = #tpu.core_type<tc>, window_params = [{transform_indices = @transform_0, window_bounds = array<i64: 1, 1, 18, 144>}, {transform_indices = @transform_1, window_bounds = array<i64: 1, 16, 18, 144>}, {transform_indices = @transform_2, window_bounds = array<i64: 1, 1, 18, 144>}, {pipeline_mode = #tpu.pipeline_mode<synchronous>, transform_indices = @transform_3, window_bounds = array<i64: 1296, 288>}, {pipeline_mode = #tpu.pipeline_mode<synchronous>, transform_indices = @transform_4, window_bounds = array<i64: 1, 288>}, {transform_indices = @transform_5, window_bounds = array<i64: 1, 16, 16, 256>}]} {
    %c0 = arith.constant 0 : index
    %c0_0 = arith.constant 0 : index
    %c0_1 = arith.constant 0 : index
    %c0_2 = arith.constant 0 : index
    %0 = vector.load %arg2[%c0, %c0_0, %c0_1, %c0_2] : memref<1x1x18x144xf32, #tpu.memory_space<vmem>>, vector<1x1x18x144xf32>
    %1 = vector.shape_cast %0 : vector<1x1x18x144xf32> to vector<18x144xf32>
    %c0_i32 = arith.constant 0 : i32
    %2 = arith.cmpi sgt, %arg1, %c0_i32 : i32
    %cst = arith.constant 0.000000e+00 : f32
    %3 = vector.broadcast %cst : f32 to vector<18x144xf32>
    %4 = arith.select %2, %1, %3 : vector<18x144xf32>
    %c0_3 = arith.constant 0 : index
    %c0_4 = arith.constant 0 : index
    %c0_5 = arith.constant 0 : index
    %c0_6 = arith.constant 0 : index
    %5 = vector.load %arg4[%c0_3, %c0_4, %c0_5, %c0_6] : memref<1x1x18x144xf32, #tpu.memory_space<vmem>>, vector<1x1x18x144xf32>
    %6 = vector.shape_cast %5 : vector<1x1x18x144xf32> to vector<18x144xf32>
    %c0_i32_7 = arith.constant 0 : i32
    %7 = arith.cmpi slt, %arg1, %c0_i32_7 : i32
    %cst_8 = arith.constant 0.000000e+00 : f32
    %8 = vector.broadcast %cst_8 : f32 to vector<18x144xf32>
    %9 = arith.select %7, %6, %8 : vector<18x144xf32>
    %10 = vector.shape_cast %4 : vector<18x144xf32> to vector<1x18x144xf32>
    %c0_9 = arith.constant 0 : index
    %c0_10 = arith.constant 0 : index
    %c0_11 = arith.constant 0 : index
    %c0_12 = arith.constant 0 : index
    %11 = vector.load %arg3[%c0_9, %c0_10, %c0_11, %c0_12] : memref<1x16x18x144xf32, #tpu.memory_space<vmem>>, vector<1x16x18x144xf32>
    %12 = vector.shape_cast %11 : vector<1x16x18x144xf32> to vector<16x18x144xf32>
    %13 = vector.shape_cast %9 : vector<18x144xf32> to vector<1x18x144xf32>
    %14 = tpu.concatenate %10, %12, %13 in 0 : vector<1x18x144xf32>, vector<16x18x144xf32>, vector<1x18x144xf32> -> vector<18x18x144xf32>
    %15 = vector.extract_strided_slice %14 {offsets = [0, 0, 0], sizes = [16, 16, 144], strides = [1, 1, 1]} : vector<18x18x144xf32> to vector<16x16x144xf32>
    %16 = vector.shape_cast %15 : vector<16x16x144xf32> to vector<256x144xf32>
    %17 = vector.extract_strided_slice %14 {offsets = [0, 1, 0], sizes = [16, 16, 144], strides = [1, 1, 1]} : vector<18x18x144xf32> to vector<16x16x144xf32>
    %18 = vector.shape_cast %17 : vector<16x16x144xf32> to vector<256x144xf32>
    %19 = vector.extract_strided_slice %14 {offsets = [0, 2, 0], sizes = [16, 16, 144], strides = [1, 1, 1]} : vector<18x18x144xf32> to vector<16x16x144xf32>
    %20 = vector.shape_cast %19 : vector<16x16x144xf32> to vector<256x144xf32>
    %21 = vector.extract_strided_slice %14 {offsets = [1, 0, 0], sizes = [16, 16, 144], strides = [1, 1, 1]} : vector<18x18x144xf32> to vector<16x16x144xf32>
    %22 = vector.shape_cast %21 : vector<16x16x144xf32> to vector<256x144xf32>
    %23 = vector.extract_strided_slice %14 {offsets = [1, 1, 0], sizes = [16, 16, 144], strides = [1, 1, 1]} : vector<18x18x144xf32> to vector<16x16x144xf32>
    %24 = vector.shape_cast %23 : vector<16x16x144xf32> to vector<256x144xf32>
    %25 = vector.extract_strided_slice %14 {offsets = [1, 2, 0], sizes = [16, 16, 144], strides = [1, 1, 1]} : vector<18x18x144xf32> to vector<16x16x144xf32>
    %26 = vector.shape_cast %25 : vector<16x16x144xf32> to vector<256x144xf32>
    %27 = vector.extract_strided_slice %14 {offsets = [2, 0, 0], sizes = [16, 16, 144], strides = [1, 1, 1]} : vector<18x18x144xf32> to vector<16x16x144xf32>
    %28 = vector.shape_cast %27 : vector<16x16x144xf32> to vector<256x144xf32>
    %29 = vector.extract_strided_slice %14 {offsets = [2, 1, 0], sizes = [16, 16, 144], strides = [1, 1, 1]} : vector<18x18x144xf32> to vector<16x16x144xf32>
    %30 = vector.shape_cast %29 : vector<16x16x144xf32> to vector<256x144xf32>
    %31 = vector.extract_strided_slice %14 {offsets = [2, 2, 0], sizes = [16, 16, 144], strides = [1, 1, 1]} : vector<18x18x144xf32> to vector<16x16x144xf32>
    %32 = vector.shape_cast %31 : vector<16x16x144xf32> to vector<256x144xf32>
    %33 = tpu.concatenate %16, %18, %20, %22, %24, %26, %28, %30, %32 in 1 : vector<256x144xf32>, vector<256x144xf32>, vector<256x144xf32>, vector<256x144xf32>, vector<256x144xf32>, vector<256x144xf32>, vector<256x144xf32>, vector<256x144xf32>, vector<256x144xf32> -> vector<256x1296xf32>
    %c0_13 = arith.constant 0 : index
    %c0_14 = arith.constant 0 : index
    %34 = vector.load %arg5[%c0_13, %c0_14] : memref<1296x288xf32, #tpu.memory_space<vmem>>, vector<1296x288xf32>
    %cst_15 = arith.constant dense<0.000000e+00> : vector<256x288xf32>
    %35 = tpu.matmul %33, %34, %cst_15 {dimension_numbers = #tpu.dot_dimension_numbers<[1], [0], [0], [1], [0, 0, 1, 1], [], []>} : vector<256x1296xf32>, vector<1296x288xf32>, vector<256x288xf32> -> vector<256x288xf32>
    %36 = vector.shape_cast %35 : vector<256x288xf32> to vector<16x16x288xf32>
    %c0_16 = arith.constant 0 : index
    %c0_17 = arith.constant 0 : index
    %37 = vector.load %arg6[%c0_16, %c0_17] : memref<1x288xf32, #tpu.memory_space<vmem>>, vector<1x288xf32>
    %38 = vector.shape_cast %37 : vector<1x288xf32> to vector<1x1x288xf32>
    %39 = vector.broadcast %38 : vector<1x1x288xf32> to vector<16x16x288xf32>
    %40 = arith.addf %36, %39 : vector<16x16x288xf32>
    %41 = vector.extract_strided_slice %40 {offsets = [0, 0, 16], sizes = [16, 16, 256], strides = [1, 1, 1]} : vector<16x16x288xf32> to vector<16x16x256xf32>
    %c0_18 = arith.constant 0 : index
    %c0_19 = arith.constant 0 : index
    %c0_20 = arith.constant 0 : index
    %c0_21 = arith.constant 0 : index
    %42 = vector.load %arg7[%c0_18, %c0_19, %c0_20, %c0_21] : memref<1x16x16x256xf32, #tpu.memory_space<vmem>>, vector<1x16x16x256xf32>
    %43 = vector.shape_cast %42 : vector<1x16x16x256xf32> to vector<16x16x256xf32>
    %44 = vector.shape_cast %41 : vector<16x16x256xf32> to vector<1x16x16x256xf32>
    tpu.vector_store %arg7[%c0_18, %c0_19, %c0_20, %c0_21], %44 {strides = array<i32>} : memref<1x16x16x256xf32, #tpu.memory_space<vmem>>, vector<1x16x16x256xf32>,
    return
  }
  func.func @transform_0(%arg0: i32, %arg1: i32) -> (i32, i32, i32, i32) {
    %c16_i32 = arith.constant 16 : i32
    %0 = arith.muli %arg1, %c16_i32 : i32
    %c1_i32 = arith.constant 1 : i32
    %1 = arith.subi %0, %c1_i32 : i32
    %c0_i32 = arith.constant 0 : i32
    %2 = arith.maxsi %1, %c0_i32 : i32
    %c0_i32_0 = arith.constant 0 : i32
    %c0_i32_1 = arith.constant 0 : i32
    %c0_i32_2 = arith.constant 0 : i32
    return %arg0, %2, %c0_i32_0, %c0_i32_1 : i32, i32, i32, i32
  }
  func.func @transform_1(%arg0: i32, %arg1: i32) -> (i32, i32, i32, i32) {
    %c0_i32 = arith.constant 0 : i32
    %c0_i32_0 = arith.constant 0 : i32
    %c0_i32_1 = arith.constant 0 : i32
    return %arg0, %arg1, %c0_i32, %c0_i32_0 : i32, i32, i32, i32
  }
  func.func @transform_2(%arg0: i32, %arg1: i32) -> (i32, i32, i32, i32) {
    %c16_i32 = arith.constant 16 : i32
    %0 = arith.muli %arg1, %c16_i32 : i32
    %c16_i32_0 = arith.constant 16 : i32
    %1 = arith.addi %0, %c16_i32_0 : i32
    %c15_i32 = arith.constant 15 : i32
    %2 = arith.minsi %1, %c15_i32 : i32
    %c0_i32 = arith.constant 0 : i32
    %c0_i32_1 = arith.constant 0 : i32
    %c0_i32_2 = arith.constant 0 : i32
    return %arg0, %2, %c0_i32, %c0_i32_1 : i32, i32, i32, i32
  }
  func.func @transform_3(%arg0: i32, %arg1: i32) -> (i32, i32) {
    %c0_i32 = arith.constant 0 : i32
    %c0_i32_0 = arith.constant 0 : i32
    %c0_i32_1 = arith.constant 0 : i32
    return %c0_i32, %c0_i32_0 : i32, i32
  }
  func.func @transform_4(%arg0: i32, %arg1: i32) -> (i32, i32) {
    %c0_i32 = arith.constant 0 : i32
    %c0_i32_0 = arith.constant 0 : i32
    %c0_i32_1 = arith.constant 0 : i32
    return %c0_i32, %c0_i32_0 : i32, i32
  }
  func.func @transform_5(%arg0: i32, %arg1: i32) -> (i32, i32, i32, i32) {
    %c0_i32 = arith.constant 0 : i32
    %c0_i32_0 = arith.constant 0 : i32
    %c0_i32_1 = arith.constant 0 : i32
    return %arg0, %arg1, %c0_i32, %c0_i32_0 : i32, i32, i32, i32
  }
}

</mosaic_0001>

<llo_original>
// kernel: tpu_custom_call.1
$region0: #{tpu_custom_call.1}
  #allocation0 [shape = 'u32[]', space=smem, size = 0x4, offset = 0x4, fixed_abs, tag = 'smem constant byte address 0x4 - core index']
  #allocation1 [shape = 'u32[144,128]{1,0:T(1,128)}', space=vmem, size = 0x12000, scoped, tag = 'internal scratch']
  %s0 = inlined_call_operand.vmem [shape: f32[1,16,18,144], index: 0, kind: input, shape index: {}]
  %s1 = inlined_call_operand.vmem [shape: f32[1,16,18,144], index: 1, kind: input, shape index: {}]
  %s2 = inlined_call_operand.vmem [shape: f32[1,16,18,144], index: 2, kind: input, shape index: {}]
  %s3 = inlined_call_operand.vmem [shape: f32[1296,288], index: 3, kind: input, shape index: {}]
  %s4 = inlined_call_operand.vmem [shape: f32[1,288], index: 4, kind: input, shape index: {}]
  %s5 = inlined_call_operand.hbm [shape: f32[1,16,16,256], index: 5, kind: output, shape index: {}]
  %s6 = sld [smem:[#allocation0]]
  $region30: #{tpu_custom_call.1} parent=0
    _
  %s8 = ssub.s32 1, %s6
  %s9 = scalar_select 0, %s8, %s6
  $region1: #{tpu_custom_call.1} parent=0
    #allocation2 [shape = 'u8[262144]{0}', space=vmem, size = 0x40000, scoped, tag = 'output window, operand 0, single buffered']
    #allocation3 [shape = 's32[1]{0}', space=sflag, size = 0x4, scoped, tag = 'scoped memory for tpu_custom_call.1']
    %10 = vsyncpa [#allocation3], 0
    // Predicated region
    $region2: #{tpu_custom_call.1} parent=1 // pred_check
      _
    $region3: #{tpu_custom_call.1} parent=1 // pred_check_branch
      %12 = sbr.rel (0) target = $region5
    $region4: #{tpu_custom_call.1} parent=1 // pred_region
      %s13 = smul.u32 0, 16
      %s14 = ssub.s32 %s13, 1
      %p15 = scmp.gt.s32.totalorder %s14, 0
      %s16 = scalar_select %p15, %s14, 0
      %p17 = scmp.lt.s32.totalorder %s16, 15
      %s18 = scalar_select %p17, %s16, 15
      %s19 = smul.addr %s18, 6
      %s20 = smul.addr %s19, 8
      %s21 = scalar_lea.vmem %s0, %s20
      %s22 = smul.u32 0, 16
      %s23 = ssub.s32 %s22, 1
      %p24 = scmp.gt.s32.totalorder %s23, 0
      %s25 = scalar_select %p24, %s23, 0
    $region5: #{tpu_custom_call.1} parent=1 // pred_fallthru
      _
    // Predicated region
    $region6: #{tpu_custom_call.1} parent=1 // pred_check
      _
    $region7: #{tpu_custom_call.1} parent=1 // pred_check_branch
      %27 = sbr.rel (0) target = $region9
    $region8: #{tpu_custom_call.1} parent=1 // pred_region
      _
    $region9: #{tpu_custom_call.1} parent=1 // pred_fallthru
      _
    // Predicated region
    $region10: #{tpu_custom_call.1} parent=1 // pred_check
      _
    $region11: #{tpu_custom_call.1} parent=1 // pred_check_branch
      %29 = sbr.rel (0) target = $region13
    $region12: #{tpu_custom_call.1} parent=1 // pred_region
      %s30 = smul.u32 0, 16
      %s31 = sadd.s32 %s30, 16
      %p32 = scmp.lt.s32.totalorder %s31, 15
      %s33 = scalar_select %p32, %s31, 15
      %p34 = scmp.lt.s32.totalorder %s33, 15
      %s35 = scalar_select %p34, %s33, 15
      %s36 = smul.addr %s35, 6
      %s37 = smul.addr %s36, 8
      %s38 = scalar_lea.vmem %s2, %s37
      %s39 = smul.u32 0, 16
      %s40 = sadd.s32 %s39, 16
      %p41 = scmp.lt.s32.totalorder %s40, 15
      %s42 = scalar_select %p41, %s40, 15
    $region13: #{tpu_custom_call.1} parent=1 // pred_fallthru
      _
    // Predicated region
    $region14: #{tpu_custom_call.1} parent=1 // pred_check
      _
    $region15: #{tpu_custom_call.1} parent=1 // pred_check_branch
      %44 = sbr.rel (0) target = $region17
    $region16: #{tpu_custom_call.1} parent=1 // pred_region
      _
    $region17: #{tpu_custom_call.1} parent=1 // pred_fallthru
      _
    // Predicated region
    $region18: #{tpu_custom_call.1} parent=1 // pred_check
      _
    $region19: #{tpu_custom_call.1} parent=1 // pred_check_branch
      %46 = sbr.rel (0) target = $region21
    $region20: #{tpu_custom_call.1} parent=1 // pred_region
      _
    $region21: #{tpu_custom_call.1} parent=1 // pred_fallthru
      _
    %s47 = smul.u32 0, 16
    %s48 = ssub.s32 %s47, 1
    %p49 = scmp.gt.s32.totalorder %s48, 0
    %s50 = scalar_select %p49, %s48, 0
    %p51 = scmp.lt.s32.totalorder %s50, 15
    %s52 = scalar_select %p51, %s50, 15
    %s53 = smul.addr %s52, 6
    %s54 = smul.addr %s53, 8
    %s55 = scalar_lea.vmem %s0, %s54
    %s56 = smul.u32 0, 16
    %s57 = sadd.s32 %s56, 16
    %p58 = scmp.lt.s32.totalorder %s57, 15
    %s59 = scalar_select %p58, %s57, 15
    %p60 = scmp.lt.s32.totalorder %s59, 15
    %s61 = scalar_select %p60, %s59, 15
    %s62 = smul.addr %s61, 6
    %s63 = smul.addr %s62, 8
    %s64 = scalar_lea.vmem %s2, %s63
    %s65 = smul.u32 0, 16
    %s66 = ssub.s32 %s65, 1
    %p67 = scmp.gt.s32.totalorder %s66, 0
    %s68 = scalar_select %p67, %s66, 0
    %p69 = scmp.lt.s32.totalorder %s68, 15
    %s70 = scalar_select %p69, %s68, 15
    %s71 = smul.addr %s70, 6
    %s72 = smul.addr %s71, 8
    %s73 = scalar_lea.vmem %s0, %s72
    %s74 = smul.u32 0, 16
    %s75 = ssub.s32 %s74, 1
    %p76 = scmp.gt.s32.totalorder %s75, 0
    %s77 = scalar_select %p76, %s75, 0
    %s78 = smul.u32 0, 16
    %s79 = sadd.s32 %s78, 16
    %p80 = scmp.lt.s32.totalorder %s79, 15
    %s81 = scalar_select %p80, %s79, 15
    %p82 = scmp.lt.s32.totalorder %s81, 15
    %s83 = scalar_select %p82, %s81, 15
    %s84 = smul.addr %s83, 6
    %s85 = smul.addr %s84, 8
    %s86 = scalar_lea.vmem %s2, %s85
    %s87 = smul.u32 0, 16
    %s88 = sadd.s32 %s87, 16
    %p89 = scmp.lt.s32.totalorder %s88, 15
    %s90 = scalar_select %p89, %s88, 15
    %v91 = vld [vmem:[%s73] sm:$0xff]
    %v92 = vld [vmem:[%s73 + $0x8] sm:$0xff]
    %v93 = vld [vmem:[%s73 + $0x10] sm:$0xff]
    %v94 = vld [vmem:[%s73 + $0x18] sm:$0xff]
    %v95 = vld [vmem:[%s73 + $0x20] sm:$0x3]
    %v96 = vld [vmem:[%s73 + $0x28] sm:$0x3]
    %p97 = scmp.gt.s32.totalorder 0, 0
    %s98 = scalar_select %p97, 1, 0
    %v99 = vstv %s98
    %vm100 = vcmp.eq.s32.totalorder %v99, 1
    %v101 = vsel %vm100, %v91, 0.0
    %v102 = vsel %vm100, %v92, 0.0
    %v103 = vsel %vm100, %v93, 0.0
    %v104 = vsel %vm100, %v94, 0.0
    %v105 = vsel %vm100, %v95, 0.0
    %v106 = vsel %vm100, %v96, 0.0
    %v107 = vld [vmem:[%s86] sm:$0xff]
    %v108 = vld [vmem:[%s86 + $0x8] sm:$0xff]
    %v109 = vld [vmem:[%s86 + $0x10] sm:$0xff]
    %v110 = vld [vmem:[%s86 + $0x18] sm:$0xff]
    %v111 = vld [vmem:[%s86 + $0x20] sm:$0x3]
    %v112 = vld [vmem:[%s86 + $0x28] sm:$0x3]
    %p113 = scmp.lt.s32.totalorder 0, 0
    %s114 = scalar_select %p113, 1, 0
    %v115 = vstv %s114
    %vm116 = vcmp.eq.s32.totalorder %v115, 1
    %v117 = vsel %vm116, %v107, 0.0
    %v118 = vsel %vm116, %v108, 0.0
    %v119 = vsel %vm116, %v109, 0.0
    %v120 = vsel %vm116, %v110, 0.0
    %v121 = vsel %vm116, %v111, 0.0
    %v122 = vsel %vm116, %v112, 0.0
    %v123 = vld [vmem:[%s1] sm:$0xff]
    %v124 = vld [vmem:[%s1 + $0x8] sm:$0xff]
    %v125 = vld [vmem:[%s1 + $0x10] sm:$0xff]
    %v126 = vld [vmem:[%s1 + $0x18] sm:$0xff]
    %v127 = vld [vmem:[%s1 + $0x20] sm:$0x3]
    %v128 = vld [vmem:[%s1 + $0x28] sm:$0x3]
    %v129 = vld [vmem:[%s1 + $0x30] sm:$0xff]
    %v130 = vld [vmem:[%s1 + $0x38] sm:$0xff]
    %v131 = vld [vmem:[%s1 + $0x40] sm:$0xff]
    %v132 = vld [vmem:[%s1 + $0x48] sm:$0xff]
    %v133 = vld [vmem:[%s1 + $0x50] sm:$0x3]
    %v134 = vld [vmem:[%s1 + $0x58] sm:$0x3]
    %v135 = vld [vmem:[%s1 + $0x60] sm:$0xff]
    %v136 = vld [vmem:[%s1 + $0x68] sm:$0xff]
    %v137 = vld [vmem:[%s1 + $0x70] sm:$0xff]
    %v138 = vld [vmem:[%s1 + $0x78] sm:$0xff]
    %v139 = vld [vmem:[%s1 + $0x80] sm:$0x3]
    %v140 = vld [vmem:[%s1 + $0x88] sm:$0x3]
    %v141 = vld [vmem:[%s1 + $0x90] sm:$0xff]
    %v142 = vld [vmem:[%s1 + $0x98] sm:$0xff]
    %v143 = vld [vmem:[%s1 + $0xa0] sm:$0xff]
    %v144 = vld [vmem:[%s1 + $0xa8] sm:$0xff]
    %v145 = vld [vmem:[%s1 + $0xb0] sm:$0x3]
    %v146 = vld [vmem:[%s1 + $0xb8] sm:$0x3]
    %v147 = vld [vmem:[%s1 + $0xc0] sm:$0xff]
    %v148 = vld [vmem:[%s1 + $0xc8] sm:$0xff]
    %v149 = vld [vmem:[%s1 + $0xd0] sm:$0xff]
    %v150 = vld [vmem:[%s1 + $0xd8] sm:$0xff]
    %v151 = vld [vmem:[%s1 + $0xe0] sm:$0x3]
    %v152 = vld [vmem:[%s1 + $0xe8] sm:$0x3]
    %v153 = vld [vmem:[%s1 + $0xf0] sm:$0xff]
    %v154 = vld [vmem:[%s1 + $0xf8] sm:$0xff]
    %v155 = vld [vmem:[%s1 + $0x100] sm:$0xff]
    %v156 = vld [vmem:[%s1 + $0x108] sm:$0xff]
    %v157 = vld [vmem:[%s1 + $0x110] sm:$0x3]
    %v158 = vld [vmem:[%s1 + $0x118] sm:$0x3]
    %v159 = vld [vmem:[%s1 + $0x120] sm:$0xff]
    %v160 = vld [vmem:[%s1 + $0x128] sm:$0xff]
    %v161 = vld [vmem:[%s1 + $0x130] sm:$0xff]
    %v162 = vld [vmem:[%s1 + $0x138] sm:$0xff]
    %v163 = vld [vmem:[%s1 + $0x140] sm:$0x3]
    %v164 = vld [vmem:[%s1 + $0x148] sm:$0x3]
    %v165 = vld [vmem:[%s1 + $0x150] sm:$0xff]
    %v166 = vld [vmem:[%s1 + $0x158] sm:$0xff]
    %v167 = vld [vmem:[%s1 + $0x160] sm:$0xff]
    %v168 = vld [vmem:[%s1 + $0x168] sm:$0xff]
    %v169 = vld [vmem:[%s1 + $0x170] sm:$0x3]
    %v170 = vld [vmem:[%s1 + $0x178] sm:$0x3]
    %v171 = vld [vmem:[%s1 + $0x180] sm:$0xff]
    %v172 = vld [vmem:[%s1 + $0x188] sm:$0xff]
    %v173 = vld [vmem:[%s1 + $0x190] sm:$0xff]
    %v174 = vld [vmem:[%s1 + $0x198] sm:$0xff]
    %v175 = vld [vmem:[%s1 + $0x1a0] sm:$0x3]
    %v176 = vld [vmem:[%s1 + $0x1a8] sm:$0x3]
    %v177 = vld [vmem:[%s1 + $0x1b0] sm:$0xff]
    %v178 = vld [vmem:[%s1 + $0x1b8] sm:$0xff]
    %v179 = vld [vmem:[%s1 + $0x1c0] sm:$0xff]
    %v180 = vld [vmem:[%s1 + $0x1c8] sm:$0xff]
    %v181 = vld [vmem:[%s1 + $0x1d0] sm:$0x3]
    %v182 = vld [vmem:[%s1 + $0x1d8] sm:$0x3]
    %v183 = vld [vmem:[%s1 + $0x1e0] sm:$0xff]
    %v184 = vld [vmem:[%s1 + $0x1e8] sm:$0xff]
    %v185 = vld [vmem:[%s1 + $0x1f0] sm:$0xff]
    %v186 = vld [vmem:[%s1 + $0x1f8] sm:$0xff]
    %v187 = vld [vmem:[%s1 + $0x200] sm:$0x3]
    %v188 = vld [vmem:[%s1 + $0x208] sm:$0x3]
    %v189 = vld [vmem:[%s1 + $0x210] sm:$0xff]
    %v190 = vld [vmem:[%s1 + $0x218] sm:$0xff]
    %v191 = vld [vmem:[%s1 + $0x220] sm:$0xff]
    %v192 = vld [vmem:[%s1 + $0x228] sm:$0xff]
    %v193 = vld [vmem:[%s1 + $0x230] sm:$0x3]
    %v194 = vld [vmem:[%s1 + $0x238] sm:$0x3]
    %v195 = vld [vmem:[%s1 + $0x240] sm:$0xff]
    %v196 = vld [vmem:[%s1 + $0x248] sm:$0xff]
    %v197 = vld [vmem:[%s1 + $0x250] sm:$0xff]
    %v198 = vld [vmem:[%s1 + $0x258] sm:$0xff]
    %v199 = vld [vmem:[%s1 + $0x260] sm:$0x3]
    %v200 = vld [vmem:[%s1 + $0x268] sm:$0x3]
    %v201 = vld [vmem:[%s1 + $0x270] sm:$0xff]
    %v202 = vld [vmem:[%s1 + $0x278] sm:$0xff]
    %v203 = vld [vmem:[%s1 + $0x280] sm:$0xff]
    %v204 = vld [vmem:[%s1 + $0x288] sm:$0xff]
    %v205 = vld [vmem:[%s1 + $0x290] sm:$0x3]
    %v206 = vld [vmem:[%s1 + $0x298] sm:$0x3]
    %v207 = vld [vmem:[%s1 + $0x2a0] sm:$0xff]
    %v208 = vld [vmem:[%s1 + $0x2a8] sm:$0xff]
    %v209 = vld [vmem:[%s1 + $0x2b0] sm:$0xff]
    %v210 = vld [vmem:[%s1 + $0x2b8] sm:$0xff]
    %v211 = vld [vmem:[%s1 + $0x2c0] sm:$0x3]
    %v212 = vld [vmem:[%s1 + $0x2c8] sm:$0x3]
    %v213 = vld [vmem:[%s1 + $0x2d0] sm:$0xff]
    %v214 = vld [vmem:[%s1 + $0x2d8] sm:$0xff]
    %v215 = vld [vmem:[%s1 + $0x2e0] sm:$0xff]
    %v216 = vld [vmem:[%s1 + $0x2e8] sm:$0xff]
    %v217 = vld [vmem:[%s1 + $0x2f0] sm:$0x3]
    %v218 = vld [vmem:[%s1 + $0x2f8] sm:$0x3]
    %vm315 = vcmask 1046528
    %v316 = vrot.slane %v101, 1
    %v317 = vrot.slane %v103, 1
    %v318 = vsel %vm315, %v316, %v317
    %v319 = vrot.slane %v102, 1
    %v320 = vrot.slane %v104, 1
    %v321 = vsel %vm315, %v319, %v320
    %v322 = vrot.slane %v105, 1
    %v323 = vsel %vm315, %v317, %v322
    %v324 = vrot.slane %v106, 1
    %v325 = vsel %vm315, %v320, %v324
    %v326 = vrot.slane %v123, 1
    %v327 = vrot.slane %v125, 1
    %v328 = vsel %vm315, %v326, %v327
    %v329 = vrot.slane %v124, 1
    %v330 = vrot.slane %v126, 1
    %v331 = vsel %vm315, %v329, %v330
    %v332 = vrot.slane %v127, 1
    %v333 = vsel %vm315, %v327, %v332
    %v334 = vrot.slane %v128, 1
    %v335 = vsel %vm315, %v330, %v334
    %v336 = vrot.slane %v129, 1
    %v337 = vrot.slane %v131, 1
    %v338 = vsel %vm315, %v336, %v337
    %v339 = vrot.slane %v130, 1
    %v340 = vrot.slane %v132, 1
    %v341 = vsel %vm315, %v339, %v340
    %v342 = vrot.slane %v133, 1
    %v343 = vsel %vm315, %v337, %v342
    %v344 = vrot.slane %v134, 1
    %v345 = vsel %vm315, %v340, %v344
    %v346 = vrot.slane %v135, 1
    %v347 = vrot.slane %v137, 1
    %v348 = vsel %vm315, %v346, %v347
    %v349 = vrot.slane %v136, 1
    %v350 = vrot.slane %v138, 1
    %v351 = vsel %vm315, %v349, %v350
    %v352 = vrot.slane %v139, 1
    %v353 = vsel %vm315, %v347, %v352
    %v354 = vrot.slane %v140, 1
    %v355 = vsel %vm315, %v350, %v354
    %v356 = vrot.slane %v141, 1
    %v357 = vrot.slane %v143, 1
    %v358 = vsel %vm315, %v356, %v357
    %v359 = vrot.slane %v142, 1
    %v360 = vrot.slane %v144, 1
    %v361 = vsel %vm315, %v359, %v360
    %v362 = vrot.slane %v145, 1
    %v363 = vsel %vm315, %v357, %v362
    %v364 = vrot.slane %v146, 1
    %v365 = vsel %vm315, %v360, %v364
    %v366 = vrot.slane %v147, 1
    %v367 = vrot.slane %v149, 1
    %v368 = vsel %vm315, %v366, %v367
    %v369 = vrot.slane %v148, 1
    %v370 = vrot.slane %v150, 1
    %v371 = vsel %vm315, %v369, %v370
    %v372 = vrot.slane %v151, 1
    %v373 = vsel %vm315, %v367, %v372
    %v374 = vrot.slane %v152, 1
    %v375 = vsel %vm315, %v370, %v374
    %v376 = vrot.slane %v153, 1
    %v377 = vrot.slane %v155, 1
    %v378 = vsel %vm315, %v376, %v377
    %v379 = vrot.slane %v154, 1
    %v380 = vrot.slane %v156, 1
    %v381 = vsel %vm315, %v379, %v380
    %v382 = vrot.slane %v157, 1
    %v383 = vsel %vm315, %v377, %v382
    %v384 = vrot.slane %v158, 1
    %v385 = vsel %vm315, %v380, %v384
    %v386 = vrot.slane %v159, 1
    %v387 = vrot.slane %v161, 1
    %v388 = vsel %vm315, %v386, %v387
    %v389 = vrot.slane %v160, 1
    %v390 = vrot.slane %v162, 1
    %v391 = vsel %vm315, %v389, %v390
    %v392 = vrot.slane %v163, 1
    %v393 = vsel %vm315, %v387, %v392
    %v394 = vrot.slane %v164, 1
    %v395 = vsel %vm315, %v390, %v394
    %v396 = vrot.slane %v165, 1
    %v397 = vrot.slane %v167, 1
    %v398 = vsel %vm315, %v396, %v397
    %v399 = vrot.slane %v166, 1
    %v400 = vrot.slane %v168, 1
    %v401 = vsel %vm315, %v399, %v400
    %v402 = vrot.slane %v169, 1
    %v403 = vsel %vm315, %v397, %v402
    %v404 = vrot.slane %v170, 1
    %v405 = vsel %vm315, %v400, %v404
    %v406 = vrot.slane %v171, 1
    %v407 = vrot.slane %v173, 1
    %v408 = vsel %vm315, %v406, %v407
    %v409 = vrot.slane %v172, 1
    %v410 = vrot.slane %v174, 1
    %v411 = vsel %vm315, %v409, %v410
    %v412 = vrot.slane %v175, 1
    %v413 = vsel %vm315, %v407, %v412
    %v414 = vrot.slane %v176, 1
    %v415 = vsel %vm315, %v410, %v414
    %v416 = vrot.slane %v177, 1
    %v417 = vrot.slane %v179, 1
    %v418 = vsel %vm315, %v416, %v417
    %v419 = vrot.slane %v178, 1
    %v420 = vrot.slane %v180, 1
    %v421 = vsel %vm315, %v419, %v420
    %v422 = vrot.slane %v181, 1
    %v423 = vsel %vm315, %v417, %v422
    %v424 = vrot.slane %v182, 1
    %v425 = vsel %vm315, %v420, %v424
    %v426 = vrot.slane %v183, 1
    %v427 = vrot.slane %v185, 1
    %v428 = vsel %vm315, %v426, %v427
    %v429 = vrot.slane %v184, 1
    %v430 = vrot.slane %v186, 1
    %v431 = vsel %vm315, %v429, %v430
    %v432 = vrot.slane %v187, 1
    %v433 = vsel %vm315, %v427, %v432
    %v434 = vrot.slane %v188, 1
    %v435 = vsel %vm315, %v430, %v434
    %v436 = vrot.slane %v189, 1
    %v437 = vrot.slane %v191, 1
    %v438 = vsel %vm315, %v436, %v437
    %v439 = vrot.slane %v190, 1
    %v440 = vrot.slane %v192, 1
    %v441 = vsel %vm315, %v439, %v440
    %v442 = vrot.slane %v193, 1
    %v443 = vsel %vm315, %v437, %v442
    %v444 = vrot.slane %v194, 1
    %v445 = vsel %vm315, %v440, %v444
    %v446 = vrot.slane %v195, 1
    %v447 = vrot.slane %v197, 1
    %v448 = vsel %vm315, %v446, %v447
    %v449 = vrot.slane %v196, 1
    %v450 = vrot.slane %v198, 1
    %v451 = vsel %vm315, %v449, %v450
    %v452 = vrot.slane %v199, 1
    %v453 = vsel %vm315, %v447, %v452
    %v454 = vrot.slane %v200, 1
    %v455 = vsel %vm315, %v450, %v454
    %v456 = vrot.slane %v201, 1
    %v457 = vrot.slane %v203, 1
    %v458 = vsel %vm315, %v456, %v457
    %v459 = vrot.slane %v202, 1
    %v460 = vrot.slane %v204, 1
    %v461 = vsel %vm315, %v459, %v460
    %v462 = vrot.slane %v205, 1
    %v463 = vsel %vm315, %v457, %v462
    %v464 = vrot.slane %v206, 1
    %v465 = vsel %vm315, %v460, %v464
    %v466 = vrot.slane %v207, 1
    %v467 = vrot.slane %v209, 1
    %v468 = vsel %vm315, %v466, %v467
    %v469 = vrot.slane %v208, 1
    %v470 = vrot.slane %v210, 1
    %v471 = vsel %vm315, %v469, %v470
    %v472 = vrot.slane %v211, 1
    %v473 = vsel %vm315, %v467, %v472
    %v474 = vrot.slane %v212, 1
    %v475 = vsel %vm315, %v470, %v474
    %vm476 = vcmask 1045504
    %v477 = vrot.slane %v101, 2
    %v478 = vrot.slane %v103, 2
    %v479 = vsel %vm476, %v477, %v478
    %v480 = vrot.slane %v102, 2
    %v481 = vrot.slane %v104, 2
    %v482 = vsel %vm476, %v480, %v481
    %v483 = vrot.slane %v105, 2
    %v484 = vsel %vm476, %v478, %v483
    %v485 = vrot.slane %v106, 2
    %v486 = vsel %vm476, %v481, %v485
    %v487 = vrot.slane %v123, 2
    %v488 = vrot.slane %v125, 2
    %v489 = vsel %vm476, %v487, %v488
    %v490 = vrot.slane %v124, 2
    %v491 = vrot.slane %v126, 2
    %v492 = vsel %vm476, %v490, %v491
    %v493 = vrot.slane %v127, 2
    %v494 = vsel %vm476, %v488, %v493
    %v495 = vrot.slane %v128, 2
    %v496 = vsel %vm476, %v491, %v495
    %v497 = vrot.slane %v129, 2
    %v498 = vrot.slane %v131, 2
    %v499 = vsel %vm476, %v497, %v498
    %v500 = vrot.slane %v130, 2
    %v501 = vrot.slane %v132, 2
    %v502 = vsel %vm476, %v500, %v501
    %v503 = vrot.slane %v133, 2
    %v504 = vsel %vm476, %v498, %v503
    %v505 = vrot.slane %v134, 2
    %v506 = vsel %vm476, %v501, %v505
    %v507 = vrot.slane %v135, 2
    %v508 = vrot.slane %v137, 2
    %v509 = vsel %vm476, %v507, %v508
    %v510 = vrot.slane %v136, 2
    %v511 = vrot.slane %v138, 2
    %v512 = vsel %vm476, %v510, %v511
    %v513 = vrot.slane %v139, 2
    %v514 = vsel %vm476, %v508, %v513
    %v515 = vrot.slane %v140, 2
    %v516 = vsel %vm476, %v511, %v515
    %v517 = vrot.slane %v141, 2
    %v518 = vrot.slane %v143, 2
    %v519 = vsel %vm476, %v517, %v518
    %v520 = vrot.slane %v142, 2
    %v521 = vrot.slane %v144, 2
    %v522 = vsel %vm476, %v520, %v521
    %v523 = vrot.slane %v145, 2
    %v524 = vsel %vm476, %v518, %v523
    %v525 = vrot.slane %v146, 2
    %v526 = vsel %vm476, %v521, %v525
    %v527 = vrot.slane %v147, 2
    %v528 = vrot.slane %v149, 2
    %v529 = vsel %vm476, %v527, %v528
    %v530 = vrot.slane %v148, 2
    %v531 = vrot.slane %v150, 2
    %v532 = vsel %vm476, %v530, %v531
    %v533 = vrot.slane %v151, 2
    %v534 = vsel %vm476, %v528, %v533
    %v535 = vrot.slane %v152, 2
    %v536 = vsel %vm476, %v531, %v535
    %v537 = vrot.slane %v153, 2
    %v538 = vrot.slane %v155, 2
    %v539 = vsel %vm476, %v537, %v538
    %v540 = vrot.slane %v154, 2
    %v541 = vrot.slane %v156, 2
    %v542 = vsel %vm476, %v540, %v541
    %v543 = vrot.slane %v157, 2
    %v544 = vsel %vm476, %v538, %v543
    %v545 = vrot.slane %v158, 2
    %v546 = vsel %vm476, %v541, %v545
    %v547 = vrot.slane %v159, 2
    %v548 = vrot.slane %v161, 2
    %v549 = vsel %vm476, %v547, %v548
    %v550 = vrot.slane %v160, 2
    %v551 = vrot.slane %v162, 2
    %v552 = vsel %vm476, %v550, %v551
    %v553 = vrot.slane %v163, 2
    %v554 = vsel %vm476, %v548, %v553
    %v555 = vrot.slane %v164, 2
    %v556 = vsel %vm476, %v551, %v555
    %v557 = vrot.slane %v165, 2
    %v558 = vrot.slane %v167, 2
    %v559 = vsel %vm476, %v557, %v558
    %v560 = vrot.slane %v166, 2
    %v561 = vrot.slane %v168, 2
    %v562 = vsel %vm476, %v560, %v561
    %v563 = vrot.slane %v169, 2
    %v564 = vsel %vm476, %v558, %v563
    %v565 = vrot.slane %v170, 2
    %v566 = vsel %vm476, %v561, %v565
    %v567 = vrot.slane %v171, 2
    %v568 = vrot.slane %v173, 2
    %v569 = vsel %vm476, %v567, %v568
    %v570 = vrot.slane %v172, 2
    %v571 = vrot.slane %v174, 2
    %v572 = vsel %vm476, %v570, %v571
    %v573 = vrot.slane %v175, 2
    %v574 = vsel %vm476, %v568, %v573
    %v575 = vrot.slane %v176, 2
    %v576 = vsel %vm476, %v571, %v575
    %v577 = vrot.slane %v177, 2
    %v578 = vrot.slane %v179, 2
    %v579 = vsel %vm476, %v577, %v578
    %v580 = vrot.slane %v178, 2
    %v581 = vrot.slane %v180, 2
    %v582 = vsel %vm476, %v580, %v581
    %v583 = vrot.slane %v181, 2
    %v584 = vsel %vm476, %v578, %v583
    %v585 = vrot.slane %v182, 2
    %v586 = vsel %vm476, %v581, %v585
    %v587 = vrot.slane %v183, 2
    %v588 = vrot.slane %v185, 2
    %v589 = vsel %vm476, %v587, %v588
    %v590 = vrot.slane %v184, 2
    %v591 = vrot.slane %v186, 2
    %v592 = vsel %vm476, %v590, %v591
    %v593 = vrot.slane %v187, 2
    %v594 = vsel %vm476, %v588, %v593
    %v595 = vrot.slane %v188, 2
    %v596 = vsel %vm476, %v591, %v595
    %v597 = vrot.slane %v189, 2
    %v598 = vrot.slane %v191, 2
    %v599 = vsel %vm476, %v597, %v598
    %v600 = vrot.slane %v190, 2
    %v601 = vrot.slane %v192, 2
    %v602 = vsel %vm476, %v600, %v601
    %v603 = vrot.slane %v193, 2
    %v604 = vsel %vm476, %v598, %v603
    %v605 = vrot.slane %v194, 2
    %v606 = vsel %vm476, %v601, %v605
    %v607 = vrot.slane %v195, 2
    %v608 = vrot.slane %v197, 2
    %v609 = vsel %vm476, %v607, %v608
    %v610 = vrot.slane %v196, 2
    %v611 = vrot.slane %v198, 2
    %v612 = vsel %vm476, %v610, %v611
    %v613 = vrot.slane %v199, 2
    %v614 = vsel %vm476, %v608, %v613
    %v615 = vrot.slane %v200, 2
    %v616 = vsel %vm476, %v611, %v615
    %v617 = vrot.slane %v201, 2
    %v618 = vrot.slane %v203, 2
    %v619 = vsel %vm476, %v617, %v618
    %v620 = vrot.slane %v202, 2
    %v621 = vrot.slane %v204, 2
    %v622 = vsel %vm476, %v620, %v621
    %v623 = vrot.slane %v205, 2
    %v624 = vsel %vm476, %v618, %v623
    %v625 = vrot.slane %v206, 2
    %v626 = vsel %vm476, %v621, %v625
    %v627 = vrot.slane %v207, 2
    %v628 = vrot.slane %v209, 2
    %v629 = vsel %vm476, %v627, %v628
    %v630 = vrot.slane %v208, 2
    %v631 = vrot.slane %v210, 2
    %v632 = vsel %vm476, %v630, %v631
    %v633 = vrot.slane %v211, 2
    %v634 = vsel %vm476, %v628, %v633
    %v635 = vrot.slane %v212, 2
    %v636 = vsel %vm476, %v631, %v635
    %v643 = vrot.slane %v213, 1
    %v644 = vrot.slane %v215, 1
    %v645 = vsel %vm315, %v643, %v644
    %v646 = vrot.slane %v214, 1
    %v647 = vrot.slane %v216, 1
    %v648 = vsel %vm315, %v646, %v647
    %v649 = vrot.slane %v217, 1
    %v650 = vsel %vm315, %v644, %v649
    %v651 = vrot.slane %v218, 1
    %v652 = vsel %vm315, %v647, %v651
    %v653 = vrot.slane %v213, 2
    %v654 = vrot.slane %v215, 2
    %v655 = vsel %vm476, %v653, %v654
    %v656 = vrot.slane %v214, 2
    %v657 = vrot.slane %v216, 2
    %v658 = vsel %vm476, %v656, %v657
    %v659 = vrot.slane %v217, 2
    %v660 = vsel %vm476, %v654, %v659
    %v661 = vrot.slane %v218, 2
    %v662 = vsel %vm476, %v657, %v661
    %v669 = vrot.slane %v117, 1
    %v670 = vrot.slane %v119, 1
    %v671 = vsel %vm315, %v669, %v670
    %v672 = vrot.slane %v118, 1
    %v673 = vrot.slane %v120, 1
    %v674 = vsel %vm315, %v672, %v673
    %v675 = vrot.slane %v121, 1
    %v676 = vsel %vm315, %v670, %v675
    %v677 = vrot.slane %v122, 1
    %v678 = vsel %vm315, %v673, %v677
    %v679 = vrot.slane %v117, 2
    %v680 = vrot.slane %v119, 2
    %v681 = vsel %vm476, %v679, %v680
    %v682 = vrot.slane %v118, 2
    %v683 = vrot.slane %v120, 2
    %v684 = vsel %vm476, %v682, %v683
    %v685 = vrot.slane %v121, 2
    %v686 = vsel %vm476, %v680, %v685
    %v687 = vrot.slane %v122, 2
    %v688 = vsel %vm476, %v683, %v687
    %721 = vrot.lane.b32.xlu0 %v318, 16
    %v722 = vpop.permute.xlu0 %721
    %723 = vrot.lane.b32.xlu0 %v321, 16
    %v724 = vpop.permute.xlu0 %723
    %725 = vrot.lane.b32.xlu0 %v323, 16
    %v726 = vpop.permute.xlu0 %725
    %727 = vrot.lane.b32.xlu0 %v325, 16
    %v728 = vpop.permute.xlu0 %727
    %729 = vrot.lane.b32.xlu0 %v328, 16
    %v730 = vpop.permute.xlu0 %729
    %731 = vrot.lane.b32.xlu0 %v331, 16
    %v732 = vpop.permute.xlu0 %731
    %733 = vrot.lane.b32.xlu0 %v333, 16
    %v734 = vpop.permute.xlu0 %733
    %735 = vrot.lane.b32.xlu0 %v335, 16
    %v736 = vpop.permute.xlu0 %735
    %737 = vrot.lane.b32.xlu0 %v338, 16
    %v738 = vpop.permute.xlu0 %737
    %739 = vrot.lane.b32.xlu0 %v341, 16
    %v740 = vpop.permute.xlu0 %739
    %741 = vrot.lane.b32.xlu0 %v343, 16
    %v742 = vpop.permute.xlu0 %741
    %743 = vrot.lane.b32.xlu0 %v345, 16
    %v744 = vpop.permute.xlu0 %743
    %745 = vrot.lane.b32.xlu0 %v348, 16
    %v746 = vpop.permute.xlu0 %745
    %747 = vrot.lane.b32.xlu0 %v351, 16
    %v748 = vpop.permute.xlu0 %747
    %749 = vrot.lane.b32.xlu0 %v353, 16
    %v750 = vpop.permute.xlu0 %749
    %751 = vrot.lane.b32.xlu0 %v355, 16
    %v752 = vpop.permute.xlu0 %751
    %753 = vrot.lane.b32.xlu0 %v358, 16
    %v754 = vpop.permute.xlu0 %753
    %755 = vrot.lane.b32.xlu0 %v361, 16
    %v756 = vpop.permute.xlu0 %755
    %757 = vrot.lane.b32.xlu0 %v363, 16
    %v758 = vpop.permute.xlu0 %757
    %759 = vrot.lane.b32.xlu0 %v365, 16
    %v760 = vpop.permute.xlu0 %759
    %761 = vrot.lane.b32.xlu0 %v368, 16
    %v762 = vpop.permute.xlu0 %761
    %763 = vrot.lane.b32.xlu0 %v371, 16
    %v764 = vpop.permute.xlu0 %763
    %765 = vrot.lane.b32.xlu0 %v373, 16
    %v766 = vpop.permute.xlu0 %765
    %767 = vrot.lane.b32.xlu0 %v375, 16
    %v768 = vpop.permute.xlu0 %767
    %769 = vrot.lane.b32.xlu0 %v378, 16
    %v770 = vpop.permute.xlu0 %769
    %771 = vrot.lane.b32.xlu0 %v381, 16
    %v772 = vpop.permute.xlu0 %771
    %773 = vrot.lane.b32.xlu0 %v383, 16
    %v774 = vpop.permute.xlu0 %773
    %775 = vrot.lane.b32.xlu0 %v385, 16
    %v776 = vpop.permute.xlu0 %775
    %777 = vrot.lane.b32.xlu0 %v388, 16
    %v778 = vpop.permute.xlu0 %777
    %779 = vrot.lane.b32.xlu0 %v391, 16
    %v780 = vpop.permute.xlu0 %779
    %781 = vrot.lane.b32.xlu0 %v393, 16
    %v782 = vpop.permute.xlu0 %781
    %783 = vrot.lane.b32.xlu0 %v395, 16
    %v784 = vpop.permute.xlu0 %783
    %785 = vrot.lane.b32.xlu0 %v398, 16
    %v786 = vpop.permute.xlu0 %785
    %787 = vrot.lane.b32.xlu0 %v401, 16
    %v788 = vpop.permute.xlu0 %787
    %789 = vrot.lane.b32.xlu0 %v403, 16
    %v790 = vpop.permute.xlu0 %789
    %791 = vrot.lane.b32.xlu0 %v405, 16
    %v792 = vpop.permute.xlu0 %791
    %793 = vrot.lane.b32.xlu0 %v408, 16
    %v794 = vpop.permute.xlu0 %793
    %795 = vrot.lane.b32.xlu0 %v411, 16
    %v796 = vpop.permute.xlu0 %795
    %797 = vrot.lane.b32.xlu0 %v413, 16
    %v798 = vpop.permute.xlu0 %797
    %799 = vrot.lane.b32.xlu0 %v415, 16
    %v800 = vpop.permute.xlu0 %799
    %801 = vrot.lane.b32.xlu0 %v418, 16
    %v802 = vpop.permute.xlu0 %801
    %803 = vrot.lane.b32.xlu0 %v421, 16
    %v804 = vpop.permute.xlu0 %803
    %805 = vrot.lane.b32.xlu0 %v423, 16
    %v806 = vpop.permute.xlu0 %805
    %807 = vrot.lane.b32.xlu0 %v425, 16
    %v808 = vpop.permute.xlu0 %807
    %809 = vrot.lane.b32.xlu0 %v428, 16
    %v810 = vpop.permute.xlu0 %809
    %811 = vrot.lane.b32.xlu0 %v431, 16
    %v812 = vpop.permute.xlu0 %811
    %813 = vrot.lane.b32.xlu0 %v433, 16
    %v814 = vpop.permute.xlu0 %813
    %815 = vrot.lane.b32.xlu0 %v435, 16
    %v816 = vpop.permute.xlu0 %815
    %817 = vrot.lane.b32.xlu0 %v438, 16
    %v818 = vpop.permute.xlu0 %817
    %819 = vrot.lane.b32.xlu0 %v441, 16
    %v820 = vpop.permute.xlu0 %819
    %821 = vrot.lane.b32.xlu0 %v443, 16
    %v822 = vpop.permute.xlu0 %821
    %823 = vrot.lane.b32.xlu0 %v445, 16
    %v824 = vpop.permute.xlu0 %823
    %825 = vrot.lane.b32.xlu0 %v448, 16
    %v826 = vpop.permute.xlu0 %825
    %827 = vrot.lane.b32.xlu0 %v451, 16
    %v828 = vpop.permute.xlu0 %827
    %829 = vrot.lane.b32.xlu0 %v453, 16
    %v830 = vpop.permute.xlu0 %829
    %831 = vrot.lane.b32.xlu0 %v455, 16
    %v832 = vpop.permute.xlu0 %831
    %833 = vrot.lane.b32.xlu0 %v458, 16
    %v834 = vpop.permute.xlu0 %833
    %835 = vrot.lane.b32.xlu0 %v461, 16
    %v836 = vpop.permute.xlu0 %835
    %837 = vrot.lane.b32.xlu0 %v463, 16
    %v838 = vpop.permute.xlu0 %837
    %839 = vrot.lane.b32.xlu0 %v465, 16
    %v840 = vpop.permute.xlu0 %839
    %841 = vrot.lane.b32.xlu0 %v468, 16
    %v842 = vpop.permute.xlu0 %841
    %843 = vrot.lane.b32.xlu0 %v471, 16
    %v844 = vpop.permute.xlu0 %843
    %845 = vrot.lane.b32.xlu0 %v473, 16
    %v846 = vpop.permute.xlu0 %845
    %847 = vrot.lane.b32.xlu0 %v475, 16
    %v848 = vpop.permute.xlu0 %847
    %vm849 = vcmask 130048
    %v850 = vsel %vm849, %v722, %v724
    %v851 = vsel %vm849, %v726, %v728
    %v852 = vsel %vm849, %v730, %v732
    %v853 = vsel %vm849, %v734, %v736
    %v854 = vsel %vm849, %v738, %v740
    %v855 = vsel %vm849, %v742, %v744
    %v856 = vsel %vm849, %v746, %v748
    %v857 = vsel %vm849, %v750, %v752
    %v858 = vsel %vm849, %v754, %v756
    %v859 = vsel %vm849, %v758, %v760
    %v860 = vsel %vm849, %v762, %v764
    %v861 = vsel %vm849, %v766, %v768
    %v862 = vsel %vm849, %v770, %v772
    %v863 = vsel %vm849, %v774, %v776
    %v864 = vsel %vm849, %v778, %v780
    %v865 = vsel %vm849, %v782, %v784
    %v866 = vsel %vm849, %v786, %v788
    %v867 = vsel %vm849, %v790, %v792
    %v868 = vsel %vm849, %v794, %v796
    %v869 = vsel %vm849, %v798, %v800
    %v870 = vsel %vm849, %v802, %v804
    %v871 = vsel %vm849, %v806, %v808
    %v872 = vsel %vm849, %v810, %v812
    %v873 = vsel %vm849, %v814, %v816
    %v874 = vsel %vm849, %v818, %v820
    %v875 = vsel %vm849, %v822, %v824
    %v876 = vsel %vm849, %v826, %v828
    %v877 = vsel %vm849, %v830, %v832
    %v878 = vsel %vm849, %v834, %v836
    %v879 = vsel %vm849, %v838, %v840
    %v880 = vsel %vm849, %v842, %v844
    %v881 = vsel %vm849, %v846, %v848
    %946 = vrot.lane.b32.xlu0 %v479, 32
    %v947 = vpop.permute.xlu0 %946
    %948 = vrot.lane.b32.xlu0 %v482, 32
    %v949 = vpop.permute.xlu0 %948
    %950 = vrot.lane.b32.xlu0 %v484, 32
    %v951 = vpop.permute.xlu0 %950
    %952 = vrot.lane.b32.xlu0 %v486, 32
    %v953 = vpop.permute.xlu0 %952
    %954 = vrot.lane.b32.xlu0 %v489, 32
    %v955 = vpop.permute.xlu0 %954
    %956 = vrot.lane.b32.xlu0 %v492, 32
    %v957 = vpop.permute.xlu0 %956
    %958 = vrot.lane.b32.xlu0 %v494, 32
    %v959 = vpop.permute.xlu0 %958
    %960 = vrot.lane.b32.xlu0 %v496, 32
    %v961 = vpop.permute.xlu0 %960
    %962 = vrot.lane.b32.xlu0 %v499, 32
    %v963 = vpop.permute.xlu0 %962
    %964 = vrot.lane.b32.xlu0 %v502, 32
    %v965 = vpop.permute.xlu0 %964
    %966 = vrot.lane.b32.xlu0 %v504, 32
    %v967 = vpop.permute.xlu0 %966
    %968 = vrot.lane.b32.xlu0 %v506, 32
    %v969 = vpop.permute.xlu0 %968
    %970 = vrot.lane.b32.xlu0 %v509, 32
    %v971 = vpop.permute.xlu0 %970
    %972 = vrot.lane.b32.xlu0 %v512, 32
    %v973 = vpop.permute.xlu0 %972
    %974 = vrot.lane.b32.xlu0 %v514, 32
    %v975 = vpop.permute.xlu0 %974
    %976 = vrot.lane.b32.xlu0 %v516, 32
    %v977 = vpop.permute.xlu0 %976
    %978 = vrot.lane.b32.xlu0 %v519, 32
    %v979 = vpop.permute.xlu0 %978
    %980 = vrot.lane.b32.xlu0 %v522, 32
    %v981 = vpop.permute.xlu0 %980
    %982 = vrot.lane.b32.xlu0 %v524, 32
    %v983 = vpop.permute.xlu0 %982
    %984 = vrot.lane.b32.xlu0 %v526, 32
    %v985 = vpop.permute.xlu0 %984
    %986 = vrot.lane.b32.xlu0 %v529, 32
    %v987 = vpop.permute.xlu0 %986
    %988 = vrot.lane.b32.xlu0 %v532, 32
    %v989 = vpop.permute.xlu0 %988
    %990 = vrot.lane.b32.xlu0 %v534, 32
    %v991 = vpop.permute.xlu0 %990
    %992 = vrot.lane.b32.xlu0 %v536, 32
    %v993 = vpop.permute.xlu0 %992
    %994 = vrot.lane.b32.xlu0 %v539, 32
    %v995 = vpop.permute.xlu0 %994
    %996 = vrot.lane.b32.xlu0 %v542, 32
    %v997 = vpop.permute.xlu0 %996
    %998 = vrot.lane.b32.xlu0 %v544, 32
    %v999 = vpop.permute.xlu0 %998
    %1000 = vrot.lane.b32.xlu0 %v546, 32
    %v1001 = vpop.permute.xlu0 %1000
    %1002 = vrot.lane.b32.xlu0 %v549, 32
    %v1003 = vpop.permute.xlu0 %1002
    %1004 = vrot.lane.b32.xlu0 %v552, 32
    %v1005 = vpop.permute.xlu0 %1004
    %1006 = vrot.lane.b32.xlu0 %v554, 32
    %v1007 = vpop.permute.xlu0 %1006
    %1008 = vrot.lane.b32.xlu0 %v556, 32
    %v1009 = vpop.permute.xlu0 %1008
    %1010 = vrot.lane.b32.xlu0 %v559, 32
    %v1011 = vpop.permute.xlu0 %1010
    %1012 = vrot.lane.b32.xlu0 %v562, 32
    %v1013 = vpop.permute.xlu0 %1012
    %1014 = vrot.lane.b32.xlu0 %v564, 32
    %v1015 = vpop.permute.xlu0 %1014
    %1016 = vrot.lane.b32.xlu0 %v566, 32
    %v1017 = vpop.permute.xlu0 %1016
    %1018 = vrot.lane.b32.xlu0 %v569, 32
    %v1019 = vpop.permute.xlu0 %1018
    %1020 = vrot.lane.b32.xlu0 %v572, 32
    %v1021 = vpop.permute.xlu0 %1020
    %1022 = vrot.lane.b32.xlu0 %v574, 32
    %v1023 = vpop.permute.xlu0 %1022
    %1024 = vrot.lane.b32.xlu0 %v576, 32
    %v1025 = vpop.permute.xlu0 %1024
    %1026 = vrot.lane.b32.xlu0 %v579, 32
    %v1027 = vpop.permute.xlu0 %1026
    %1028 = vrot.lane.b32.xlu0 %v582, 32
    %v1029 = vpop.permute.xlu0 %1028
    %1030 = vrot.lane.b32.xlu0 %v584, 32
    %v1031 = vpop.permute.xlu0 %1030
    %1032 = vrot.lane.b32.xlu0 %v586, 32
    %v1033 = vpop.permute.xlu0 %1032
    %1034 = vrot.lane.b32.xlu0 %v589, 32
    %v1035 = vpop.permute.xlu0 %1034
    %1036 = vrot.lane.b32.xlu0 %v592, 32
    %v1037 = vpop.permute.xlu0 %1036
    %1038 = vrot.lane.b32.xlu0 %v594, 32
    %v1039 = vpop.permute.xlu0 %1038
    %1040 = vrot.lane.b32.xlu0 %v596, 32
    %v1041 = vpop.permute.xlu0 %1040
    %1042 = vrot.lane.b32.xlu0 %v599, 32
    %v1043 = vpop.permute.xlu0 %1042
    %1044 = vrot.lane.b32.xlu0 %v602, 32
    %v1045 = vpop.permute.xlu0 %1044
    %1046 = vrot.lane.b32.xlu0 %v604, 32
    %v1047 = vpop.permute.xlu0 %1046
    %1048 = vrot.lane.b32.xlu0 %v606, 32
    %v1049 = vpop.permute.xlu0 %1048
    %1050 = vrot.lane.b32.xlu0 %v609, 32
    %v1051 = vpop.permute.xlu0 %1050
    %1052 = vrot.lane.b32.xlu0 %v612, 32
    %v1053 = vpop.permute.xlu0 %1052
    %1054 = vrot.lane.b32.xlu0 %v614, 32
    %v1055 = vpop.permute.xlu0 %1054
    %1056 = vrot.lane.b32.xlu0 %v616, 32
    %v1057 = vpop.permute.xlu0 %1056
    %1058 = vrot.lane.b32.xlu0 %v619, 32
    %v1059 = vpop.permute.xlu0 %1058
    %1060 = vrot.lane.b32.xlu0 %v622, 32
    %v1061 = vpop.permute.xlu0 %1060
    %1062 = vrot.lane.b32.xlu0 %v624, 32
    %v1063 = vpop.permute.xlu0 %1062
    %1064 = vrot.lane.b32.xlu0 %v626, 32
    %v1065 = vpop.permute.xlu0 %1064
    %1066 = vrot.lane.b32.xlu0 %v629, 32
    %v1067 = vpop.permute.xlu0 %1066
    %1068 = vrot.lane.b32.xlu0 %v632, 32
    %v1069 = vpop.permute.xlu0 %1068
    %1070 = vrot.lane.b32.xlu0 %v634, 32
    %v1071 = vpop.permute.xlu0 %1070
    %1072 = vrot.lane.b32.xlu0 %v636, 32
    %v1073 = vpop.permute.xlu0 %1072
    %vm1074 = vcmask 261120
    %v1075 = vsel %vm1074, %v947, %v949
    %v1076 = vsel %vm1074, %v951, %v953
    %v1077 = vsel %vm1074, %v955, %v957
    %v1078 = vsel %vm1074, %v959, %v961
    %v1079 = vsel %vm1074, %v963, %v965
    %v1080 = vsel %vm1074, %v967, %v969
    %v1081 = vsel %vm1074, %v971, %v973
    %v1082 = vsel %vm1074, %v975, %v977
    %v1083 = vsel %vm1074, %v979, %v981
    %v1084 = vsel %vm1074, %v983, %v985
    %v1085 = vsel %vm1074, %v987, %v989
    %v1086 = vsel %vm1074, %v991, %v993
    %v1087 = vsel %vm1074, %v995, %v997
    %v1088 = vsel %vm1074, %v999, %v1001
    %v1089 = vsel %vm1074, %v1003, %v1005
    %v1090 = vsel %vm1074, %v1007, %v1009
    %v1091 = vsel %vm1074, %v1011, %v1013
    %v1092 = vsel %vm1074, %v1015, %v1017
    %v1093 = vsel %vm1074, %v1019, %v1021
    %v1094 = vsel %vm1074, %v1023, %v1025
    %v1095 = vsel %vm1074, %v1027, %v1029
    %v1096 = vsel %vm1074, %v1031, %v1033
    %v1097 = vsel %vm1074, %v1035, %v1037
    %v1098 = vsel %vm1074, %v1039, %v1041
    %v1099 = vsel %vm1074, %v1043, %v1045
    %v1100 = vsel %vm1074, %v1047, %v1049
    %v1101 = vsel %vm1074, %v1051, %v1053
    %v1102 = vsel %vm1074, %v1055, %v1057
    %v1103 = vsel %vm1074, %v1059, %v1061
    %v1104 = vsel %vm1074, %v1063, %v1065
    %v1105 = vsel %vm1074, %v1067, %v1069
    %v1106 = vsel %vm1074, %v1071, %v1073
    %1171 = vrot.lane.b32.xlu0 %v123, 48
    %v1172 = vpop.permute.xlu0 %1171
    %1173 = vrot.lane.b32.xlu0 %v124, 48
    %v1174 = vpop.permute.xlu0 %1173
    %1175 = vrot.lane.b32.xlu0 %v125, 48
    %v1176 = vpop.permute.xlu0 %1175
    %1177 = vrot.lane.b32.xlu0 %v126, 48
    %v1178 = vpop.permute.xlu0 %1177
    %1179 = vrot.lane.b32.xlu0 %v129, 48
    %v1180 = vpop.permute.xlu0 %1179
    %1181 = vrot.lane.b32.xlu0 %v130, 48
    %v1182 = vpop.permute.xlu0 %1181
    %1183 = vrot.lane.b32.xlu0 %v131, 48
    %v1184 = vpop.permute.xlu0 %1183
    %1185 = vrot.lane.b32.xlu0 %v132, 48
    %v1186 = vpop.permute.xlu0 %1185
    %1187 = vrot.lane.b32.xlu0 %v135, 48
    %v1188 = vpop.permute.xlu0 %1187
    %1189 = vrot.lane.b32.xlu0 %v136, 48
    %v1190 = vpop.permute.xlu0 %1189
    %1191 = vrot.lane.b32.xlu0 %v137, 48
    %v1192 = vpop.permute.xlu0 %1191
    %1193 = vrot.lane.b32.xlu0 %v138, 48
    %v1194 = vpop.permute.xlu0 %1193
    %1195 = vrot.lane.b32.xlu0 %v141, 48
    %v1196 = vpop.permute.xlu0 %1195
    %1197 = vrot.lane.b32.xlu0 %v142, 48
    %v1198 = vpop.permute.xlu0 %1197
    %1199 = vrot.lane.b32.xlu0 %v143, 48
    %v1200 = vpop.permute.xlu0 %1199
    %1201 = vrot.lane.b32.xlu0 %v144, 48
    %v1202 = vpop.permute.xlu0 %1201
    %1203 = vrot.lane.b32.xlu0 %v147, 48
    %v1204 = vpop.permute.xlu0 %1203
    %1205 = vrot.lane.b32.xlu0 %v148, 48
    %v1206 = vpop.permute.xlu0 %1205
    %1207 = vrot.lane.b32.xlu0 %v149, 48
    %v1208 = vpop.permute.xlu0 %1207
    %1209 = vrot.lane.b32.xlu0 %v150, 48
    %v1210 = vpop.permute.xlu0 %1209
    %1211 = vrot.lane.b32.xlu0 %v153, 48
    %v1212 = vpop.permute.xlu0 %1211
    %1213 = vrot.lane.b32.xlu0 %v154, 48
    %v1214 = vpop.permute.xlu0 %1213
    %1215 = vrot.lane.b32.xlu0 %v155, 48
    %v1216 = vpop.permute.xlu0 %1215
    %1217 = vrot.lane.b32.xlu0 %v156, 48
    %v1218 = vpop.permute.xlu0 %1217
    %1219 = vrot.lane.b32.xlu0 %v159, 48
    %v1220 = vpop.permute.xlu0 %1219
    %1221 = vrot.lane.b32.xlu0 %v160, 48
    %v1222 = vpop.permute.xlu0 %1221
    %1223 = vrot.lane.b32.xlu0 %v161, 48
    %v1224 = vpop.permute.xlu0 %1223
    %1225 = vrot.lane.b32.xlu0 %v162, 48
    %v1226 = vpop.permute.xlu0 %1225
    %1227 = vrot.lane.b32.xlu0 %v165, 48
    %v1228 = vpop.permute.xlu0 %1227
    %1229 = vrot.lane.b32.xlu0 %v166, 48
    %v1230 = vpop.permute.xlu0 %1229
    %1231 = vrot.lane.b32.xlu0 %v167, 48
    %v1232 = vpop.permute.xlu0 %1231
    %1233 = vrot.lane.b32.xlu0 %v168, 48
    %v1234 = vpop.permute.xlu0 %1233
    %1235 = vrot.lane.b32.xlu0 %v171, 48
    %v1236 = vpop.permute.xlu0 %1235
    %1237 = vrot.lane.b32.xlu0 %v172, 48
    %v1238 = vpop.permute.xlu0 %1237
    %1239 = vrot.lane.b32.xlu0 %v173, 48
    %v1240 = vpop.permute.xlu0 %1239
    %1241 = vrot.lane.b32.xlu0 %v174, 48
    %v1242 = vpop.permute.xlu0 %1241
    %1243 = vrot.lane.b32.xlu0 %v177, 48
    %v1244 = vpop.permute.xlu0 %1243
    %1245 = vrot.lane.b32.xlu0 %v178, 48
    %v1246 = vpop.permute.xlu0 %1245
    %1247 = vrot.lane.b32.xlu0 %v179, 48
    %v1248 = vpop.permute.xlu0 %1247
    %1249 = vrot.lane.b32.xlu0 %v180, 48
    %v1250 = vpop.permute.xlu0 %1249
    %1251 = vrot.lane.b32.xlu0 %v183, 48
    %v1252 = vpop.permute.xlu0 %1251
    %1253 = vrot.lane.b32.xlu0 %v184, 48
    %v1254 = vpop.permute.xlu0 %1253
    %1255 = vrot.lane.b32.xlu0 %v185, 48
    %v1256 = vpop.permute.xlu0 %1255
    %1257 = vrot.lane.b32.xlu0 %v186, 48
    %v1258 = vpop.permute.xlu0 %1257
    %1259 = vrot.lane.b32.xlu0 %v189, 48
    %v1260 = vpop.permute.xlu0 %1259
    %1261 = vrot.lane.b32.xlu0 %v190, 48
    %v1262 = vpop.permute.xlu0 %1261
    %1263 = vrot.lane.b32.xlu0 %v191, 48
    %v1264 = vpop.permute.xlu0 %1263
    %1265 = vrot.lane.b32.xlu0 %v192, 48
    %v1266 = vpop.permute.xlu0 %1265
    %1267 = vrot.lane.b32.xlu0 %v195, 48
    %v1268 = vpop.permute.xlu0 %1267
    %1269 = vrot.lane.b32.xlu0 %v196, 48
    %v1270 = vpop.permute.xlu0 %1269
    %1271 = vrot.lane.b32.xlu0 %v197, 48
    %v1272 = vpop.permute.xlu0 %1271
    %1273 = vrot.lane.b32.xlu0 %v198, 48
    %v1274 = vpop.permute.xlu0 %1273
    %1275 = vrot.lane.b32.xlu0 %v201, 48
    %v1276 = vpop.permute.xlu0 %1275
    %1277 = vrot.lane.b32.xlu0 %v202, 48
    %v1278 = vpop.permute.xlu0 %1277
    %1279 = vrot.lane.b32.xlu0 %v203, 48
    %v1280 = vpop.permute.xlu0 %1279
    %1281 = vrot.lane.b32.xlu0 %v204, 48
    %v1282 = vpop.permute.xlu0 %1281
    %1283 = vrot.lane.b32.xlu0 %v207, 48
    %v1284 = vpop.permute.xlu0 %1283
    %1285 = vrot.lane.b32.xlu0 %v208, 48
    %v1286 = vpop.permute.xlu0 %1285
    %1287 = vrot.lane.b32.xlu0 %v209, 48
    %v1288 = vpop.permute.xlu0 %1287
    %1289 = vrot.lane.b32.xlu0 %v210, 48
    %v1290 = vpop.permute.xlu0 %1289
    %1291 = vrot.lane.b32.xlu0 %v213, 48
    %v1292 = vpop.permute.xlu0 %1291
    %1293 = vrot.lane.b32.xlu0 %v214, 48
    %v1294 = vpop.permute.xlu0 %1293
    %1295 = vrot.lane.b32.xlu0 %v215, 48
    %v1296 = vpop.permute.xlu0 %1295
    %1297 = vrot.lane.b32.xlu0 %v216, 48
    %v1298 = vpop.permute.xlu0 %1297
    %vm1299 = vcmask 392192
    %v1300 = vsel %vm1299, %v1172, %v1174
    %v1301 = vsel %vm1299, %v1176, %v1178
    %v1302 = vsel %vm1299, %v1180, %v1182
    %v1303 = vsel %vm1299, %v1184, %v1186
    %v1304 = vsel %vm1299, %v1188, %v1190
    %v1305 = vsel %vm1299, %v1192, %v1194
    %v1306 = vsel %vm1299, %v1196, %v1198
    %v1307 = vsel %vm1299, %v1200, %v1202
    %v1308 = vsel %vm1299, %v1204, %v1206
    %v1309 = vsel %vm1299, %v1208, %v1210
    %v1310 = vsel %vm1299, %v1212, %v1214
    %v1311 = vsel %vm1299, %v1216, %v1218
    %v1312 = vsel %vm1299, %v1220, %v1222
    %v1313 = vsel %vm1299, %v1224, %v1226
    %v1314 = vsel %vm1299, %v1228, %v1230
    %v1315 = vsel %vm1299, %v1232, %v1234
    %v1316 = vsel %vm1299, %v1236, %v1238
    %v1317 = vsel %vm1299, %v1240, %v1242
    %v1318 = vsel %vm1299, %v1244, %v1246
    %v1319 = vsel %vm1299, %v1248, %v1250
    %v1320 = vsel %vm1299, %v1252, %v1254
    %v1321 = vsel %vm1299, %v1256, %v1258
    %v1322 = vsel %vm1299, %v1260, %v1262
    %v1323 = vsel %vm1299, %v1264, %v1266
    %v1324 = vsel %vm1299, %v1268, %v1270
    %v1325 = vsel %vm1299, %v1272, %v1274
    %v1326 = vsel %vm1299, %v1276, %v1278
    %v1327 = vsel %vm1299, %v1280, %v1282
    %v1328 = vsel %vm1299, %v1284, %v1286
    %v1329 = vsel %vm1299, %v1288, %v1290
    %v1330 = vsel %vm1299, %v1292, %v1294
    %v1331 = vsel %vm1299, %v1296, %v1298
    %1396 = vrot.lane.b32.xlu0 %v328, 64
    %v1397 = vpop.permute.xlu0 %1396
    %1398 = vrot.lane.b32.xlu0 %v331, 64
    %v1399 = vpop.permute.xlu0 %1398
    %1400 = vrot.lane.b32.xlu0 %v333, 64
    %v1401 = vpop.permute.xlu0 %1400
    %1402 = vrot.lane.b32.xlu0 %v335, 64
    %v1403 = vpop.permute.xlu0 %1402
    %1404 = vrot.lane.b32.xlu0 %v338, 64
    %v1405 = vpop.permute.xlu0 %1404
    %1406 = vrot.lane.b32.xlu0 %v341, 64
    %v1407 = vpop.permute.xlu0 %1406
    %1408 = vrot.lane.b32.xlu0 %v343, 64
    %v1409 = vpop.permute.xlu0 %1408
    %1410 = vrot.lane.b32.xlu0 %v345, 64
    %v1411 = vpop.permute.xlu0 %1410
    %1412 = vrot.lane.b32.xlu0 %v348, 64
    %v1413 = vpop.permute.xlu0 %1412
    %1414 = vrot.lane.b32.xlu0 %v351, 64
    %v1415 = vpop.permute.xlu0 %1414
    %1416 = vrot.lane.b32.xlu0 %v353, 64
    %v1417 = vpop.permute.xlu0 %1416
    %1418 = vrot.lane.b32.xlu0 %v355, 64
    %v1419 = vpop.permute.xlu0 %1418
    %1420 = vrot.lane.b32.xlu0 %v358, 64
    %v1421 = vpop.permute.xlu0 %1420
    %1422 = vrot.lane.b32.xlu0 %v361, 64
    %v1423 = vpop.permute.xlu0 %1422
    %1424 = vrot.lane.b32.xlu0 %v363, 64
    %v1425 = vpop.permute.xlu0 %1424
    %1426 = vrot.lane.b32.xlu0 %v365, 64
    %v1427 = vpop.permute.xlu0 %1426
    %1428 = vrot.lane.b32.xlu0 %v368, 64
    %v1429 = vpop.permute.xlu0 %1428
    %1430 = vrot.lane.b32.xlu0 %v371, 64
    %v1431 = vpop.permute.xlu0 %1430
    %1432 = vrot.lane.b32.xlu0 %v373, 64
    %v1433 = vpop.permute.xlu0 %1432
    %1434 = vrot.lane.b32.xlu0 %v375, 64
    %v1435 = vpop.permute.xlu0 %1434
    %1436 = vrot.lane.b32.xlu0 %v378, 64
    %v1437 = vpop.permute.xlu0 %1436
    %1438 = vrot.lane.b32.xlu0 %v381, 64
    %v1439 = vpop.permute.xlu0 %1438
    %1440 = vrot.lane.b32.xlu0 %v383, 64
    %v1441 = vpop.permute.xlu0 %1440
    %1442 = vrot.lane.b32.xlu0 %v385, 64
    %v1443 = vpop.permute.xlu0 %1442
    %1444 = vrot.lane.b32.xlu0 %v388, 64
    %v1445 = vpop.permute.xlu0 %1444
    %1446 = vrot.lane.b32.xlu0 %v391, 64
    %v1447 = vpop.permute.xlu0 %1446
    %1448 = vrot.lane.b32.xlu0 %v393, 64
    %v1449 = vpop.permute.xlu0 %1448
    %1450 = vrot.lane.b32.xlu0 %v395, 64
    %v1451 = vpop.permute.xlu0 %1450
    %1452 = vrot.lane.b32.xlu0 %v398, 64
    %v1453 = vpop.permute.xlu0 %1452
    %1454 = vrot.lane.b32.xlu0 %v401, 64
    %v1455 = vpop.permute.xlu0 %1454
    %1456 = vrot.lane.b32.xlu0 %v403, 64
    %v1457 = vpop.permute.xlu0 %1456
    %1458 = vrot.lane.b32.xlu0 %v405, 64
    %v1459 = vpop.permute.xlu0 %1458
    %1460 = vrot.lane.b32.xlu0 %v408, 64
    %v1461 = vpop.permute.xlu0 %1460
    %1462 = vrot.lane.b32.xlu0 %v411, 64
    %v1463 = vpop.permute.xlu0 %1462
    %1464 = vrot.lane.b32.xlu0 %v413, 64
    %v1465 = vpop.permute.xlu0 %1464
    %1466 = vrot.lane.b32.xlu0 %v415, 64
    %v1467 = vpop.permute.xlu0 %1466
    %1468 = vrot.lane.b32.xlu0 %v418, 64
    %v1469 = vpop.permute.xlu0 %1468
    %1470 = vrot.lane.b32.xlu0 %v421, 64
    %v1471 = vpop.permute.xlu0 %1470
    %1472 = vrot.lane.b32.xlu0 %v423, 64
    %v1473 = vpop.permute.xlu0 %1472
    %1474 = vrot.lane.b32.xlu0 %v425, 64
    %v1475 = vpop.permute.xlu0 %1474
    %1476 = vrot.lane.b32.xlu0 %v428, 64
    %v1477 = vpop.permute.xlu0 %1476
    %1478 = vrot.lane.b32.xlu0 %v431, 64
    %v1479 = vpop.permute.xlu0 %1478
    %1480 = vrot.lane.b32.xlu0 %v433, 64
    %v1481 = vpop.permute.xlu0 %1480
    %1482 = vrot.lane.b32.xlu0 %v435, 64
    %v1483 = vpop.permute.xlu0 %1482
    %1484 = vrot.lane.b32.xlu0 %v438, 64
    %v1485 = vpop.permute.xlu0 %1484
    %1486 = vrot.lane.b32.xlu0 %v441, 64
    %v1487 = vpop.permute.xlu0 %1486
    %1488 = vrot.lane.b32.xlu0 %v443, 64
    %v1489 = vpop.permute.xlu0 %1488
    %1490 = vrot.lane.b32.xlu0 %v445, 64
    %v1491 = vpop.permute.xlu0 %1490
    %1492 = vrot.lane.b32.xlu0 %v448, 64
    %v1493 = vpop.permute.xlu0 %1492
    %1494 = vrot.lane.b32.xlu0 %v451, 64
    %v1495 = vpop.permute.xlu0 %1494
    %1496 = vrot.lane.b32.xlu0 %v453, 64
    %v1497 = vpop.permute.xlu0 %1496
    %1498 = vrot.lane.b32.xlu0 %v455, 64
    %v1499 = vpop.permute.xlu0 %1498
    %1500 = vrot.lane.b32.xlu0 %v458, 64
    %v1501 = vpop.permute.xlu0 %1500
    %1502 = vrot.lane.b32.xlu0 %v461, 64
    %v1503 = vpop.permute.xlu0 %1502
    %1504 = vrot.lane.b32.xlu0 %v463, 64
    %v1505 = vpop.permute.xlu0 %1504
    %1506 = vrot.lane.b32.xlu0 %v465, 64
    %v1507 = vpop.permute.xlu0 %1506
    %1508 = vrot.lane.b32.xlu0 %v468, 64
    %v1509 = vpop.permute.xlu0 %1508
    %1510 = vrot.lane.b32.xlu0 %v471, 64
    %v1511 = vpop.permute.xlu0 %1510
    %1512 = vrot.lane.b32.xlu0 %v473, 64
    %v1513 = vpop.permute.xlu0 %1512
    %1514 = vrot.lane.b32.xlu0 %v475, 64
    %v1515 = vpop.permute.xlu0 %1514
    %1516 = vrot.lane.b32.xlu0 %v645, 64
    %v1517 = vpop.permute.xlu0 %1516
    %1518 = vrot.lane.b32.xlu0 %v648, 64
    %v1519 = vpop.permute.xlu0 %1518
    %1520 = vrot.lane.b32.xlu0 %v650, 64
    %v1521 = vpop.permute.xlu0 %1520
    %1522 = vrot.lane.b32.xlu0 %v652, 64
    %v1523 = vpop.permute.xlu0 %1522
    %vm1524 = vcmask 523264
    %v1525 = vsel %vm1524, %v1397, %v1399
    %v1526 = vsel %vm1524, %v1401, %v1403
    %v1527 = vsel %vm1524, %v1405, %v1407
    %v1528 = vsel %vm1524, %v1409, %v1411
    %v1529 = vsel %vm1524, %v1413, %v1415
    %v1530 = vsel %vm1524, %v1417, %v1419
    %v1531 = vsel %vm1524, %v1421, %v1423
    %v1532 = vsel %vm1524, %v1425, %v1427
    %v1533 = vsel %vm1524, %v1429, %v1431
    %v1534 = vsel %vm1524, %v1433, %v1435
    %v1535 = vsel %vm1524, %v1437, %v1439
    %v1536 = vsel %vm1524, %v1441, %v1443
    %v1537 = vsel %vm1524, %v1445, %v1447
    %v1538 = vsel %vm1524, %v1449, %v1451
    %v1539 = vsel %vm1524, %v1453, %v1455
    %v1540 = vsel %vm1524, %v1457, %v1459
    %v1541 = vsel %vm1524, %v1461, %v1463
    %v1542 = vsel %vm1524, %v1465, %v1467
    %v1543 = vsel %vm1524, %v1469, %v1471
    %v1544 = vsel %vm1524, %v1473, %v1475
    %v1545 = vsel %vm1524, %v1477, %v1479
    %v1546 = vsel %vm1524, %v1481, %v1483
    %v1547 = vsel %vm1524, %v1485, %v1487
    %v1548 = vsel %vm1524, %v1489, %v1491
    %v1549 = vsel %vm1524, %v1493, %v1495
    %v1550 = vsel %vm1524, %v1497, %v1499
    %v1551 = vsel %vm1524, %v1501, %v1503
    %v1552 = vsel %vm1524, %v1505, %v1507
    %v1553 = vsel %vm1524, %v1509, %v1511
    %v1554 = vsel %vm1524, %v1513, %v1515
    %v1555 = vsel %vm1524, %v1517, %v1519
    %v1556 = vsel %vm1524, %v1521, %v1523
    %1621 = vrot.lane.b32.xlu0 %v489, 80
    %v1622 = vpop.permute.xlu0 %1621
    %1623 = vrot.lane.b32.xlu0 %v492, 80
    %v1624 = vpop.permute.xlu0 %1623
    %1625 = vrot.lane.b32.xlu0 %v494, 80
    %v1626 = vpop.permute.xlu0 %1625
    %1627 = vrot.lane.b32.xlu0 %v496, 80
    %v1628 = vpop.permute.xlu0 %1627
    %1629 = vrot.lane.b32.xlu0 %v499, 80
    %v1630 = vpop.permute.xlu0 %1629
    %1631 = vrot.lane.b32.xlu0 %v502, 80
    %v1632 = vpop.permute.xlu0 %1631
    %1633 = vrot.lane.b32.xlu0 %v504, 80
    %v1634 = vpop.permute.xlu0 %1633
    %1635 = vrot.lane.b32.xlu0 %v506, 80
    %v1636 = vpop.permute.xlu0 %1635
    %1637 = vrot.lane.b32.xlu0 %v509, 80
    %v1638 = vpop.permute.xlu0 %1637
    %1639 = vrot.lane.b32.xlu0 %v512, 80
    %v1640 = vpop.permute.xlu0 %1639
    %1641 = vrot.lane.b32.xlu0 %v514, 80
    %v1642 = vpop.permute.xlu0 %1641
    %1643 = vrot.lane.b32.xlu0 %v516, 80
    %v1644 = vpop.permute.xlu0 %1643
    %1645 = vrot.lane.b32.xlu0 %v519, 80
    %v1646 = vpop.permute.xlu0 %1645
    %1647 = vrot.lane.b32.xlu0 %v522, 80
    %v1648 = vpop.permute.xlu0 %1647
    %1649 = vrot.lane.b32.xlu0 %v524, 80
    %v1650 = vpop.permute.xlu0 %1649
    %1651 = vrot.lane.b32.xlu0 %v526, 80
    %v1652 = vpop.permute.xlu0 %1651
    %1653 = vrot.lane.b32.xlu0 %v529, 80
    %v1654 = vpop.permute.xlu0 %1653
    %1655 = vrot.lane.b32.xlu0 %v532, 80
    %v1656 = vpop.permute.xlu0 %1655
    %1657 = vrot.lane.b32.xlu0 %v534, 80
    %v1658 = vpop.permute.xlu0 %1657
    %1659 = vrot.lane.b32.xlu0 %v536, 80
    %v1660 = vpop.permute.xlu0 %1659
    %1661 = vrot.lane.b32.xlu0 %v539, 80
    %v1662 = vpop.permute.xlu0 %1661
    %1663 = vrot.lane.b32.xlu0 %v542, 80
    %v1664 = vpop.permute.xlu0 %1663
    %1665 = vrot.lane.b32.xlu0 %v544, 80
    %v1666 = vpop.permute.xlu0 %1665
    %1667 = vrot.lane.b32.xlu0 %v546, 80
    %v1668 = vpop.permute.xlu0 %1667
    %1669 = vrot.lane.b32.xlu0 %v549, 80
    %v1670 = vpop.permute.xlu0 %1669
    %1671 = vrot.lane.b32.xlu0 %v552, 80
    %v1672 = vpop.permute.xlu0 %1671
    %1673 = vrot.lane.b32.xlu0 %v554, 80
    %v1674 = vpop.permute.xlu0 %1673
    %1675 = vrot.lane.b32.xlu0 %v556, 80
    %v1676 = vpop.permute.xlu0 %1675
    %1677 = vrot.lane.b32.xlu0 %v559, 80
    %v1678 = vpop.permute.xlu0 %1677
    %1679 = vrot.lane.b32.xlu0 %v562, 80
    %v1680 = vpop.permute.xlu0 %1679
    %1681 = vrot.lane.b32.xlu0 %v564, 80
    %v1682 = vpop.permute.xlu0 %1681
    %1683 = vrot.lane.b32.xlu0 %v566, 80
    %v1684 = vpop.permute.xlu0 %1683
    %1685 = vrot.lane.b32.xlu0 %v569, 80
    %v1686 = vpop.permute.xlu0 %1685
    %1687 = vrot.lane.b32.xlu0 %v572, 80
    %v1688 = vpop.permute.xlu0 %1687
    %1689 = vrot.lane.b32.xlu0 %v574, 80
    %v1690 = vpop.permute.xlu0 %1689
    %1691 = vrot.lane.b32.xlu0 %v576, 80
    %v1692 = vpop.permute.xlu0 %1691
    %1693 = vrot.lane.b32.xlu0 %v579, 80
    %v1694 = vpop.permute.xlu0 %1693
    %1695 = vrot.lane.b32.xlu0 %v582, 80
    %v1696 = vpop.permute.xlu0 %1695
    %1697 = vrot.lane.b32.xlu0 %v584, 80
    %v1698 = vpop.permute.xlu0 %1697
    %1699 = vrot.lane.b32.xlu0 %v586, 80
    %v1700 = vpop.permute.xlu0 %1699
    %1701 = vrot.lane.b32.xlu0 %v589, 80
    %v1702 = vpop.permute.xlu0 %1701
    %1703 = vrot.lane.b32.xlu0 %v592, 80
    %v1704 = vpop.permute.xlu0 %1703
    %1705 = vrot.lane.b32.xlu0 %v594, 80
    %v1706 = vpop.permute.xlu0 %1705
    %1707 = vrot.lane.b32.xlu0 %v596, 80
    %v1708 = vpop.permute.xlu0 %1707
    %1709 = vrot.lane.b32.xlu0 %v599, 80
    %v1710 = vpop.permute.xlu0 %1709
    %1711 = vrot.lane.b32.xlu0 %v602, 80
    %v1712 = vpop.permute.xlu0 %1711
    %1713 = vrot.lane.b32.xlu0 %v604, 80
    %v1714 = vpop.permute.xlu0 %1713
    %1715 = vrot.lane.b32.xlu0 %v606, 80
    %v1716 = vpop.permute.xlu0 %1715
    %1717 = vrot.lane.b32.xlu0 %v609, 80
    %v1718 = vpop.permute.xlu0 %1717
    %1719 = vrot.lane.b32.xlu0 %v612, 80
    %v1720 = vpop.permute.xlu0 %1719
    %1721 = vrot.lane.b32.xlu0 %v614, 80
    %v1722 = vpop.permute.xlu0 %1721
    %1723 = vrot.lane.b32.xlu0 %v616, 80
    %v1724 = vpop.permute.xlu0 %1723
    %1725 = vrot.lane.b32.xlu0 %v619, 80
    %v1726 = vpop.permute.xlu0 %1725
    %1727 = vrot.lane.b32.xlu0 %v622, 80
    %v1728 = vpop.permute.xlu0 %1727
    %1729 = vrot.lane.b32.xlu0 %v624, 80
    %v1730 = vpop.permute.xlu0 %1729
    %1731 = vrot.lane.b32.xlu0 %v626, 80
    %v1732 = vpop.permute.xlu0 %1731
    %1733 = vrot.lane.b32.xlu0 %v629, 80
    %v1734 = vpop.permute.xlu0 %1733
    %1735 = vrot.lane.b32.xlu0 %v632, 80
    %v1736 = vpop.permute.xlu0 %1735
    %1737 = vrot.lane.b32.xlu0 %v634, 80
    %v1738 = vpop.permute.xlu0 %1737
    %1739 = vrot.lane.b32.xlu0 %v636, 80
    %v1740 = vpop.permute.xlu0 %1739
    %1741 = vrot.lane.b32.xlu0 %v655, 80
    %v1742 = vpop.permute.xlu0 %1741
    %1743 = vrot.lane.b32.xlu0 %v658, 80
    %v1744 = vpop.permute.xlu0 %1743
    %1745 = vrot.lane.b32.xlu0 %v660, 80
    %v1746 = vpop.permute.xlu0 %1745
    %1747 = vrot.lane.b32.xlu0 %v662, 80
    %v1748 = vpop.permute.xlu0 %1747
    %vm1749 = vcmask 654336
    %v1750 = vsel %vm1749, %v1622, %v1624
    %v1751 = vsel %vm1749, %v1626, %v1628
    %v1752 = vsel %vm1749, %v1630, %v1632
    %v1753 = vsel %vm1749, %v1634, %v1636
    %v1754 = vsel %vm1749, %v1638, %v1640
    %v1755 = vsel %vm1749, %v1642, %v1644
    %v1756 = vsel %vm1749, %v1646, %v1648
    %v1757 = vsel %vm1749, %v1650, %v1652
    %v1758 = vsel %vm1749, %v1654, %v1656
    %v1759 = vsel %vm1749, %v1658, %v1660
    %v1760 = vsel %vm1749, %v1662, %v1664
    %v1761 = vsel %vm1749, %v1666, %v1668
    %v1762 = vsel %vm1749, %v1670, %v1672
    %v1763 = vsel %vm1749, %v1674, %v1676
    %v1764 = vsel %vm1749, %v1678, %v1680
    %v1765 = vsel %vm1749, %v1682, %v1684
    %v1766 = vsel %vm1749, %v1686, %v1688
    %v1767 = vsel %vm1749, %v1690, %v1692
    %v1768 = vsel %vm1749, %v1694, %v1696
    %v1769 = vsel %vm1749, %v1698, %v1700
    %v1770 = vsel %vm1749, %v1702, %v1704
    %v1771 = vsel %vm1749, %v1706, %v1708
    %v1772 = vsel %vm1749, %v1710, %v1712
    %v1773 = vsel %vm1749, %v1714, %v1716
    %v1774 = vsel %vm1749, %v1718, %v1720
    %v1775 = vsel %vm1749, %v1722, %v1724
    %v1776 = vsel %vm1749, %v1726, %v1728
    %v1777 = vsel %vm1749, %v1730, %v1732
    %v1778 = vsel %vm1749, %v1734, %v1736
    %v1779 = vsel %vm1749, %v1738, %v1740
    %v1780 = vsel %vm1749, %v1742, %v1744
    %v1781 = vsel %vm1749, %v1746, %v1748
    %1846 = vrot.lane.b32.xlu0 %v129, 96
    %v1847 = vpop.permute.xlu0 %1846
    %1848 = vrot.lane.b32.xlu0 %v130, 96
    %v1849 = vpop.permute.xlu0 %1848
    %1850 = vrot.lane.b32.xlu0 %v131, 96
    %v1851 = vpop.permute.xlu0 %1850
    %1852 = vrot.lane.b32.xlu0 %v132, 96
    %v1853 = vpop.permute.xlu0 %1852
    %1854 = vrot.lane.b32.xlu0 %v135, 96
    %v1855 = vpop.permute.xlu0 %1854
    %1856 = vrot.lane.b32.xlu0 %v136, 96
    %v1857 = vpop.permute.xlu0 %1856
    %1858 = vrot.lane.b32.xlu0 %v137, 96
    %v1859 = vpop.permute.xlu0 %1858
    %1860 = vrot.lane.b32.xlu0 %v138, 96
    %v1861 = vpop.permute.xlu0 %1860
    %1862 = vrot.lane.b32.xlu0 %v141, 96
    %v1863 = vpop.permute.xlu0 %1862
    %1864 = vrot.lane.b32.xlu0 %v142, 96
    %v1865 = vpop.permute.xlu0 %1864
    %1866 = vrot.lane.b32.xlu0 %v143, 96
    %v1867 = vpop.permute.xlu0 %1866
    %1868 = vrot.lane.b32.xlu0 %v144, 96
    %v1869 = vpop.permute.xlu0 %1868
    %1870 = vrot.lane.b32.xlu0 %v147, 96
    %v1871 = vpop.permute.xlu0 %1870
    %1872 = vrot.lane.b32.xlu0 %v148, 96
    %v1873 = vpop.permute.xlu0 %1872
    %1874 = vrot.lane.b32.xlu0 %v149, 96
    %v1875 = vpop.permute.xlu0 %1874
    %1876 = vrot.lane.b32.xlu0 %v150, 96
    %v1877 = vpop.permute.xlu0 %1876
    %1878 = vrot.lane.b32.xlu0 %v153, 96
    %v1879 = vpop.permute.xlu0 %1878
    %1880 = vrot.lane.b32.xlu0 %v154, 96
    %v1881 = vpop.permute.xlu0 %1880
    %1882 = vrot.lane.b32.xlu0 %v155, 96
    %v1883 = vpop.permute.xlu0 %1882
    %1884 = vrot.lane.b32.xlu0 %v156, 96
    %v1885 = vpop.permute.xlu0 %1884
    %1886 = vrot.lane.b32.xlu0 %v159, 96
    %v1887 = vpop.permute.xlu0 %1886
    %1888 = vrot.lane.b32.xlu0 %v160, 96
    %v1889 = vpop.permute.xlu0 %1888
    %1890 = vrot.lane.b32.xlu0 %v161, 96
    %v1891 = vpop.permute.xlu0 %1890
    %1892 = vrot.lane.b32.xlu0 %v162, 96
    %v1893 = vpop.permute.xlu0 %1892
    %1894 = vrot.lane.b32.xlu0 %v165, 96
    %v1895 = vpop.permute.xlu0 %1894
    %1896 = vrot.lane.b32.xlu0 %v166, 96
    %v1897 = vpop.permute.xlu0 %1896
    %1898 = vrot.lane.b32.xlu0 %v167, 96
    %v1899 = vpop.permute.xlu0 %1898
    %1900 = vrot.lane.b32.xlu0 %v168, 96
    %v1901 = vpop.permute.xlu0 %1900
    %1902 = vrot.lane.b32.xlu0 %v171, 96
    %v1903 = vpop.permute.xlu0 %1902
    %1904 = vrot.lane.b32.xlu0 %v172, 96
    %v1905 = vpop.permute.xlu0 %1904
    %1906 = vrot.lane.b32.xlu0 %v173, 96
    %v1907 = vpop.permute.xlu0 %1906
    %1908 = vrot.lane.b32.xlu0 %v174, 96
    %v1909 = vpop.permute.xlu0 %1908
    %1910 = vrot.lane.b32.xlu0 %v177, 96
    %v1911 = vpop.permute.xlu0 %1910
    %1912 = vrot.lane.b32.xlu0 %v178, 96
    %v1913 = vpop.permute.xlu0 %1912
    %1914 = vrot.lane.b32.xlu0 %v179, 96
    %v1915 = vpop.permute.xlu0 %1914
    %1916 = vrot.lane.b32.xlu0 %v180, 96
    %v1917 = vpop.permute.xlu0 %1916
    %1918 = vrot.lane.b32.xlu0 %v183, 96
    %v1919 = vpop.permute.xlu0 %1918
    %1920 = vrot.lane.b32.xlu0 %v184, 96
    %v1921 = vpop.permute.xlu0 %1920
    %1922 = vrot.lane.b32.xlu0 %v185, 96
    %v1923 = vpop.permute.xlu0 %1922
    %1924 = vrot.lane.b32.xlu0 %v186, 96
    %v1925 = vpop.permute.xlu0 %1924
    %1926 = vrot.lane.b32.xlu0 %v189, 96
    %v1927 = vpop.permute.xlu0 %1926
    %1928 = vrot.lane.b32.xlu0 %v190, 96
    %v1929 = vpop.permute.xlu0 %1928
    %1930 = vrot.lane.b32.xlu0 %v191, 96
    %v1931 = vpop.permute.xlu0 %1930
    %1932 = vrot.lane.b32.xlu0 %v192, 96
    %v1933 = vpop.permute.xlu0 %1932
    %1934 = vrot.lane.b32.xlu0 %v195, 96
    %v1935 = vpop.permute.xlu0 %1934
    %1936 = vrot.lane.b32.xlu0 %v196, 96
    %v1937 = vpop.permute.xlu0 %1936
    %1938 = vrot.lane.b32.xlu0 %v197, 96
    %v1939 = vpop.permute.xlu0 %1938
    %1940 = vrot.lane.b32.xlu0 %v198, 96
    %v1941 = vpop.permute.xlu0 %1940
    %1942 = vrot.lane.b32.xlu0 %v201, 96
    %v1943 = vpop.permute.xlu0 %1942
    %1944 = vrot.lane.b32.xlu0 %v202, 96
    %v1945 = vpop.permute.xlu0 %1944
    %1946 = vrot.lane.b32.xlu0 %v203, 96
    %v1947 = vpop.permute.xlu0 %1946
    %1948 = vrot.lane.b32.xlu0 %v204, 96
    %v1949 = vpop.permute.xlu0 %1948
    %1950 = vrot.lane.b32.xlu0 %v207, 96
    %v1951 = vpop.permute.xlu0 %1950
    %1952 = vrot.lane.b32.xlu0 %v208, 96
    %v1953 = vpop.permute.xlu0 %1952
    %1954 = vrot.lane.b32.xlu0 %v209, 96
    %v1955 = vpop.permute.xlu0 %1954
    %1956 = vrot.lane.b32.xlu0 %v210, 96
    %v1957 = vpop.permute.xlu0 %1956
    %1958 = vrot.lane.b32.xlu0 %v213, 96
    %v1959 = vpop.permute.xlu0 %1958
    %1960 = vrot.lane.b32.xlu0 %v214, 96
    %v1961 = vpop.permute.xlu0 %1960
    %1962 = vrot.lane.b32.xlu0 %v215, 96
    %v1963 = vpop.permute.xlu0 %1962
    %1964 = vrot.lane.b32.xlu0 %v216, 96
    %v1965 = vpop.permute.xlu0 %1964
    %1966 = vrot.lane.b32.xlu0 %v117, 96
    %v1967 = vpop.permute.xlu0 %1966
    %1968 = vrot.lane.b32.xlu0 %v118, 96
    %v1969 = vpop.permute.xlu0 %1968
    %1970 = vrot.lane.b32.xlu0 %v119, 96
    %v1971 = vpop.permute.xlu0 %1970
    %1972 = vrot.lane.b32.xlu0 %v120, 96
    %v1973 = vpop.permute.xlu0 %1972
    %vm1974 = vcmask 785408
    %v1975 = vsel %vm1974, %v1847, %v1849
    %v1976 = vsel %vm1974, %v1851, %v1853
    %v1977 = vsel %vm1974, %v1855, %v1857
    %v1978 = vsel %vm1974, %v1859, %v1861
    %v1979 = vsel %vm1974, %v1863, %v1865
    %v1980 = vsel %vm1974, %v1867, %v1869
    %v1981 = vsel %vm1974, %v1871, %v1873
    %v1982 = vsel %vm1974, %v1875, %v1877
    %v1983 = vsel %vm1974, %v1879, %v1881
    %v1984 = vsel %vm1974, %v1883, %v1885
    %v1985 = vsel %vm1974, %v1887, %v1889
    %v1986 = vsel %vm1974, %v1891, %v1893
    %v1987 = vsel %vm1974, %v1895, %v1897
    %v1988 = vsel %vm1974, %v1899, %v1901
    %v1989 = vsel %vm1974, %v1903, %v1905
    %v1990 = vsel %vm1974, %v1907, %v1909
    %v1991 = vsel %vm1974, %v1911, %v1913
    %v1992 = vsel %vm1974, %v1915, %v1917
    %v1993 = vsel %vm1974, %v1919, %v1921
    %v1994 = vsel %vm1974, %v1923, %v1925
    %v1995 = vsel %vm1974, %v1927, %v1929
    %v1996 = vsel %vm1974, %v1931, %v1933
    %v1997 = vsel %vm1974, %v1935, %v1937
    %v1998 = vsel %vm1974, %v1939, %v1941
    %v1999 = vsel %vm1974, %v1943, %v1945
    %v2000 = vsel %vm1974, %v1947, %v1949
    %v2001 = vsel %vm1974, %v1951, %v1953
    %v2002 = vsel %vm1974, %v1955, %v1957
    %v2003 = vsel %vm1974, %v1959, %v1961
    %v2004 = vsel %vm1974, %v1963, %v1965
    %v2005 = vsel %vm1974, %v1967, %v1969
    %v2006 = vsel %vm1974, %v1971, %v1973
    %2071 = vrot.lane.b32.xlu0 %v338, 112
    %v2072 = vpop.permute.xlu0 %2071
    %2073 = vrot.lane.b32.xlu0 %v341, 112
    %v2074 = vpop.permute.xlu0 %2073
    %2075 = vrot.lane.b32.xlu0 %v343, 112
    %v2076 = vpop.permute.xlu0 %2075
    %2077 = vrot.lane.b32.xlu0 %v345, 112
    %v2078 = vpop.permute.xlu0 %2077
    %2079 = vrot.lane.b32.xlu0 %v348, 112
    %v2080 = vpop.permute.xlu0 %2079
    %2081 = vrot.lane.b32.xlu0 %v351, 112
    %v2082 = vpop.permute.xlu0 %2081
    %2083 = vrot.lane.b32.xlu0 %v353, 112
    %v2084 = vpop.permute.xlu0 %2083
    %2085 = vrot.lane.b32.xlu0 %v355, 112
    %v2086 = vpop.permute.xlu0 %2085
    %2087 = vrot.lane.b32.xlu0 %v358, 112
    %v2088 = vpop.permute.xlu0 %2087
    %2089 = vrot.lane.b32.xlu0 %v361, 112
    %v2090 = vpop.permute.xlu0 %2089
    %2091 = vrot.lane.b32.xlu0 %v363, 112
    %v2092 = vpop.permute.xlu0 %2091
    %2093 = vrot.lane.b32.xlu0 %v365, 112
    %v2094 = vpop.permute.xlu0 %2093
    %2095 = vrot.lane.b32.xlu0 %v368, 112
    %v2096 = vpop.permute.xlu0 %2095
    %2097 = vrot.lane.b32.xlu0 %v371, 112
    %v2098 = vpop.permute.xlu0 %2097
    %2099 = vrot.lane.b32.xlu0 %v373, 112
    %v2100 = vpop.permute.xlu0 %2099
    %2101 = vrot.lane.b32.xlu0 %v375, 112
    %v2102 = vpop.permute.xlu0 %2101
    %2103 = vrot.lane.b32.xlu0 %v378, 112
    %v2104 = vpop.permute.xlu0 %2103
    %2105 = vrot.lane.b32.xlu0 %v381, 112
    %v2106 = vpop.permute.xlu0 %2105
    %2107 = vrot.lane.b32.xlu0 %v383, 112
    %v2108 = vpop.permute.xlu0 %2107
    %2109 = vrot.lane.b32.xlu0 %v385, 112
    %v2110 = vpop.permute.xlu0 %2109
    %2111 = vrot.lane.b32.xlu0 %v388, 112
    %v2112 = vpop.permute.xlu0 %2111
    %2113 = vrot.lane.b32.xlu0 %v391, 112
    %v2114 = vpop.permute.xlu0 %2113
    %2115 = vrot.lane.b32.xlu0 %v393, 112
    %v2116 = vpop.permute.xlu0 %2115
    %2117 = vrot.lane.b32.xlu0 %v395, 112
    %v2118 = vpop.permute.xlu0 %2117
    %2119 = vrot.lane.b32.xlu0 %v398, 112
    %v2120 = vpop.permute.xlu0 %2119
    %2121 = vrot.lane.b32.xlu0 %v401, 112
    %v2122 = vpop.permute.xlu0 %2121
    %2123 = vrot.lane.b32.xlu0 %v403, 112
    %v2124 = vpop.permute.xlu0 %2123
    %2125 = vrot.lane.b32.xlu0 %v405, 112
    %v2126 = vpop.permute.xlu0 %2125
    %2127 = vrot.lane.b32.xlu0 %v408, 112
    %v2128 = vpop.permute.xlu0 %2127
    %2129 = vrot.lane.b32.xlu0 %v411, 112
    %v2130 = vpop.permute.xlu0 %2129
    %2131 = vrot.lane.b32.xlu0 %v413, 112
    %v2132 = vpop.permute.xlu0 %2131
    %2133 = vrot.lane.b32.xlu0 %v415, 112
    %v2134 = vpop.permute.xlu0 %2133
    %2135 = vrot.lane.b32.xlu0 %v418, 112
    %v2136 = vpop.permute.xlu0 %2135
    %2137 = vrot.lane.b32.xlu0 %v421, 112
    %v2138 = vpop.permute.xlu0 %2137
    %2139 = vrot.lane.b32.xlu0 %v423, 112
    %v2140 = vpop.permute.xlu0 %2139
    %2141 = vrot.lane.b32.xlu0 %v425, 112
    %v2142 = vpop.permute.xlu0 %2141
    %2143 = vrot.lane.b32.xlu0 %v428, 112
    %v2144 = vpop.permute.xlu0 %2143
    %2145 = vrot.lane.b32.xlu0 %v431, 112
    %v2146 = vpop.permute.xlu0 %2145
    %2147 = vrot.lane.b32.xlu0 %v433, 112
    %v2148 = vpop.permute.xlu0 %2147
    %2149 = vrot.lane.b32.xlu0 %v435, 112
    %v2150 = vpop.permute.xlu0 %2149
    %2151 = vrot.lane.b32.xlu0 %v438, 112
    %v2152 = vpop.permute.xlu0 %2151
    %2153 = vrot.lane.b32.xlu0 %v441, 112
    %v2154 = vpop.permute.xlu0 %2153
    %2155 = vrot.lane.b32.xlu0 %v443, 112
    %v2156 = vpop.permute.xlu0 %2155
    %2157 = vrot.lane.b32.xlu0 %v445, 112
    %v2158 = vpop.permute.xlu0 %2157
    %2159 = vrot.lane.b32.xlu0 %v448, 112
    %v2160 = vpop.permute.xlu0 %2159
    %2161 = vrot.lane.b32.xlu0 %v451, 112
    %v2162 = vpop.permute.xlu0 %2161
    %2163 = vrot.lane.b32.xlu0 %v453, 112
    %v2164 = vpop.permute.xlu0 %2163
    %2165 = vrot.lane.b32.xlu0 %v455, 112
    %v2166 = vpop.permute.xlu0 %2165
    %2167 = vrot.lane.b32.xlu0 %v458, 112
    %v2168 = vpop.permute.xlu0 %2167
    %2169 = vrot.lane.b32.xlu0 %v461, 112
    %v2170 = vpop.permute.xlu0 %2169
    %2171 = vrot.lane.b32.xlu0 %v463, 112
    %v2172 = vpop.permute.xlu0 %2171
    %2173 = vrot.lane.b32.xlu0 %v465, 112
    %v2174 = vpop.permute.xlu0 %2173
    %2175 = vrot.lane.b32.xlu0 %v468, 112
    %v2176 = vpop.permute.xlu0 %2175
    %2177 = vrot.lane.b32.xlu0 %v471, 112
    %v2178 = vpop.permute.xlu0 %2177
    %2179 = vrot.lane.b32.xlu0 %v473, 112
    %v2180 = vpop.permute.xlu0 %2179
    %2181 = vrot.lane.b32.xlu0 %v475, 112
    %v2182 = vpop.permute.xlu0 %2181
    %2183 = vrot.lane.b32.xlu0 %v645, 112
    %v2184 = vpop.permute.xlu0 %2183
    %2185 = vrot.lane.b32.xlu0 %v648, 112
    %v2186 = vpop.permute.xlu0 %2185
    %2187 = vrot.lane.b32.xlu0 %v650, 112
    %v2188 = vpop.permute.xlu0 %2187
    %2189 = vrot.lane.b32.xlu0 %v652, 112
    %v2190 = vpop.permute.xlu0 %2189
    %2191 = vrot.lane.b32.xlu0 %v671, 112
    %v2192 = vpop.permute.xlu0 %2191
    %2193 = vrot.lane.b32.xlu0 %v674, 112
    %v2194 = vpop.permute.xlu0 %2193
    %2195 = vrot.lane.b32.xlu0 %v676, 112
    %v2196 = vpop.permute.xlu0 %2195
    %2197 = vrot.lane.b32.xlu0 %v678, 112
    %v2198 = vpop.permute.xlu0 %2197
    %vm2199 = vcmask 916480
    %v2200 = vsel %vm2199, %v2072, %v2074
    %v2201 = vsel %vm2199, %v2076, %v2078
    %v2202 = vsel %vm2199, %v2080, %v2082
    %v2203 = vsel %vm2199, %v2084, %v2086
    %v2204 = vsel %vm2199, %v2088, %v2090
    %v2205 = vsel %vm2199, %v2092, %v2094
    %v2206 = vsel %vm2199, %v2096, %v2098
    %v2207 = vsel %vm2199, %v2100, %v2102
    %v2208 = vsel %vm2199, %v2104, %v2106
    %v2209 = vsel %vm2199, %v2108, %v2110
    %v2210 = vsel %vm2199, %v2112, %v2114
    %v2211 = vsel %vm2199, %v2116, %v2118
    %v2212 = vsel %vm2199, %v2120, %v2122
    %v2213 = vsel %vm2199, %v2124, %v2126
    %v2214 = vsel %vm2199, %v2128, %v2130
    %v2215 = vsel %vm2199, %v2132, %v2134
    %v2216 = vsel %vm2199, %v2136, %v2138
    %v2217 = vsel %vm2199, %v2140, %v2142
    %v2218 = vsel %vm2199, %v2144, %v2146
    %v2219 = vsel %vm2199, %v2148, %v2150
    %v2220 = vsel %vm2199, %v2152, %v2154
    %v2221 = vsel %vm2199, %v2156, %v2158
    %v2222 = vsel %vm2199, %v2160, %v2162
    %v2223 = vsel %vm2199, %v2164, %v2166
    %v2224 = vsel %vm2199, %v2168, %v2170
    %v2225 = vsel %vm2199, %v2172, %v2174
    %v2226 = vsel %vm2199, %v2176, %v2178
    %v2227 = vsel %vm2199, %v2180, %v2182
    %v2228 = vsel %vm2199, %v2184, %v2186
    %v2229 = vsel %vm2199, %v2188, %v2190
    %v2230 = vsel %vm2199, %v2192, %v2194
    %v2231 = vsel %vm2199, %v2196, %v2198
    %v2296 = vsel %vm849, %v102, %v722
    %v2297 = vsel %vm849, %v104, %v726
    %v2298 = vsel %vm849, %v124, %v730
    %v2299 = vsel %vm849, %v126, %v734
    %v2300 = vsel %vm849, %v130, %v738
    %v2301 = vsel %vm849, %v132, %v742
    %v2302 = vsel %vm849, %v136, %v746
    %v2303 = vsel %vm849, %v138, %v750
    %v2304 = vsel %vm849, %v142, %v754
    %v2305 = vsel %vm849, %v144, %v758
    %v2306 = vsel %vm849, %v148, %v762
    %v2307 = vsel %vm849, %v150, %v766
    %v2308 = vsel %vm849, %v154, %v770
    %v2309 = vsel %vm849, %v156, %v774
    %v2310 = vsel %vm849, %v160, %v778
    %v2311 = vsel %vm849, %v162, %v782
    %v2312 = vsel %vm849, %v166, %v786
    %v2313 = vsel %vm849, %v168, %v790
    %v2314 = vsel %vm849, %v172, %v794
    %v2315 = vsel %vm849, %v174, %v798
    %v2316 = vsel %vm849, %v178, %v802
    %v2317 = vsel %vm849, %v180, %v806
    %v2318 = vsel %vm849, %v184, %v810
    %v2319 = vsel %vm849, %v186, %v814
    %v2320 = vsel %vm849, %v190, %v818
    %v2321 = vsel %vm849, %v192, %v822
    %v2322 = vsel %vm849, %v196, %v826
    %v2323 = vsel %vm849, %v198, %v830
    %v2324 = vsel %vm849, %v202, %v834
    %v2325 = vsel %vm849, %v204, %v838
    %v2326 = vsel %vm849, %v208, %v842
    %v2327 = vsel %vm849, %v210, %v846
    %v2328 = vsel %vm1074, %v850, %v947
    %v2329 = vsel %vm1074, %v851, %v951
    %v2330 = vsel %vm1074, %v852, %v955
    %v2331 = vsel %vm1074, %v853, %v959
    %v2332 = vsel %vm1074, %v854, %v963
    %v2333 = vsel %vm1074, %v855, %v967
    %v2334 = vsel %vm1074, %v856, %v971
    %v2335 = vsel %vm1074, %v857, %v975
    %v2336 = vsel %vm1074, %v858, %v979
    %v2337 = vsel %vm1074, %v859, %v983
    %v2338 = vsel %vm1074, %v860, %v987
    %v2339 = vsel %vm1074, %v861, %v991
    %v2340 = vsel %vm1074, %v862, %v995
    %v2341 = vsel %vm1074, %v863, %v999
    %v2342 = vsel %vm1074, %v864, %v1003
    %v2343 = vsel %vm1074, %v865, %v1007
    %v2344 = vsel %vm1074, %v866, %v1011
    %v2345 = vsel %vm1074, %v867, %v1015
    %v2346 = vsel %vm1074, %v868, %v1019
    %v2347 = vsel %vm1074, %v869, %v1023
    %v2348 = vsel %vm1074, %v870, %v1027
    %v2349 = vsel %vm1074, %v871, %v1031
    %v2350 = vsel %vm1074, %v872, %v1035
    %v2351 = vsel %vm1074, %v873, %v1039
    %v2352 = vsel %vm1074, %v874, %v1043
    %v2353 = vsel %vm1074, %v875, %v1047
    %v2354 = vsel %vm1074, %v876, %v1051
    %v2355 = vsel %vm1074, %v877, %v1055
    %v2356 = vsel %vm1074, %v878, %v1059
    %v2357 = vsel %vm1074, %v879, %v1063
    %v2358 = vsel %vm1074, %v880, %v1067
    %v2359 = vsel %vm1074, %v881, %v1071
    %v2360 = vsel %vm1299, %v1075, %v1172
    %v2361 = vsel %vm1299, %v1076, %v1176
    %v2362 = vsel %vm1299, %v1077, %v1180
    %v2363 = vsel %vm1299, %v1078, %v1184
    %v2364 = vsel %vm1299, %v1079, %v1188
    %v2365 = vsel %vm1299, %v1080, %v1192
    %v2366 = vsel %vm1299, %v1081, %v1196
    %v2367 = vsel %vm1299, %v1082, %v1200
    %v2368 = vsel %vm1299, %v1083, %v1204
    %v2369 = vsel %vm1299, %v1084, %v1208
    %v2370 = vsel %vm1299, %v1085, %v1212
    %v2371 = vsel %vm1299, %v1086, %v1216
    %v2372 = vsel %vm1299, %v1087, %v1220
    %v2373 = vsel %vm1299, %v1088, %v1224
    %v2374 = vsel %vm1299, %v1089, %v1228
    %v2375 = vsel %vm1299, %v1090, %v1232
    %v2376 = vsel %vm1299, %v1091, %v1236
    %v2377 = vsel %vm1299, %v1092, %v1240
    %v2378 = vsel %vm1299, %v1093, %v1244
    %v2379 = vsel %vm1299, %v1094, %v1248
    %v2380 = vsel %vm1299, %v1095, %v1252
    %v2381 = vsel %vm1299, %v1096, %v1256
    %v2382 = vsel %vm1299, %v1097, %v1260
    %v2383 = vsel %vm1299, %v1098, %v1264
    %v2384 = vsel %vm1299, %v1099, %v1268
    %v2385 = vsel %vm1299, %v1100, %v1272
    %v2386 = vsel %vm1299, %v1101, %v1276
    %v2387 = vsel %vm1299, %v1102, %v1280
    %v2388 = vsel %vm1299, %v1103, %v1284
    %v2389 = vsel %vm1299, %v1104, %v1288
    %v2390 = vsel %vm1299, %v1105, %v1292
    %v2391 = vsel %vm1299, %v1106, %v1296
    %v2392 = vsel %vm1524, %v1300, %v1397
    %v2393 = vsel %vm1524, %v1301, %v1401
    %v2394 = vsel %vm1524, %v1302, %v1405
    %v2395 = vsel %vm1524, %v1303, %v1409
    %v2396 = vsel %vm1524, %v1304, %v1413
    %v2397 = vsel %vm1524, %v1305, %v1417
    %v2398 = vsel %vm1524, %v1306, %v1421
    %v2399 = vsel %vm1524, %v1307, %v1425
    %v2400 = vsel %vm1524, %v1308, %v1429
    %v2401 = vsel %vm1524, %v1309, %v1433
    %v2402 = vsel %vm1524, %v1310, %v1437
    %v2403 = vsel %vm1524, %v1311, %v1441
    %v2404 = vsel %vm1524, %v1312, %v1445
    %v2405 = vsel %vm1524, %v1313, %v1449
    %v2406 = vsel %vm1524, %v1314, %v1453
    %v2407 = vsel %vm1524, %v1315, %v1457
    %v2408 = vsel %vm1524, %v1316, %v1461
    %v2409 = vsel %vm1524, %v1317, %v1465
    %v2410 = vsel %vm1524, %v1318, %v1469
    %v2411 = vsel %vm1524, %v1319, %v1473
    %v2412 = vsel %vm1524, %v1320, %v1477
    %v2413 = vsel %vm1524, %v1321, %v1481
    %v2414 = vsel %vm1524, %v1322, %v1485
    %v2415 = vsel %vm1524, %v1323, %v1489
    %v2416 = vsel %vm1524, %v1324, %v1493
    %v2417 = vsel %vm1524, %v1325, %v1497
    %v2418 = vsel %vm1524, %v1326, %v1501
    %v2419 = vsel %vm1524, %v1327, %v1505
    %v2420 = vsel %vm1524, %v1328, %v1509
    %v2421 = vsel %vm1524, %v1329, %v1513
    %v2422 = vsel %vm1524, %v1330, %v1517
    %v2423 = vsel %vm1524, %v1331, %v1521
    %v2424 = vsel %vm1749, %v1525, %v1622
    %v2425 = vsel %vm1749, %v1526, %v1626
    %v2426 = vsel %vm1749, %v1527, %v1630
    %v2427 = vsel %vm1749, %v1528, %v1634
    %v2428 = vsel %vm1749, %v1529, %v1638
    %v2429 = vsel %vm1749, %v1530, %v1642
    %v2430 = vsel %vm1749, %v1531, %v1646
    %v2431 = vsel %vm1749, %v1532, %v1650
    %v2432 = vsel %vm1749, %v1533, %v1654
    %v2433 = vsel %vm1749, %v1534, %v1658
    %v2434 = vsel %vm1749, %v1535, %v1662
    %v2435 = vsel %vm1749, %v1536, %v1666
    %v2436 = vsel %vm1749, %v1537, %v1670
    %v2437 = vsel %vm1749, %v1538, %v1674
    %v2438 = vsel %vm1749, %v1539, %v1678
    %v2439 = vsel %vm1749, %v1540, %v1682
    %v2440 = vsel %vm1749, %v1541, %v1686
    %v2441 = vsel %vm1749, %v1542, %v1690
    %v2442 = vsel %vm1749, %v1543, %v1694
    %v2443 = vsel %vm1749, %v1544, %v1698
    %v2444 = vsel %vm1749, %v1545, %v1702
    %v2445 = vsel %vm1749, %v1546, %v1706
    %v2446 = vsel %vm1749, %v1547, %v1710
    %v2447 = vsel %vm1749, %v1548, %v1714
    %v2448 = vsel %vm1749, %v1549, %v1718
    %v2449 = vsel %vm1749, %v1550, %v1722
    %v2450 = vsel %vm1749, %v1551, %v1726
    %v2451 = vsel %vm1749, %v1552, %v1730
    %v2452 = vsel %vm1749, %v1553, %v1734
    %v2453 = vsel %vm1749, %v1554, %v1738
    %v2454 = vsel %vm1749, %v1555, %v1742
    %v2455 = vsel %vm1749, %v1556, %v1746
    %v2456 = vsel %vm1974, %v1750, %v1847
    %v2457 = vsel %vm1974, %v1751, %v1851
    %v2458 = vsel %vm1974, %v1752, %v1855
    %v2459 = vsel %vm1974, %v1753, %v1859
    %v2460 = vsel %vm1974, %v1754, %v1863
    %v2461 = vsel %vm1974, %v1755, %v1867
    %v2462 = vsel %vm1974, %v1756, %v1871
    %v2463 = vsel %vm1974, %v1757, %v1875
    %v2464 = vsel %vm1974, %v1758, %v1879
    %v2465 = vsel %vm1974, %v1759, %v1883
    %v2466 = vsel %vm1974, %v1760, %v1887
    %v2467 = vsel %vm1974, %v1761, %v1891
    %v2468 = vsel %vm1974, %v1762, %v1895
    %v2469 = vsel %vm1974, %v1763, %v1899
    %v2470 = vsel %vm1974, %v1764, %v1903
    %v2471 = vsel %vm1974, %v1765, %v1907
    %v2472 = vsel %vm1974, %v1766, %v1911
    %v2473 = vsel %vm1974, %v1767, %v1915
    %v2474 = vsel %vm1974, %v1768, %v1919
    %v2475 = vsel %vm1974, %v1769, %v1923
    %v2476 = vsel %vm1974, %v1770, %v1927
    %v2477 = vsel %vm1974, %v1771, %v1931
    %v2478 = vsel %vm1974, %v1772, %v1935
    %v2479 = vsel %vm1974, %v1773, %v1939
    %v2480 = vsel %vm1974, %v1774, %v1943
    %v2481 = vsel %vm1974, %v1775, %v1947
    %v2482 = vsel %vm1974, %v1776, %v1951
    %v2483 = vsel %vm1974, %v1777, %v1955
    %v2484 = vsel %vm1974, %v1778, %v1959
    %v2485 = vsel %vm1974, %v1779, %v1963
    %v2486 = vsel %vm1974, %v1780, %v1967
    %v2487 = vsel %vm1974, %v1781, %v1971
    %v2488 = vsel %vm2199, %v1975, %v2072
    %v2489 = vsel %vm2199, %v1976, %v2076
    %v2490 = vsel %vm2199, %v1977, %v2080
    %v2491 = vsel %vm2199, %v1978, %v2084
    %v2492 = vsel %vm2199, %v1979, %v2088
    %v2493 = vsel %vm2199, %v1980, %v2092
    %v2494 = vsel %vm2199, %v1981, %v2096
    %v2495 = vsel %vm2199, %v1982, %v2100
    %v2496 = vsel %vm2199, %v1983, %v2104
    %v2497 = vsel %vm2199, %v1984, %v2108
    %v2498 = vsel %vm2199, %v1985, %v2112
    %v2499 = vsel %vm2199, %v1986, %v2116
    %v2500 = vsel %vm2199, %v1987, %v2120
    %v2501 = vsel %vm2199, %v1988, %v2124
    %v2502 = vsel %vm2199, %v1989, %v2128
    %v2503 = vsel %vm2199, %v1990, %v2132
    %v2504 = vsel %vm2199, %v1991, %v2136
    %v2505 = vsel %vm2199, %v1992, %v2140
    %v2506 = vsel %vm2199, %v1993, %v2144
    %v2507 = vsel %vm2199, %v1994, %v2148
    %v2508 = vsel %vm2199, %v1995, %v2152
    %v2509 = vsel %vm2199, %v1996, %v2156
    %v2510 = vsel %vm2199, %v1997, %v2160
    %v2511 = vsel %vm2199, %v1998, %v2164
    %v2512 = vsel %vm2199, %v1999, %v2168
    %v2513 = vsel %vm2199, %v2000, %v2172
    %v2514 = vsel %vm2199, %v2001, %v2176
    %v2515 = vsel %vm2199, %v2002, %v2180
    %v2516 = vsel %vm2199, %v2003, %v2184
    %v2517 = vsel %vm2199, %v2004, %v2188
    %v2518 = vsel %vm2199, %v2005, %v2192
    %v2519 = vsel %vm2199, %v2006, %v2196
    %v2520 = vld [vmem:[%s3] sm:$0xff]
    %v2521 = vld [vmem:[%s3 + $0x8] sm:$0xff]
    %v2522 = vld [vmem:[%s3 + $0x10] sm:$0xff]
    %v2523 = vld [vmem:[%s3 + $0x18] sm:$0xff]
    %v2524 = vld [vmem:[%s3 + $0x20] sm:$0xff]
    %v2525 = vld [vmem:[%s3 + $0x28] sm:$0xff]
    %v2526 = vld [vmem:[%s3 + $0x30] sm:$0xff]
    %v2527 = vld [vmem:[%s3 + $0x38] sm:$0xff]
    %v2528 = vld [vmem:[%s3 + $0x40] sm:$0xff]
    %v2529 = vld [vmem:[%s3 + $0x48] sm:$0xff]
    %v2530 = vld [vmem:[%s3 + $0x50] sm:$0xff]
    %v2531 = vld [vmem:[%s3 + $0x58] sm:$0xff]
    %v2532 = vld [vmem:[%s3 + $0x60] sm:$0xff]
    %v2533 = vld [vmem:[%s3 + $0x68] sm:$0xff]
    %v2534 = vld [vmem:[%s3 + $0x70] sm:$0xff]
    %v2535 = vld [vmem:[%s3 + $0x78] sm:$0xff]
    %v2536 = vld [vmem:[%s3 + $0x80] sm:$0xff]
    %v2537 = vld [vmem:[%s3 + $0x88] sm:$0xff]
    %v2538 = vld [vmem:[%s3 + $0x90] sm:$0xff]
    %v2539 = vld [vmem:[%s3 + $0x98] sm:$0xff]
    %v2540 = vld [vmem:[%s3 + $0xa0] sm:$0xff]
    %v2541 = vld [vmem:[%s3 + $0xa8] sm:$0xff]
    %v2542 = vld [vmem:[%s3 + $0xb0] sm:$0xff]
    %v2543 = vld [vmem:[%s3 + $0xb8] sm:$0xff]
    %v2544 = vld [vmem:[%s3 + $0xc0] sm:$0xff]
    %v2545 = vld [vmem:[%s3 + $0xc8] sm:$0xff]
    %v2546 = vld [vmem:[%s3 + $0xd0] sm:$0xff]
    %v2547 = vld [vmem:[%s3 + $0xd8] sm:$0xff]
    %v2548 = vld [vmem:[%s3 + $0xe0] sm:$0xff]
    %v2549 = vld [vmem:[%s3 + $0xe8] sm:$0xff]
    %v2550 = vld [vmem:[%s3 + $0xf0] sm:$0xff]
    %v2551 = vld [vmem:[%s3 + $0xf8] sm:$0xff]
    %v2552 = vld [vmem:[%s3 + $0x100] sm:$0xff]
    %v2553 = vld [vmem:[%s3 + $0x108] sm:$0xff]
    %v2554 = vld [vmem:[%s3 + $0x110] sm:$0xff]
    %v2555 = vld [vmem:[%s3 + $0x118] sm:$0xff]
    %v2556 = vld [vmem:[%s3 + $0x120] sm:$0xff]
    %v2557 = vld [vmem:[%s3 + $0x128] sm:$0xff]
    %v2558 = vld [vmem:[%s3 + $0x130] sm:$0xff]
    %v2559 = vld [vmem:[%s3 + $0x138] sm:$0xff]
    %v2560 = vld [vmem:[%s3 + $0x140] sm:$0xff]
    %v2561 = vld [vmem:[%s3 + $0x148] sm:$0xff]
    %v2562 = vld [vmem:[%s3 + $0x150] sm:$0xff]
    %v2563 = vld [vmem:[%s3 + $0x158] sm:$0xff]
    %v2564 = vld [vmem:[%s3 + $0x160] sm:$0xff]
    %v2565 = vld [vmem:[%s3 + $0x168] sm:$0xff]
    %v2566 = vld [vmem:[%s3 + $0x170] sm:$0xff]
    %v2567 = vld [vmem:[%s3 + $0x178] sm:$0xff]
    %v2568 = vld [vmem:[%s3 + $0x180] sm:$0xff]
    %v2569 = vld [vmem:[%s3 + $0x188] sm:$0xff]
    %v2570 = vld [vmem:[%s3 + $0x190] sm:$0xff]
    %v2571 = vld [vmem:[%s3 + $0x198] sm:$0xff]
    %v2572 = vld [vmem:[%s3 + $0x1a0] sm:$0xff]
    %v2573 = vld [vmem:[%s3 + $0x1a8] sm:$0xff]
    %v2574 = vld [vmem:[%s3 + $0x1b0] sm:$0xff]
    %v2575 = vld [vmem:[%s3 + $0x1b8] sm:$0xff]
    %v2576 = vld [vmem:[%s3 + $0x1c0] sm:$0xff]
    %v2577 = vld [vmem:[%s3 + $0x1c8] sm:$0xff]
    %v2578 = vld [vmem:[%s3 + $0x1d0] sm:$0xff]
    %v2579 = vld [vmem:[%s3 + $0x1d8] sm:$0xff]
    %v2580 = vld [vmem:[%s3 + $0x1e0] sm:$0xff]
    %v2581 = vld [vmem:[%s3 + $0x1e8] sm:$0xff]
    %v2582 = vld [vmem:[%s3 + $0x1f0] sm:$0xff]
    %v2583 = vld [vmem:[%s3 + $0x1f8] sm:$0xff]
    %v2584 = vld [vmem:[%s3 + $0x200] sm:$0xff]
    %v2585 = vld [vmem:[%s3 + $0x208] sm:$0xff]
    %v2586 = vld [vmem:[%s3 + $0x210] sm:$0xff]
    %v2587 = vld [vmem:[%s3 + $0x218] sm:$0xff]
    %v2588 = vld [vmem:[%s3 + $0x220] sm:$0xff]
    %v2589 = vld [vmem:[%s3 + $0x228] sm:$0xff]
    %v2590 = vld [vmem:[%s3 + $0x230] sm:$0xff]
    %v2591 = vld [vmem:[%s3 + $0x238] sm:$0xff]
    %v2592 = vld [vmem:[%s3 + $0x240] sm:$0xff]
    %v2593 = vld [vmem:[%s3 + $0x248] sm:$0xff]
    %v2594 = vld [vmem:[%s3 + $0x250] sm:$0xff]
    %v2595 = vld [vmem:[%s3 + $0x258] sm:$0xff]
    %v2596 = vld [vmem:[%s3 + $0x260] sm:$0xff]
    %v2597 = vld [vmem:[%s3 + $0x268] sm:$0xff]
    %v2598 = vld [vmem:[%s3 + $0x270] sm:$0xff]
    %v2599 = vld [vmem:[%s3 + $0x278] sm:$0xff]
    %v2600 = vld [vmem:[%s3 + $0x280] sm:$0xff]
    %v2601 = vld [vmem:[%s3 + $0x288] sm:$0xff]
    %v2602 = vld [vmem:[%s3 + $0x290] sm:$0xff]
    %v2603 = vld [vmem:[%s3 + $0x298] sm:$0xff]
    %v2604 = vld [vmem:[%s3 + $0x2a0] sm:$0xff]
    %v2605 = vld [vmem:[%s3 + $0x2a8] sm:$0xff]
    %v2606 = vld [vmem:[%s3 + $0x2b0] sm:$0xff]
    %v2607 = vld [vmem:[%s3 + $0x2b8] sm:$0xff]
    %v2608 = vld [vmem:[%s3 + $0x2c0] sm:$0xff]
    %v2609 = vld [vmem:[%s3 + $0x2c8] sm:$0xff]
    %v2610 = vld [vmem:[%s3 + $0x2d0] sm:$0xff]
    %v2611 = vld [vmem:[%s3 + $0x2d8] sm:$0xff]
    %v2612 = vld [vmem:[%s3 + $0x2e0] sm:$0xff]
    %v2613 = vld [vmem:[%s3 + $0x2e8] sm:$0xff]
    %v2614 = vld [vmem:[%s3 + $0x2f0] sm:$0xff]
    %v2615 = vld [vmem:[%s3 + $0x2f8] sm:$0xff]
    %v2616 = vld [vmem:[%s3 + $0x300] sm:$0xff]
    %v2617 = vld [vmem:[%s3 + $0x308] sm:$0xff]
    %v2618 = vld [vmem:[%s3 + $0x310] sm:$0xff]
    %v2619 = vld [vmem:[%s3 + $0x318] sm:$0xff]
    %v2620 = vld [vmem:[%s3 + $0x320] sm:$0xff]
    %v2621 = vld [vmem:[%s3 + $0x328] sm:$0xff]
    %v2622 = vld [vmem:[%s3 + $0x330] sm:$0xff]
    %v2623 = vld [vmem:[%s3 + $0x338] sm:$0xff]
    %v2624 = vld [vmem:[%s3 + $0x340] sm:$0xff]
    %v2625 = vld [vmem:[%s3 + $0x348] sm:$0xff]
    %v2626 = vld [vmem:[%s3 + $0x350] sm:$0xff]
    %v2627 = vld [vmem:[%s3 + $0x358] sm:$0xff]
    %v2628 = vld [vmem:[%s3 + $0x360] sm:$0xff]
    %v2629 = vld [vmem:[%s3 + $0x368] sm:$0xff]
    %v2630 = vld [vmem:[%s3 + $0x370] sm:$0xff]
    %v2631 = vld [vmem:[%s3 + $0x378] sm:$0xff]
    %v2632 = vld [vmem:[%s3 + $0x380] sm:$0xff]
    %v2633 = vld [vmem:[%s3 + $0x388] sm:$0xff]
    %v2634 = vld [vmem:[%s3 + $0x390] sm:$0xff]
    %v2635 = vld [vmem:[%s3 + $0x398] sm:$0xff]
    %v2636 = vld [vmem:[%s3 + $0x3a0] sm:$0xff]
    %v2637 = vld [vmem:[%s3 + $0x3a8] sm:$0xff]
    %v2638 = vld [vmem:[%s3 + $0x3b0] sm:$0xff]
    %v2639 = vld [vmem:[%s3 + $0x3b8] sm:$0xff]
    %v2640 = vld [vmem:[%s3 + $0x3c0] sm:$0xff]
    %v2641 = vld [vmem:[%s3 + $0x3c8] sm:$0xff]
    %v2642 = vld [vmem:[%s3 + $0x3d0] sm:$0xff]
    %v2643 = vld [vmem:[%s3 + $0x3d8] sm:$0xff]
    %v2644 = vld [vmem:[%s3 + $0x3e0] sm:$0xff]
    %v2645 = vld [vmem:[%s3 + $0x3e8] sm:$0xff]
    %v2646 = vld [vmem:[%s3 + $0x3f0] sm:$0xff]
    %v2647 = vld [vmem:[%s3 + $0x3f8] sm:$0xff]
    %v2648 = vld [vmem:[%s3 + $0x400] sm:$0xff]
    %v2649 = vld [vmem:[%s3 + $0x408] sm:$0xff]
    %v2650 = vld [vmem:[%s3 + $0x410] sm:$0xff]
    %v2651 = vld [vmem:[%s3 + $0x418] sm:$0xff]
    %v2652 = vld [vmem:[%s3 + $0x420] sm:$0xff]
    %v2653 = vld [vmem:[%s3 + $0x428] sm:$0xff]
    %v2654 = vld [vmem:[%s3 + $0x430] sm:$0xff]
    %v2655 = vld [vmem:[%s3 + $0x438] sm:$0xff]
    %v2656 = vld [vmem:[%s3 + $0x440] sm:$0xff]
    %v2657 = vld [vmem:[%s3 + $0x448] sm:$0xff]
    %v2658 = vld [vmem:[%s3 + $0x450] sm:$0xff]
    %v2659 = vld [vmem:[%s3 + $0x458] sm:$0xff]
    %v2660 = vld [vmem:[%s3 + $0x460] sm:$0xff]
    %v2661 = vld [vmem:[%s3 + $0x468] sm:$0xff]
    %v2662 = vld [vmem:[%s3 + $0x470] sm:$0xff]
    %v2663 = vld [vmem:[%s3 + $0x478] sm:$0xff]
    %v2664 = vld [vmem:[%s3 + $0x480] sm:$0xff]
    %v2665 = vld [vmem:[%s3 + $0x488] sm:$0xff]
    %v2666 = vld [vmem:[%s3 + $0x490] sm:$0xff]
    %v2667 = vld [vmem:[%s3 + $0x498] sm:$0xff]
    %v2668 = vld [vmem:[%s3 + $0x4a0] sm:$0xff]
    %v2669 = vld [vmem:[%s3 + $0x4a8] sm:$0xff]
    %v2670 = vld [vmem:[%s3 + $0x4b0] sm:$0xff]
    %v2671 = vld [vmem:[%s3 + $0x4b8] sm:$0xff]
    %v2672 = vld [vmem:[%s3 + $0x4c0] sm:$0xff]
    %v2673 = vld [vmem:[%s3 + $0x4c8] sm:$0xff]
    %v2674 = vld [vmem:[%s3 + $0x4d0] sm:$0xff]
    %v2675 = vld [vmem:[%s3 + $0x4d8] sm:$0xff]
    %v2676 = vld [vmem:[%s3 + $0x4e0] sm:$0xff]
    %v2677 = vld [vmem:[%s3 + $0x4e8] sm:$0xff]
    %v2678 = vld [vmem:[%s3 + $0x4f0] sm:$0xff]
    %v2679 = vld [vmem:[%s3 + $0x4f8] sm:$0xff]
    %v2680 = vld [vmem:[%s3 + $0x500] sm:$0xff]
    %v2681 = vld [vmem:[%s3 + $0x508] sm:$0xff]
    %v2682 = vld [vmem:[%s3 + $0x510] sm:$0xff]
    %v2683 = vld [vmem:[%s3 + $0x518] sm:$0xff]
    %v2684 = vld [vmem:[%s3 + $0x520] sm:$0xff]
    %v2685 = vld [vmem:[%s3 + $0x528] sm:$0xff]
    %v2686 = vld [vmem:[%s3 + $0x530] sm:$0xff]
    %v2687 = vld [vmem:[%s3 + $0x538] sm:$0xff]
    %v2688 = vld [vmem:[%s3 + $0x540] sm:$0xff]
    %v2689 = vld [vmem:[%s3 + $0x548] sm:$0xff]
    %v2690 = vld [vmem:[%s3 + $0x550] sm:$0xff]
    %v2691 = vld [vmem:[%s3 + $0x558] sm:$0xff]
    %v2692 = vld [vmem:[%s3 + $0x560] sm:$0xff]
    %v2693 = vld [vmem:[%s3 + $0x568] sm:$0xff]
    %v2694 = vld [vmem:[%s3 + $0x570] sm:$0xff]
    %v2695 = vld [vmem:[%s3 + $0x578] sm:$0xff]
    %v2696 = vld [vmem:[%s3 + $0x580] sm:$0xff]
    %v2697 = vld [vmem:[%s3 + $0x588] sm:$0xff]
    %v2698 = vld [vmem:[%s3 + $0x590] sm:$0xff]
    %v2699 = vld [vmem:[%s3 + $0x598] sm:$0xff]
    %v2700 = vld [vmem:[%s3 + $0x5a0] sm:$0xff]
    %v2701 = vld [vmem:[%s3 + $0x5a8] sm:$0xff]
    %v2702 = vld [vmem:[%s3 + $0x5b0] sm:$0xff]
    %v2703 = vld [vmem:[%s3 + $0x5b8] sm:$0xff]
    %v2704 = vld [vmem:[%s3 + $0x5c0] sm:$0xff]
    %v2705 = vld [vmem:[%s3 + $0x5c8] sm:$0xff]
    %v2706 = vld [vmem:[%s3 + $0x5d0] sm:$0xff]
    %v2707 = vld [vmem:[%s3 + $0x5d8] sm:$0xff]
    %v2708 = vld [vmem:[%s3 + $0x5e0] sm:$0xff]
    %v2709 = vld [vmem:[%s3 + $0x5e8] sm:$0xff]
    %v2710 = vld [vmem:[%s3 + $0x5f0] sm:$0xff]
    %v2711 = vld [vmem:[%s3 + $0x5f8] sm:$0xff]
    %v2712 = vld [vmem:[%s3 + $0x600] sm:$0xff]
    %v2713 = vld [vmem:[%s3 + $0x608] sm:$0xff]
    %v2714 = vld [vmem:[%s3 + $0x610] sm:$0xff]
    %v2715 = vld [vmem:[%s3 + $0x618] sm:$0xff]
    %v2716 = vld [vmem:[%s3 + $0x620] sm:$0xff]
    %v2717 = vld [vmem:[%s3 + $0x628] sm:$0xff]
    %v2718 = vld [vmem:[%s3 + $0x630] sm:$0xff]
    %v2719 = vld [vmem:[%s3 + $0x638] sm:$0xff]
    %v2720 = vld [vmem:[%s3 + $0x640] sm:$0xff]
    %v2721 = vld [vmem:[%s3 + $0x648] sm:$0xff]
    %v2722 = vld [vmem:[%s3 + $0x650] sm:$0xff]
    %v2723 = vld [vmem:[%s3 + $0x658] sm:$0xff]
    %v2724 = vld [vmem:[%s3 + $0x660] sm:$0xff]
    %v2725 = vld [vmem:[%s3 + $0x668] sm:$0xff]
    %v2726 = vld [vmem:[%s3 + $0x670] sm:$0xff]
    %v2727 = vld [vmem:[%s3 + $0x678] sm:$0xff]
    %v2728 = vld [vmem:[%s3 + $0x680] sm:$0xff]
    %v2729 = vld [vmem:[%s3 + $0x688] sm:$0xff]
    %v2730 = vld [vmem:[%s3 + $0x690] sm:$0xff]
    %v2731 = vld [vmem:[%s3 + $0x698] sm:$0xff]
    %v2732 = vld [vmem:[%s3 + $0x6a0] sm:$0xff]
    %v2733 = vld [vmem:[%s3 + $0x6a8] sm:$0xff]
    %v2734 = vld [vmem:[%s3 + $0x6b0] sm:$0xff]
    %v2735 = vld [vmem:[%s3 + $0x6b8] sm:$0xff]
    %v2736 = vld [vmem:[%s3 + $0x6c0] sm:$0xff]
    %v2737 = vld [vmem:[%s3 + $0x6c8] sm:$0xff]
    %v2738 = vld [vmem:[%s3 + $0x6d0] sm:$0xff]
    %v2739 = vld [vmem:[%s3 + $0x6d8] sm:$0xff]
    %v2740 = vld [vmem:[%s3 + $0x6e0] sm:$0xff]
    %v2741 = vld [vmem:[%s3 + $0x6e8] sm:$0xff]
    %v2742 = vld [vmem:[%s3 + $0x6f0] sm:$0xff]
    %v2743 = vld [vmem:[%s3 + $0x6f8] sm:$0xff]
    %v2744 = vld [vmem:[%s3 + $0x700] sm:$0xff]
    %v2745 = vld [vmem:[%s3 + $0x708] sm:$0xff]
    %v2746 = vld [vmem:[%s3 + $0x710] sm:$0xff]
    %v2747 = vld [vmem:[%s3 + $0x718] sm:$0xff]
    %v2748 = vld [vmem:[%s3 + $0x720] sm:$0xff]
    %v2749 = vld [vmem:[%s3 + $0x728] sm:$0xff]
    %v2750 = vld [vmem:[%s3 + $0x730] sm:$0xff]
    %v2751 = vld [vmem:[%s3 + $0x738] sm:$0xff]
    %v2752 = vld [vmem:[%s3 + $0x740] sm:$0xff]
    %v2753 = vld [vmem:[%s3 + $0x748] sm:$0xff]
    %v2754 = vld [vmem:[%s3 + $0x750] sm:$0xff]
    %v2755 = vld [vmem:[%s3 + $0x758] sm:$0xff]
    %v2756 = vld [vmem:[%s3 + $0x760] sm:$0xff]
    %v2757 = vld [vmem:[%s3 + $0x768] sm:$0xff]
    %v2758 = vld [vmem:[%s3 + $0x770] sm:$0xff]
    %v2759 = vld [vmem:[%s3 + $0x778] sm:$0xff]
    %v2760 = vld [vmem:[%s3 + $0x780] sm:$0xff]
    %v2761 = vld [vmem:[%s3 + $0x788] sm:$0xff]
    %v2762 = vld [vmem:[%s3 + $0x790] sm:$0xff]
    %v2763 = vld [vmem:[%s3 + $0x798] sm:$0xff]
    %v2764 = vld [vmem:[%s3 + $0x7a0] sm:$0xff]
    %v2765 = vld [vmem:[%s3 + $0x7a8] sm:$0xff]
    %v2766 = vld [vmem:[%s3 + $0x7b0] sm:$0xff]
    %v2767 = vld [vmem:[%s3 + $0x7b8] sm:$0xff]
    %v2768 = vld [vmem:[%s3 + $0x7c0] sm:$0xff]
    %v2769 = vld [vmem:[%s3 + $0x7c8] sm:$0xff]
    %v2770 = vld [vmem:[%s3 + $0x7d0] sm:$0xff]
    %v2771 = vld [vmem:[%s3 + $0x7d8] sm:$0xff]
    %v2772 = vld [vmem:[%s3 + $0x7e0] sm:$0xff]
    %v2773 = vld [vmem:[%s3 + $0x7e8] sm:$0xff]
    %v2774 = vld [vmem:[%s3 + $0x7f0] sm:$0xff]
    %v2775 = vld [vmem:[%s3 + $0x7f8] sm:$0xff]
    %v2776 = vld [vmem:[%s3 + $0x800] sm:$0xff]
    %v2777 = vld [vmem:[%s3 + $0x808] sm:$0xff]
    %v2778 = vld [vmem:[%s3 + $0x810] sm:$0xff]
    %v2779 = vld [vmem:[%s3 + $0x818] sm:$0xff]
    %v2780 = vld [vmem:[%s3 + $0x820] sm:$0xff]
    %v2781 = vld [vmem:[%s3 + $0x828] sm:$0xff]
    %v2782 = vld [vmem:[%s3 + $0x830] sm:$0xff]
    %v2783 = vld [vmem:[%s3 + $0x838] sm:$0xff]
    %v2784 = vld [vmem:[%s3 + $0x840] sm:$0xff]
    %v2785 = vld [vmem:[%s3 + $0x848] sm:$0xff]
    %v2786 = vld [vmem:[%s3 + $0x850] sm:$0xff]
    %v2787 = vld [vmem:[%s3 + $0x858] sm:$0xff]
    %v2788 = vld [vmem:[%s3 + $0x860] sm:$0xff]
    %v2789 = vld [vmem:[%s3 + $0x868] sm:$0xff]
    %v2790 = vld [vmem:[%s3 + $0x870] sm:$0xff]
    %v2791 = vld [vmem:[%s3 + $0x878] sm:$0xff]
    %v2792 = vld [vmem:[%s3 + $0x880] sm:$0xff]
    %v2793 = vld [vmem:[%s3 + $0x888] sm:$0xff]
    %v2794 = vld [vmem:[%s3 + $0x890] sm:$0xff]
    %v2795 = vld [vmem:[%s3 + $0x898] sm:$0xff]
    %v2796 = vld [vmem:[%s3 + $0x8a0] sm:$0xff]
    %v2797 = vld [vmem:[%s3 + $0x8a8] sm:$0xff]
    %v2798 = vld [vmem:[%s3 + $0x8b0] sm:$0xff]
    %v2799 = vld [vmem:[%s3 + $0x8b8] sm:$0xff]
    %v2800 = vld [vmem:[%s3 + $0x8c0] sm:$0xff]
    %v2801 = vld [vmem:[%s3 + $0x8c8] sm:$0xff]
    %v2802 = vld [vmem:[%s3 + $0x8d0] sm:$0xff]
    %v2803 = vld [vmem:[%s3 + $0x8d8] sm:$0xff]
    %v2804 = vld [vmem:[%s3 + $0x8e0] sm:$0xff]
    %v2805 = vld [vmem:[%s3 + $0x8e8] sm:$0xff]
    %v2806 = vld [vmem:[%s3 + $0x8f0] sm:$0xff]
    %v2807 = vld [vmem:[%s3 + $0x8f8] sm:$0xff]
    %v2808 = vld [vmem:[%s3 + $0x900] sm:$0xff]
    %v2809 = vld [vmem:[%s3 + $0x908] sm:$0xff]
    %v2810 = vld [vmem:[%s3 + $0x910] sm:$0xff]
    %v2811 = vld [vmem:[%s3 + $0x918] sm:$0xff]
    %v2812 = vld [vmem:[%s3 + $0x920] sm:$0xff]
    %v2813 = vld [vmem:[%s3 + $0x928] sm:$0xff]
    %v2814 = vld [vmem:[%s3 + $0x930] sm:$0xff]
    %v2815 = vld [vmem:[%s3 + $0x938] sm:$0xff]
    %v2816 = vld [vmem:[%s3 + $0x940] sm:$0xff]
    %v2817 = vld [vmem:[%s3 + $0x948] sm:$0xff]
    %v2818 = vld [vmem:[%s3 + $0x950] sm:$0xff]
    %v2819 = vld [vmem:[%s3 + $0x958] sm:$0xff]
    %v2820 = vld [vmem:[%s3 + $0x960] sm:$0xff]
    %v2821 = vld [vmem:[%s3 + $0x968] sm:$0xff]
    %v2822 = vld [vmem:[%s3 + $0x970] sm:$0xff]
    %v2823 = vld [vmem:[%s3 + $0x978] sm:$0xff]
    %v2824 = vld [vmem:[%s3 + $0x980] sm:$0xff]
    %v2825 = vld [vmem:[%s3 + $0x988] sm:$0xff]
    %v2826 = vld [vmem:[%s3 + $0x990] sm:$0xff]
    %v2827 = vld [vmem:[%s3 + $0x998] sm:$0xff]
    %v2828 = vld [vmem:[%s3 + $0x9a0] sm:$0xff]
    %v2829 = vld [vmem:[%s3 + $0x9a8] sm:$0xff]
    %v2830 = vld [vmem:[%s3 + $0x9b0] sm:$0xff]
    %v2831 = vld [vmem:[%s3 + $0x9b8] sm:$0xff]
    %v2832 = vld [vmem:[%s3 + $0x9c0] sm:$0xff]
    %v2833 = vld [vmem:[%s3 + $0x9c8] sm:$0xff]
    %v2834 = vld [vmem:[%s3 + $0x9d0] sm:$0xff]
    %v2835 = vld [vmem:[%s3 + $0x9d8] sm:$0xff]
    %v2836 = vld [vmem:[%s3 + $0x9e0] sm:$0xff]
    %v2837 = vld [vmem:[%s3 + $0x9e8] sm:$0xff]
    %v2838 = vld [vmem:[%s3 + $0x9f0] sm:$0xff]
    %v2839 = vld [vmem:[%s3 + $0x9f8] sm:$0xff]
    %v2840 = vld [vmem:[%s3 + $0xa00] sm:$0xff]
    %v2841 = vld [vmem:[%s3 + $0xa08] sm:$0xff]
    %v2842 = vld [vmem:[%s3 + $0xa10] sm:$0xff]
    %v2843 = vld [vmem:[%s3 + $0xa18] sm:$0xff]
    %v2844 = vld [vmem:[%s3 + $0xa20] sm:$0xff]
    %v2845 = vld [vmem:[%s3 + $0xa28] sm:$0xff]
    %v2846 = vld [vmem:[%s3 + $0xa30] sm:$0xff]
    %v2847 = vld [vmem:[%s3 + $0xa38] sm:$0xff]
    %v2848 = vld [vmem:[%s3 + $0xa40] sm:$0xff]
    %v2849 = vld [vmem:[%s3 + $0xa48] sm:$0xff]
    %v2850 = vld [vmem:[%s3 + $0xa50] sm:$0xff]
    %v2851 = vld [vmem:[%s3 + $0xa58] sm:$0xff]
    %v2852 = vld [vmem:[%s3 + $0xa60] sm:$0xff]
    %v2853 = vld [vmem:[%s3 + $0xa68] sm:$0xff]
    %v2854 = vld [vmem:[%s3 + $0xa70] sm:$0xff]
    %v2855 = vld [vmem:[%s3 + $0xa78] sm:$0xff]
    %v2856 = vld [vmem:[%s3 + $0xa80] sm:$0xff]
    %v2857 = vld [vmem:[%s3 + $0xa88] sm:$0xff]
    %v2858 = vld [vmem:[%s3 + $0xa90] sm:$0xff]
    %v2859 = vld [vmem:[%s3 + $0xa98] sm:$0xff]
    %v2860 = vld [vmem:[%s3 + $0xaa0] sm:$0xff]
    %v2861 = vld [vmem:[%s3 + $0xaa8] sm:$0xff]
    %v2862 = vld [vmem:[%s3 + $0xab0] sm:$0xff]
    %v2863 = vld [vmem:[%s3 + $0xab8] sm:$0xff]
    %v2864 = vld [vmem:[%s3 + $0xac0] sm:$0xff]
    %v2865 = vld [vmem:[%s3 + $0xac8] sm:$0xff]
    %v2866 = vld [vmem:[%s3 + $0xad0] sm:$0xff]
    %v2867 = vld [vmem:[%s3 + $0xad8] sm:$0xff]
    %v2868 = vld [vmem:[%s3 + $0xae0] sm:$0xff]
    %v2869 = vld [vmem:[%s3 + $0xae8] sm:$0xff]
    %v2870 = vld [vmem:[%s3 + $0xaf0] sm:$0xff]
    %v2871 = vld [vmem:[%s3 + $0xaf8] sm:$0xff]
    %v2872 = vld [vmem:[%s3 + $0xb00] sm:$0xff]
    %v2873 = vld [vmem:[%s3 + $0xb08] sm:$0xff]
    %v2874 = vld [vmem:[%s3 + $0xb10] sm:$0xff]
    %v2875 = vld [vmem:[%s3 + $0xb18] sm:$0xff]
    %v2876 = vld [vmem:[%s3 + $0xb20] sm:$0xff]
    %v2877 = vld [vmem:[%s3 + $0xb28] sm:$0xff]
    %v2878 = vld [vmem:[%s3 + $0xb30] sm:$0xff]
    %v2879 = vld [vmem:[%s3 + $0xb38] sm:$0xff]
    %v2880 = vld [vmem:[%s3 + $0xb40] sm:$0xff]
    %v2881 = vld [vmem:[%s3 + $0xb48] sm:$0xff]
    %v2882 = vld [vmem:[%s3 + $0xb50] sm:$0xff]
    %v2883 = vld [vmem:[%s3 + $0xb58] sm:$0xff]
    %v2884 = vld [vmem:[%s3 + $0xb60] sm:$0xff]
    %v2885 = vld [vmem:[%s3 + $0xb68] sm:$0xff]
    %v2886 = vld [vmem:[%s3 + $0xb70] sm:$0xff]
    %v2887 = vld [vmem:[%s3 + $0xb78] sm:$0xff]
    %v2888 = vld [vmem:[%s3 + $0xb80] sm:$0xff]
    %v2889 = vld [vmem:[%s3 + $0xb88] sm:$0xff]
    %v2890 = vld [vmem:[%s3 + $0xb90] sm:$0xff]
    %v2891 = vld [vmem:[%s3 + $0xb98] sm:$0xff]
    %v2892 = vld [vmem:[%s3 + $0xba0] sm:$0xff]
    %v2893 = vld [vmem:[%s3 + $0xba8] sm:$0xff]
    %v2894 = vld [vmem:[%s3 + $0xbb0] sm:$0xff]
    %v2895 = vld [vmem:[%s3 + $0xbb8] sm:$0xff]
    %v2896 = vld [vmem:[%s3 + $0xbc0] sm:$0xff]
    %v2897 = vld [vmem:[%s3 + $0xbc8] sm:$0xff]
    %v2898 = vld [vmem:[%s3 + $0xbd0] sm:$0xff]
    %v2899 = vld [vmem:[%s3 + $0xbd8] sm:$0xff]
    %v2900 = vld [vmem:[%s3 + $0xbe0] sm:$0xff]
    %v2901 = vld [vmem:[%s3 + $0xbe8] sm:$0xff]
    %v2902 = vld [vmem:[%s3 + $0xbf0] sm:$0xff]
    %v2903 = vld [vmem:[%s3 + $0xbf8] sm:$0xff]
    %v2904 = vld [vmem:[%s3 + $0xc00] sm:$0xff]
    %v2905 = vld [vmem:[%s3 + $0xc08] sm:$0xff]
    %v2906 = vld [vmem:[%s3 + $0xc10] sm:$0xff]
    %v2907 = vld [vmem:[%s3 + $0xc18] sm:$0xff]
    %v2908 = vld [vmem:[%s3 + $0xc20] sm:$0xff]
    %v2909 = vld [vmem:[%s3 + $0xc28] sm:$0xff]
    %v2910 = vld [vmem:[%s3 + $0xc30] sm:$0xff]
    %v2911 = vld [vmem:[%s3 + $0xc38] sm:$0xff]
    %v2912 = vld [vmem:[%s3 + $0xc40] sm:$0xff]
    %v2913 = vld [vmem:[%s3 + $0xc48] sm:$0xff]
    %v2914 = vld [vmem:[%s3 + $0xc50] sm:$0xff]
    %v2915 = vld [vmem:[%s3 + $0xc58] sm:$0xff]
    %v2916 = vld [vmem:[%s3 + $0xc60] sm:$0xff]
    %v2917 = vld [vmem:[%s3 + $0xc68] sm:$0xff]
    %v2918 = vld [vmem:[%s3 + $0xc70] sm:$0xff]
    %v2919 = vld [vmem:[%s3 + $0xc78] sm:$0xff]
    %v2920 = vld [vmem:[%s3 + $0xc80] sm:$0xff]
    %v2921 = vld [vmem:[%s3 + $0xc88] sm:$0xff]
    %v2922 = vld [vmem:[%s3 + $0xc90] sm:$0xff]
    %v2923 = vld [vmem:[%s3 + $0xc98] sm:$0xff]
    %v2924 = vld [vmem:[%s3 + $0xca0] sm:$0xff]
    %v2925 = vld [vmem:[%s3 + $0xca8] sm:$0xff]
    %v2926 = vld [vmem:[%s3 + $0xcb0] sm:$0xff]
    %v2927 = vld [vmem:[%s3 + $0xcb8] sm:$0xff]
    %v2928 = vld [vmem:[%s3 + $0xcc0] sm:$0xff]
    %v2929 = vld [vmem:[%s3 + $0xcc8] sm:$0xff]
    %v2930 = vld [vmem:[%s3 + $0xcd0] sm:$0xff]
    %v2931 = vld [vmem:[%s3 + $0xcd8] sm:$0xff]
    %v2932 = vld [vmem:[%s3 + $0xce0] sm:$0xff]
    %v2933 = vld [vmem:[%s3 + $0xce8] sm:$0xff]
    %v2934 = vld [vmem:[%s3 + $0xcf0] sm:$0xff]
    %v2935 = vld [vmem:[%s3 + $0xcf8] sm:$0xff]
    %v2936 = vld [vmem:[%s3 + $0xd00] sm:$0xff]
    %v2937 = vld [vmem:[%s3 + $0xd08] sm:$0xff]
    %v2938 = vld [vmem:[%s3 + $0xd10] sm:$0xff]
    %v2939 = vld [vmem:[%s3 + $0xd18] sm:$0xff]
    %v2940 = vld [vmem:[%s3 + $0xd20] sm:$0xff]
    %v2941 = vld [vmem:[%s3 + $0xd28] sm:$0xff]
    %v2942 = vld [vmem:[%s3 + $0xd30] sm:$0xff]
    %v2943 = vld [vmem:[%s3 + $0xd38] sm:$0xff]
    %v2944 = vld [vmem:[%s3 + $0xd40] sm:$0xff]
    %v2945 = vld [vmem:[%s3 + $0xd48] sm:$0xff]
    %v2946 = vld [vmem:[%s3 + $0xd50] sm:$0xff]
    %v2947 = vld [vmem:[%s3 + $0xd58] sm:$0xff]
    %v2948 = vld [vmem:[%s3 + $0xd60] sm:$0xff]
    %v2949 = vld [vmem:[%s3 + $0xd68] sm:$0xff]
    %v2950 = vld [vmem:[%s3 + $0xd70] sm:$0xff]
    %v2951 = vld [vmem:[%s3 + $0xd78] sm:$0xff]
    %v2952 = vld [vmem:[%s3 + $0xd80] sm:$0xff]
    %v2953 = vld [vmem:[%s3 + $0xd88] sm:$0xff]
    %v2954 = vld [vmem:[%s3 + $0xd90] sm:$0xff]
    %v2955 = vld [vmem:[%s3 + $0xd98] sm:$0xff]
    %v2956 = vld [vmem:[%s3 + $0xda0] sm:$0xff]
    %v2957 = vld [vmem:[%s3 + $0xda8] sm:$0xff]
    %v2958 = vld [vmem:[%s3 + $0xdb0] sm:$0xff]
    %v2959 = vld [vmem:[%s3 + $0xdb8] sm:$0xff]
    %v2960 = vld [vmem:[%s3 + $0xdc0] sm:$0xff]
    %v2961 = vld [vmem:[%s3 + $0xdc8] sm:$0xff]
    %v2962 = vld [vmem:[%s3 + $0xdd0] sm:$0xff]
    %v2963 = vld [vmem:[%s3 + $0xdd8] sm:$0xff]
    %v2964 = vld [vmem:[%s3 + $0xde0] sm:$0xff]
    %v2965 = vld [vmem:[%s3 + $0xde8] sm:$0xff]
    %v2966 = vld [vmem:[%s3 + $0xdf0] sm:$0xff]
    %v2967 = vld [vmem:[%s3 + $0xdf8] sm:$0xff]
    %v2968 = vld [vmem:[%s3 + $0xe00] sm:$0xff]
    %v2969 = vld [vmem:[%s3 + $0xe08] sm:$0xff]
    %v2970 = vld [vmem:[%s3 + $0xe10] sm:$0xff]
    %v2971 = vld [vmem:[%s3 + $0xe18] sm:$0xff]
    %v2972 = vld [vmem:[%s3 + $0xe20] sm:$0xff]
    %v2973 = vld [vmem:[%s3 + $0xe28] sm:$0xff]
    %v2974 = vld [vmem:[%s3 + $0xe30] sm:$0xff]
    %v2975 = vld [vmem:[%s3 + $0xe38] sm:$0xff]
    %v2976 = vld [vmem:[%s3 + $0xe40] sm:$0xff]
    %v2977 = vld [vmem:[%s3 + $0xe48] sm:$0xff]
    %v2978 = vld [vmem:[%s3 + $0xe50] sm:$0xff]
    %v2979 = vld [vmem:[%s3 + $0xe58] sm:$0xff]
    %v2980 = vld [vmem:[%s3 + $0xe60] sm:$0xff]
    %v2981 = vld [vmem:[%s3 + $0xe68] sm:$0xff]
    %v2982 = vld [vmem:[%s3 + $0xe70] sm:$0xff]
    %v2983 = vld [vmem:[%s3 + $0xe78] sm:$0xff]
    %v2984 = vld [vmem:[%s3 + $0xe80] sm:$0xff]
    %v2985 = vld [vmem:[%s3 + $0xe88] sm:$0xff]
    %v2986 = vld [vmem:[%s3 + $0xe90] sm:$0xff]
    %v2987 = vld [vmem:[%s3 + $0xe98] sm:$0xff]
    %v2988 = vld [vmem:[%s3 + $0xea0] sm:$0xff]
    %v2989 = vld [vmem:[%s3 + $0xea8] sm:$0xff]
    %v2990 = vld [vmem:[%s3 + $0xeb0] sm:$0xff]
    %v2991 = vld [vmem:[%s3 + $0xeb8] sm:$0xff]
    %v2992 = vld [vmem:[%s3 + $0xec0] sm:$0xff]
    %v2993 = vld [vmem:[%s3 + $0xec8] sm:$0xff]
    %v2994 = vld [vmem:[%s3 + $0xed0] sm:$0xff]
    %v2995 = vld [vmem:[%s3 + $0xed8] sm:$0xff]
    %v2996 = vld [vmem:[%s3 + $0xee0] sm:$0xff]
    %v2997 = vld [vmem:[%s3 + $0xee8] sm:$0xff]
    %v2998 = vld [vmem:[%s3 + $0xef0] sm:$0xff]
    %v2999 = vld [vmem:[%s3 + $0xef8] sm:$0xff]
    %v3000 = vld [vmem:[%s3 + $0xf00] sm:$0xff]
    %v3001 = vld [vmem:[%s3 + $0xf08] sm:$0xff]
    %v3002 = vld [vmem:[%s3 + $0xf10] sm:$0xff]
    %v3003 = vld [vmem:[%s3 + $0xf18] sm:$0xff]
    %v3004 = vld [vmem:[%s3 + $0xf20] sm:$0xff]
    %v3005 = vld [vmem:[%s3 + $0xf28] sm:$0xff]
    %v3006 = vsel %vm849, %v502, 0
    %v3008 = vsel %vm849, %v506, 0
    %v3010 = vsel %vm849, %v512, 0
    %v3012 = vsel %vm849, %v516, 0
    %v3014 = vsel %vm849, %v522, 0
    %v3016 = vsel %vm849, %v526, 0
    %v3018 = vsel %vm849, %v532, 0
    %v3020 = vsel %vm849, %v536, 0
    %v3022 = vsel %vm849, %v542, 0
    %v3024 = vsel %vm849, %v546, 0
    %v3026 = vsel %vm849, %v552, 0
    %v3028 = vsel %vm849, %v556, 0
    %v3030 = vsel %vm849, %v562, 0
    %v3032 = vsel %vm849, %v566, 0
    %v3034 = vsel %vm849, %v572, 0
    %v3036 = vsel %vm849, %v576, 0
    %v3038 = vsel %vm849, %v582, 0
    %v3040 = vsel %vm849, %v586, 0
    %v3042 = vsel %vm849, %v592, 0
    %v3044 = vsel %vm849, %v596, 0
    %v3046 = vsel %vm849, %v602, 0
    %v3048 = vsel %vm849, %v606, 0
    %v3050 = vsel %vm849, %v612, 0
    %v3052 = vsel %vm849, %v616, 0
    %v3054 = vsel %vm849, %v622, 0
    %v3056 = vsel %vm849, %v626, 0
    %v3058 = vsel %vm849, %v632, 0
    %v3060 = vsel %vm849, %v636, 0
    %v3062 = vsel %vm849, %v658, 0
    %v3064 = vsel %vm849, %v662, 0
    %v3066 = vsel %vm849, %v684, 0
    %v3068 = vsel %vm849, %v688, 0
    %3070 = vmatprep.subr.mxu0 %v2521
    %3071 = vmatpush1.msra.mxu0 %v2520
    %3072 = vmatprep.subr.mxu0 %v2524
    %3073 = vmatpush1.msra.mxu0 %v2523
    %3074 = vmatprep.subr.mxu0 %v2527
    %3075 = vmatpush1.msra.mxu0 %v2526
    %3076 = vmatprep.subr.mxu0 %v2530
    %3077 = vmatpush1.msra.mxu0 %v2529
    %3078 = vmatprep.subr.mxu0 %v2533
    %3079 = vmatpush1.msra.mxu0 %v2532
    %3080 = vmatprep.subr.mxu0 %v2536
    %3081 = vmatpush1.msra.mxu0 %v2535
    %3082 = vmatprep.subr.mxu0 %v2539
    %3083 = vmatpush1.msra.mxu0 %v2538
    %3084 = vmatprep.subr.mxu0 %v2542
    %3085 = vmatpush1.msra.mxu0 %v2541
    %3086 = vmatprep.subr.mxu0 %v2545
    %3087 = vmatpush1.msra.mxu0 %v2544
    %3088 = vmatprep.subr.mxu0 %v2548
    %3089 = vmatpush1.msra.mxu0 %v2547
    %3090 = vmatprep.subr.mxu0 %v2551
    %3091 = vmatpush1.msra.mxu0 %v2550
    %3092 = vmatprep.subr.mxu0 %v2554
    %3093 = vmatpush1.msra.mxu0 %v2553
    %3094 = vmatprep.subr.mxu0 %v2557
    %3095 = vmatpush1.msra.mxu0 %v2556
    %3096 = vmatprep.subr.mxu0 %v2560
    %3097 = vmatpush1.msra.mxu0 %v2559
    %3098 = vmatprep.subr.mxu0 %v2563
    %3099 = vmatpush1.msra.mxu0 %v2562
    %3100 = vmatprep.subr.mxu0 %v2566
    %3101 = vmatpush1.msra.mxu0 %v2565
    %3102 = vmatprep.subr.mxu0 %v2569
    %3103 = vmatpush1.msra.mxu0 %v2568
    %3104 = vmatprep.subr.mxu0 %v2572
    %3105 = vmatpush1.msra.mxu0 %v2571
    %3106 = vmatprep.subr.mxu0 %v2575
    %3107 = vmatpush1.msra.mxu0 %v2574
    %3108 = vmatprep.subr.mxu0 %v2578
    %3109 = vmatpush1.msra.mxu0 %v2577
    %3110 = vmatprep.subr.mxu0 %v2581
    %3111 = vmatpush1.msra.mxu0 %v2580
    %3112 = vmatprep.subr.mxu0 %v2584
    %3113 = vmatpush1.msra.mxu0 %v2583
    %3114 = vmatprep.subr.mxu0 %v2587
    %3115 = vmatpush1.msra.mxu0 %v2586
    %3116 = vmatprep.subr.mxu0 %v2590
    %3117 = vmatpush1.msra.mxu0 %v2589
    %3118 = vmatprep.subr.mxu0 %v2593
    %3119 = vmatpush1.msra.mxu0 %v2592
    %3120 = vmatprep.subr.mxu0 %v2596
    %3121 = vmatpush1.msra.mxu0 %v2595
    %3122 = vmatprep.subr.mxu0 %v2599
    %3123 = vmatpush1.msra.mxu0 %v2598
    %3124 = vmatprep.subr.mxu0 %v2602
    %3125 = vmatpush1.msra.mxu0 %v2601
    %3126 = vmatprep.subr.mxu0 %v2605
    %3127 = vmatpush1.msra.mxu0 %v2604
    %3128 = vmatprep.subr.mxu0 %v2608
    %3129 = vmatpush1.msra.mxu0 %v2607
    %3130 = vmatprep.subr.mxu0 %v2611
    %3131 = vmatpush1.msra.mxu0 %v2610
    %3132 = vmatprep.subr.mxu0 %v2614
    %3133 = vmatpush1.msra.mxu0 %v2613
    %3134 = vmatprep.mubr.f32.mxu0 %v2296
    %3135 = vmatmul.mubr.f32.gmra.mrb[0].mxu0 %v101
    %v3136 = vpop.f32.mrb[0].mxu0
    %v3137 = vadd.f32 0.0, %v3136
    %v3138 = vpop.f32.mrb[0].mxu0
    %v3139 = vadd.f32 0.0, %v3138
    %3140 = vmatprep.mubr.f32.mxu0 %v2297
    %3141 = vmatmul.mubr.f32.gmra.mrb[0].mxu0 %v103
    %v3142 = vpop.f32.mrb[0].mxu0
    %v3143 = vadd.f32 0.0, %v3142
    %v3144 = vpop.f32.mrb[0].mxu0
    %v3145 = vadd.f32 0.0, %v3144
    %3146 = vmatprep.mubr.f32.mxu0 %v2298
    %3147 = vmatmul.mubr.f32.gmra.mrb[0].mxu0 %v123
    %v3148 = vpop.f32.mrb[0].mxu0
    %v3149 = vadd.f32 0.0, %v3148
    %v3150 = vpop.f32.mrb[0].mxu0
    %v3151 = vadd.f32 0.0, %v3150
    %3152 = vmatprep.mubr.f32.mxu0 %v2299
    %3153 = vmatmul.mubr.f32.gmra.mrb[0].mxu0 %v125
    %v3154 = vpop.f32.mrb[0].mxu0
    %v3155 = vadd.f32 0.0, %v3154
    %v3156 = vpop.f32.mrb[0].mxu0
    %v3157 = vadd.f32 0.0, %v3156
    %3158 = vmatprep.mubr.f32.mxu0 %v2300
    %3159 = vmatmul.mubr.f32.gmra.mrb[0].mxu0 %v129
    %v3160 = vpop.f32.mrb[0].mxu0
    %v3161 = vadd.f32 0.0, %v3160
    %v3162 = vpop.f32.mrb[0].mxu0
    %v3163 = vadd.f32 0.0, %v3162
    %3164 = vmatprep.mubr.f32.mxu0 %v2301
    %3165 = vmatmul.mubr.f32.gmra.mrb[0].mxu0 %v131
    %v3166 = vpop.f32.mrb[0].mxu0
    %v3167 = vadd.f32 0.0, %v3166
    %v3168 = vpop.f32.mrb[0].mxu0
    %v3169 = vadd.f32 0.0, %v3168
    %3170 = vmatprep.mubr.f32.mxu0 %v2302
    %3171 = vmatmul.mubr.f32.gmra.mrb[0].mxu0 %v135
    %v3172 = vpop.f32.mrb[0].mxu0
    %v3173 = vadd.f32 0.0, %v3172
    %v3174 = vpop.f32.mrb[0].mxu0
    %v3175 = vadd.f32 0.0, %v3174
    %3176 = vmatprep.mubr.f32.mxu0 %v2303
    %3177 = vmatmul.mubr.f32.gmra.mrb[0].mxu0 %v137
    %v3178 = vpop.f32.mrb[0].mxu0
    %v3179 = vadd.f32 0.0, %v3178
    %v3180 = vpop.f32.mrb[0].mxu0
    %v3181 = vadd.f32 0.0, %v3180
    %3182 = vmatprep.mubr.f32.mxu0 %v2304
    %3183 = vmatmul.mubr.f32.gmra.mrb[0].mxu0 %v141
    %v3184 = vpop.f32.mrb[0].mxu0
    %v3185 = vadd.f32 0.0, %v3184
    %v3186 = vpop.f32.mrb[0].mxu0
    %v3187 = vadd.f32 0.0, %v3186
    %3188 = vmatprep.mubr.f32.mxu0 %v2305
    %3189 = vmatmul.mubr.f32.gmra.mrb[0].mxu0 %v143
    %v3190 = vpop.f32.mrb[0].mxu0
    %v3191 = vadd.f32 0.0, %v3190
    %v3192 = vpop.f32.mrb[0].mxu0
    %v3193 = vadd.f32 0.0, %v3192
    %3194 = vmatprep.mubr.f32.mxu0 %v2306
    %3195 = vmatmul.mubr.f32.gmra.mrb[0].mxu0 %v147
    %v3196 = vpop.f32.mrb[0].mxu0
    %v3197 = vadd.f32 0.0, %v3196
    %v3198 = vpop.f32.mrb[0].mxu0
    %v3199 = vadd.f32 0.0, %v3198
    %3200 = vmatprep.mubr.f32.mxu0 %v2307
    %3201 = vmatmul.mubr.f32.gmra.mrb[0].mxu0 %v149
    %v3202 = vpop.f32.mrb[0].mxu0
    %v3203 = vadd.f32 0.0, %v3202
    %v3204 = vpop.f32.mrb[0].mxu0
    %v3205 = vadd.f32 0.0, %v3204
    %3206 = vmatprep.mubr.f32.mxu0 %v2308
    %3207 = vmatmul.mubr.f32.gmra.mrb[0].mxu0 %v153
    %v3208 = vpop.f32.mrb[0].mxu0
    %v3209 = vadd.f32 0.0, %v3208
    %v3210 = vpop.f32.mrb[0].mxu0
    %v3211 = vadd.f32 0.0, %v3210
    %3212 = vmatprep.mubr.f32.mxu0 %v2309
    %3213 = vmatmul.mubr.f32.gmra.mrb[0].mxu0 %v155
    %v3214 = vpop.f32.mrb[0].mxu0
    %v3215 = vadd.f32 0.0, %v3214
    %v3216 = vpop.f32.mrb[0].mxu0
    %v3217 = vadd.f32 0.0, %v3216
    %3218 = vmatprep.mubr.f32.mxu0 %v2310
    %3219 = vmatmul.mubr.f32.gmra.mrb[0].mxu0 %v159
    %v3220 = vpop.f32.mrb[0].mxu0
    %v3221 = vadd.f32 0.0, %v3220
    %v3222 = vpop.f32.mrb[0].mxu0
    %v3223 = vadd.f32 0.0, %v3222
    %3224 = vmatprep.mubr.f32.mxu0 %v2311
    %3225 = vmatmul.mubr.f32.gmra.mrb[0].mxu0 %v161
    %v3226 = vpop.f32.mrb[0].mxu0
    %v3227 = vadd.f32 0.0, %v3226
    %v3228 = vpop.f32.mrb[0].mxu0
    %v3229 = vadd.f32 0.0, %v3228
    %3230 = vmatprep.mubr.f32.mxu0 %v2312
    %3231 = vmatmul.mubr.f32.gmra.mrb[0].mxu0 %v165
    %v3232 = vpop.f32.mrb[0].mxu0
    %v3233 = vadd.f32 0.0, %v3232
    %v3234 = vpop.f32.mrb[0].mxu0
    %v3235 = vadd.f32 0.0, %v3234
    %3236 = vmatprep.mubr.f32.mxu0 %v2313
    %3237 = vmatmul.mubr.f32.gmra.mrb[0].mxu0 %v167
    %v3238 = vpop.f32.mrb[0].mxu0
    %v3239 = vadd.f32 0.0, %v3238
    %v3240 = vpop.f32.mrb[0].mxu0
    %v3241 = vadd.f32 0.0, %v3240
    %3242 = vmatprep.mubr.f32.mxu0 %v2314
    %3243 = vmatmul.mubr.f32.gmra.mrb[0].mxu0 %v171
    %v3244 = vpop.f32.mrb[0].mxu0
    %v3245 = vadd.f32 0.0, %v3244
    %v3246 = vpop.f32.mrb[0].mxu0
    %v3247 = vadd.f32 0.0, %v3246
    %3248 = vmatprep.mubr.f32.mxu0 %v2315
    %3249 = vmatmul.mubr.f32.gmra.mrb[0].mxu0 %v173
    %v3250 = vpop.f32.mrb[0].mxu0
    %v3251 = vadd.f32 0.0, %v3250
    %v3252 = vpop.f32.mrb[0].mxu0
    %v3253 = vadd.f32 0.0, %v3252
    %3254 = vmatprep.mubr.f32.mxu0 %v2316
    %3255 = vmatmul.mubr.f32.gmra.mrb[0].mxu0 %v177
    %v3256 = vpop.f32.mrb[0].mxu0
    %v3257 = vadd.f32 0.0, %v3256
    %v3258 = vpop.f32.mrb[0].mxu0
    %v3259 = vadd.f32 0.0, %v3258
    %3260 = vmatprep.mubr.f32.mxu0 %v2317
    %3261 = vmatmul.mubr.f32.gmra.mrb[0].mxu0 %v179
    %v3262 = vpop.f32.mrb[0].mxu0
    %v3263 = vadd.f32 0.0, %v3262
    %v3264 = vpop.f32.mrb[0].mxu0
    %v3265 = vadd.f32 0.0, %v3264
    %3266 = vmatprep.mubr.f32.mxu0 %v2318
    %3267 = vmatmul.mubr.f32.gmra.mrb[0].mxu0 %v183
    %v3268 = vpop.f32.mrb[0].mxu0
    %v3269 = vadd.f32 0.0, %v3268
    %v3270 = vpop.f32.mrb[0].mxu0
    %v3271 = vadd.f32 0.0, %v3270
    %3272 = vmatprep.mubr.f32.mxu0 %v2319
    %3273 = vmatmul.mubr.f32.gmra.mrb[0].mxu0 %v185
    %v3274 = vpop.f32.mrb[0].mxu0
    %v3275 = vadd.f32 0.0, %v3274
    %v3276 = vpop.f32.mrb[0].mxu0
    %v3277 = vadd.f32 0.0, %v3276
    %3278 = vmatprep.mubr.f32.mxu0 %v2320
    %3279 = vmatmul.mubr.f32.gmra.mrb[0].mxu0 %v189
    %v3280 = vpop.f32.mrb[0].mxu0
    %v3281 = vadd.f32 0.0, %v3280
    %v3282 = vpop.f32.mrb[0].mxu0
    %v3283 = vadd.f32 0.0, %v3282
    %3284 = vmatprep.mubr.f32.mxu0 %v2321
    %3285 = vmatmul.mubr.f32.gmra.mrb[0].mxu0 %v191
    %v3286 = vpop.f32.mrb[0].mxu0
    %v3287 = vadd.f32 0.0, %v3286
    %v3288 = vpop.f32.mrb[0].mxu0
    %v3289 = vadd.f32 0.0, %v3288
    %3290 = vmatprep.mubr.f32.mxu0 %v2322
    %3291 = vmatmul.mubr.f32.gmra.mrb[0].mxu0 %v195
    %v3292 = vpop.f32.mrb[0].mxu0
    %v3293 = vadd.f32 0.0, %v3292
    %v3294 = vpop.f32.mrb[0].mxu0
    %v3295 = vadd.f32 0.0, %v3294
    %3296 = vmatprep.mubr.f32.mxu0 %v2323
    %3297 = vmatmul.mubr.f32.gmra.mrb[0].mxu0 %v197
    %v3298 = vpop.f32.mrb[0].mxu0
    %v3299 = vadd.f32 0.0, %v3298
    %v3300 = vpop.f32.mrb[0].mxu0
    %v3301 = vadd.f32 0.0, %v3300
    %3302 = vmatprep.mubr.f32.mxu0 %v2324
    %3303 = vmatmul.mubr.f32.gmra.mrb[0].mxu0 %v201
    %v3304 = vpop.f32.mrb[0].mxu0
    %v3305 = vadd.f32 0.0, %v3304
    %v3306 = vpop.f32.mrb[0].mxu0
    %v3307 = vadd.f32 0.0, %v3306
    %3308 = vmatprep.mubr.f32.mxu0 %v2325
    %3309 = vmatmul.mubr.f32.gmra.mrb[0].mxu0 %v203
    %v3310 = vpop.f32.mrb[0].mxu0
    %v3311 = vadd.f32 0.0, %v3310
    %v3312 = vpop.f32.mrb[0].mxu0
    %v3313 = vadd.f32 0.0, %v3312
    %3314 = vmatprep.mubr.f32.mxu0 %v2326
    %3315 = vmatmul.mubr.f32.gmra.mrb[0].mxu0 %v207
    %v3316 = vpop.f32.mrb[0].mxu0
    %v3317 = vadd.f32 0.0, %v3316
    %v3318 = vpop.f32.mrb[0].mxu0
    %v3319 = vadd.f32 0.0, %v3318
    %3320 = vmatprep.mubr.f32.mxu0 %v2327
    %3321 = vmatmul.mubr.f32.gmra.mrb[0].mxu0 %v209
    %v3322 = vpop.f32.mrb[0].mxu0
    %v3323 = vadd.f32 0.0, %v3322
    %v3324 = vpop.f32.mrb[0].mxu0
    %v3325 = vadd.f32 0.0, %v3324
    %3326 = vdwg.mxu0
    %3327 = vmatprep.subr.mxu0 %v2617
    %3328 = vmatpush1.msra.mxu0 %v2616
    %3329 = vmatprep.subr.mxu0 %v2620
    %3330 = vmatpush1.msra.mxu0 %v2619
    %3331 = vmatprep.subr.mxu0 %v2623
    %3332 = vmatpush1.msra.mxu0 %v2622
    %3333 = vmatprep.subr.mxu0 %v2626
    %3334 = vmatpush1.msra.mxu0 %v2625
    %3335 = vmatprep.subr.mxu0 %v2629
    %3336 = vmatpush1.msra.mxu0 %v2628
    %3337 = vmatprep.subr.mxu0 %v2632
    %3338 = vmatpush1.msra.mxu0 %v2631
    %3339 = vmatprep.subr.mxu0 %v2635
    %3340 = vmatpush1.msra.mxu0 %v2634
    %3341 = vmatprep.subr.mxu0 %v2638
    %3342 = vmatpush1.msra.mxu0 %v2637
    %3343 = vmatprep.subr.mxu0 %v2641
    %3344 = vmatpush1.msra.mxu0 %v2640
    %3345 = vmatprep.subr.mxu0 %v2644
    %3346 = vmatpush1.msra.mxu0 %v2643
    %3347 = vmatprep.subr.mxu0 %v2647
    %3348 = vmatpush1.msra.mxu0 %v2646
    %3349 = vmatprep.subr.mxu0 %v2650
    %3350 = vmatpush1.msra.mxu0 %v2649
    %3351 = vmatprep.subr.mxu0 %v2653
    %3352 = vmatpush1.msra.mxu0 %v2652
    %3353 = vmatprep.subr.mxu0 %v2656
    %3354 = vmatpush1.msra.mxu0 %v2655
    %3355 = vmatprep.subr.mxu0 %v2659
    %3356 = vmatpush1.msra.mxu0 %v2658
    %3357 = vmatprep.subr.mxu0 %v2662
    %3358 = vmatpush1.msra.mxu0 %v2661
    %3359 = vmatprep.subr.mxu0 %v2665
    %3360 = vmatpush1.msra.mxu0 %v2664
    %3361 = vmatprep.subr.mxu0 %v2668
    %3362 = vmatpush1.msra.mxu0 %v2667
    %3363 = vmatprep.subr.mxu0 %v2671
    %3364 = vmatpush1.msra.mxu0 %v2670
    %3365 = vmatprep.subr.mxu0 %v2674
    %3366 = vmatpush1.msra.mxu0 %v2673
    %3367 = vmatprep.subr.mxu0 %v2677
    %3368 = vmatpush1.msra.mxu0 %v2676
    %3369 = vmatprep.subr.mxu0 %v2680
    %3370 = vmatpush1.msra.mxu0 %v2679
    %3371 = vmatprep.subr.mxu0 %v2683
    %3372 = vmatpush1.msra.mxu0 %v2682
    %3373 = vmatprep.subr.mxu0 %v2686
    %3374 = vmatpush1.msra.mxu0 %v2685
    %3375 = vmatprep.subr.mxu0 %v2689
    %3376 = vmatpush1.msra.mxu0 %v2688
    %3377 = vmatprep.subr.mxu0 %v2692
    %3378 = vmatpush1.msra.mxu0 %v2691
    %3379 = vmatprep.subr.mxu0 %v2695
    %3380 = vmatpush1.msra.mxu0 %v2694
    %3381 = vmatprep.subr.mxu0 %v2698
    %3382 = vmatpush1.msra.mxu0 %v2697
    %3383 = vmatprep.subr.mxu0 %v2701
    %3384 = vmatpush1.msra.mxu0 %v2700
    %3385 = vmatprep.subr.mxu0 %v2704
    %3386 = vmatpush1.msra.mxu0 %v2703
    %3387 = vmatprep.subr.mxu0 %v2707
    %3388 = vmatpush1.msra.mxu0 %v2706
    %3389 = vmatprep.subr.mxu0 %v2710
    %3390 = vmatpush1.msra.mxu0 %v2709
    %3391 = vmatprep.mubr.f32.mxu0 %v2360
    %3392 = vmatmul.mubr.f32.gmra.mrb[0].mxu0 %v2328
    %v3393 = vpop.f32.mrb[0].mxu0
    %v3394 = vadd.f32 %v3137, %v3393
    %v3395 = vpop.f32.mrb[0].mxu0
    %v3396 = vadd.f32 %v3139, %v3395
    %3397 = vmatprep.mubr.f32.mxu0 %v2361
    %3398 = vmatmul.mubr.f32.gmra.mrb[0].mxu0 %v2329
    %v3399 = vpop.f32.mrb[0].mxu0
    %v3400 = vadd.f32 %v3143, %v3399
    %v3401 = vpop.f32.mrb[0].mxu0
    %v3402 = vadd.f32 %v3145, %v3401
    %3403 = vmatprep.mubr.f32.mxu0 %v2362
    %3404 = vmatmul.mubr.f32.gmra.mrb[0].mxu0 %v2330
    %v3405 = vpop.f32.mrb[0].mxu0
    %v3406 = vadd.f32 %v3149, %v3405
    %v3407 = vpop.f32.mrb[0].mxu0
    %v3408 = vadd.f32 %v3151, %v3407
    %3409 = vmatprep.mubr.f32.mxu0 %v2363
    %3410 = vmatmul.mubr.f32.gmra.mrb[0].mxu0 %v2331
    %v3411 = vpop.f32.mrb[0].mxu0
    %v3412 = vadd.f32 %v3155, %v3411
    %v3413 = vpop.f32.mrb[0].mxu0
    %v3414 = vadd.f32 %v3157, %v3413
    %3415 = vmatprep.mubr.f32.mxu0 %v2364
    %3416 = vmatmul.mubr.f32.gmra.mrb[0].mxu0 %v2332
    %v3417 = vpop.f32.mrb[0].mxu0
    %v3418 = vadd.f32 %v3161, %v3417
    %v3419 = vpop.f32.mrb[0].mxu0
    %v3420 = vadd.f32 %v3163, %v3419
    %3421 = vmatprep.mubr.f32.mxu0 %v2365
    %3422 = vmatmul.mubr.f32.gmra.mrb[0].mxu0 %v2333
    %v3423 = vpop.f32.mrb[0].mxu0
    %v3424 = vadd.f32 %v3167, %v3423
    %v3425 = vpop.f32.mrb[0].mxu0
    %v3426 = vadd.f32 %v3169, %v3425
    %3427 = vmatprep.mubr.f32.mxu0 %v2366
    %3428 = vmatmul.mubr.f32.gmra.mrb[0].mxu0 %v2334
    %v3429 = vpop.f32.mrb[0].mxu0
    %v3430 = vadd.f32 %v3173, %v3429
    %v3431 = vpop.f32.mrb[0].mxu0
    %v3432 = vadd.f32 %v3175, %v3431
    %3433 = vmatprep.mubr.f32.mxu0 %v2367
    %3434 = vmatmul.mubr.f32.gmra.mrb[0].mxu0 %v2335
    %v3435 = vpop.f32.mrb[0].mxu0
    %v3436 = vadd.f32 %v3179, %v3435
    %v3437 = vpop.f32.mrb[0].mxu0
    %v3438 = vadd.f32 %v3181, %v3437
    %3439 = vmatprep.mubr.f32.mxu0 %v2368
    %3440 = vmatmul.mubr.f32.gmra.mrb[0].mxu0 %v2336
    %v3441 = vpop.f32.mrb[0].mxu0
    %v3442 = vadd.f32 %v3185, %v3441
    %v3443 = vpop.f32.mrb[0].mxu0
    %v3444 = vadd.f32 %v3187, %v3443
    %3445 = vmatprep.mubr.f32.mxu0 %v2369
    %3446 = vmatmul.mubr.f32.gmra.mrb[0].mxu0 %v2337
    %v3447 = vpop.f32.mrb[0].mxu0
    %v3448 = vadd.f32 %v3191, %v3447
    %v3449 = vpop.f32.mrb[0].mxu0
    %v3450 = vadd.f32 %v3193, %v3449
    %3451 = vmatprep.mubr.f32.mxu0 %v2370
    %3452 = vmatmul.mubr.f32.gmra.mrb[0].mxu0 %v2338
    %v3453 = vpop.f32.mrb[0].mxu0
    %v3454 = vadd.f32 %v3197, %v3453
    %v3455 = vpop.f32.mrb[0].mxu0
    %v3456 = vadd.f32 %v3199, %v3455
    %3457 = vmatprep.mubr.f32.mxu0 %v2371
    %3458 = vmatmul.mubr.f32.gmra.mrb[0].mxu0 %v2339
    %v3459 = vpop.f32.mrb[0].mxu0
    %v3460 = vadd.f32 %v3203, %v3459
    %v3461 = vpop.f32.mrb[0].mxu0
    %v3462 = vadd.f32 %v3205, %v3461
    %3463 = vmatprep.mubr.f32.mxu0 %v2372
    %3464 = vmatmul.mubr.f32.gmra.mrb[0].mxu0 %v2340
    %v3465 = vpop.f32.mrb[0].mxu0
    %v3466 = vadd.f32 %v3209, %v3465
    %v3467 = vpop.f32.mrb[0].mxu0
    %v3468 = vadd.f32 %v3211, %v3467
    %3469 = vmatprep.mubr.f32.mxu0 %v2373
    %3470 = vmatmul.mubr.f32.gmra.mrb[0].mxu0 %v2341
    %v3471 = vpop.f32.mrb[0].mxu0
    %v3472 = vadd.f32 %v3215, %v3471
    %v3473 = vpop.f32.mrb[0].mxu0
    %v3474 = vadd.f32 %v3217, %v3473
    %3475 = vmatprep.mubr.f32.mxu0 %v2374
    %3476 = vmatmul.mubr.f32.gmra.mrb[0].mxu0 %v2342
    %v3477 = vpop.f32.mrb[0].mxu0
    %v3478 = vadd.f32 %v3221, %v3477
    %v3479 = vpop.f32.mrb[0].mxu0
    %v3480 = vadd.f32 %v3223, %v3479
    %3481 = vmatprep.mubr.f32.mxu0 %v2375
    %3482 = vmatmul.mubr.f32.gmra.mrb[0].mxu0 %v2343
    %v3483 = vpop.f32.mrb[0].mxu0
    %v3484 = vadd.f32 %v3227, %v3483
    %v3485 = vpop.f32.mrb[0].mxu0
    %v3486 = vadd.f32 %v3229, %v3485
    %3487 = vmatprep.mubr.f32.mxu0 %v2376
    %3488 = vmatmul.mubr.f32.gmra.mrb[0].mxu0 %v2344
    %v3489 = vpop.f32.mrb[0].mxu0
    %v3490 = vadd.f32 %v3233, %v3489
    %v3491 = vpop.f32.mrb[0].mxu0
    %v3492 = vadd.f32 %v3235, %v3491
    %3493 = vmatprep.mubr.f32.mxu0 %v2377
    %3494 = vmatmul.mubr.f32.gmra.mrb[0].mxu0 %v2345
    %v3495 = vpop.f32.mrb[0].mxu0
    %v3496 = vadd.f32 %v3239, %v3495
    %v3497 = vpop.f32.mrb[0].mxu0
    %v3498 = vadd.f32 %v3241, %v3497
    %3499 = vmatprep.mubr.f32.mxu0 %v2378
    %3500 = vmatmul.mubr.f32.gmra.mrb[0].mxu0 %v2346
    %v3501 = vpop.f32.mrb[0].mxu0
    %v3502 = vadd.f32 %v3245, %v3501
    %v3503 = vpop.f32.mrb[0].mxu0
    %v3504 = vadd.f32 %v3247, %v3503
    %3505 = vmatprep.mubr.f32.mxu0 %v2379
    %3506 = vmatmul.mubr.f32.gmra.mrb[0].mxu0 %v2347
    %v3507 = vpop.f32.mrb[0].mxu0
    %v3508 = vadd.f32 %v3251, %v3507
    %v3509 = vpop.f32.mrb[0].mxu0
    %v3510 = vadd.f32 %v3253, %v3509
    %3511 = vmatprep.mubr.f32.mxu0 %v2380
    %3512 = vmatmul.mubr.f32.gmra.mrb[0].mxu0 %v2348
    %v3513 = vpop.f32.mrb[0].mxu0
    %v3514 = vadd.f32 %v3257, %v3513
    %v3515 = vpop.f32.mrb[0].mxu0
    %v3516 = vadd.f32 %v3259, %v3515
    %3517 = vmatprep.mubr.f32.mxu0 %v2381
    %3518 = vmatmul.mubr.f32.gmra.mrb[0].mxu0 %v2349
    %v3519 = vpop.f32.mrb[0].mxu0
    %v3520 = vadd.f32 %v3263, %v3519
    %v3521 = vpop.f32.mrb[0].mxu0
    %v3522 = vadd.f32 %v3265, %v3521
    %3523 = vmatprep.mubr.f32.mxu0 %v2382
    %3524 = vmatmul.mubr.f32.gmra.mrb[0].mxu0 %v2350
    %v3525 = vpop.f32.mrb[0].mxu0
    %v3526 = vadd.f32 %v3269, %v3525
    %v3527 = vpop.f32.mrb[0].mxu0
    %v3528 = vadd.f32 %v3271, %v3527
    %3529 = vmatprep.mubr.f32.mxu0 %v2383
    %3530 = vmatmul.mubr.f32.gmra.mrb[0].mxu0 %v2351
    %v3531 = vpop.f32.mrb[0].mxu0
    %v3532 = vadd.f32 %v3275, %v3531
    %v3533 = vpop.f32.mrb[0].mxu0
    %v3534 = vadd.f32 %v3277, %v3533
    %3535 = vmatprep.mubr.f32.mxu0 %v2384
    %3536 = vmatmul.mubr.f32.gmra.mrb[0].mxu0 %v2352
    %v3537 = vpop.f32.mrb[0].mxu0
    %v3538 = vadd.f32 %v3281, %v3537
    %v3539 = vpop.f32.mrb[0].mxu0
    %v3540 = vadd.f32 %v3283, %v3539
    %3541 = vmatprep.mubr.f32.mxu0 %v2385
    %3542 = vmatmul.mubr.f32.gmra.mrb[0].mxu0 %v2353
    %v3543 = vpop.f32.mrb[0].mxu0
    %v3544 = vadd.f32 %v3287, %v3543
    %v3545 = vpop.f32.mrb[0].mxu0
    %v3546 = vadd.f32 %v3289, %v3545
    %3547 = vmatprep.mubr.f32.mxu0 %v2386
    %3548 = vmatmul.mubr.f32.gmra.mrb[0].mxu0 %v2354
    %v3549 = vpop.f32.mrb[0].mxu0
    %v3550 = vadd.f32 %v3293, %v3549
    %v3551 = vpop.f32.mrb[0].mxu0
    %v3552 = vadd.f32 %v3295, %v3551
    %3553 = vmatprep.mubr.f32.mxu0 %v2387
    %3554 = vmatmul.mubr.f32.gmra.mrb[0].mxu0 %v2355
    %v3555 = vpop.f32.mrb[0].mxu0
    %v3556 = vadd.f32 %v3299, %v3555
    %v3557 = vpop.f32.mrb[0].mxu0
    %v3558 = vadd.f32 %v3301, %v3557
    %3559 = vmatprep.mubr.f32.mxu0 %v2388
    %3560 = vmatmul.mubr.f32.gmra.mrb[0].mxu0 %v2356
    %v3561 = vpop.f32.mrb[0].mxu0
    %v3562 = vadd.f32 %v3305, %v3561
    %v3563 = vpop.f32.mrb[0].mxu0
    %v3564 = vadd.f32 %v3307, %v3563
    %3565 = vmatprep.mubr.f32.mxu0 %v2389
    %3566 = vmatmul.mubr.f32.gmra.mrb[0].mxu0 %v2357
    %v3567 = vpop.f32.mrb[0].mxu0
    %v3568 = vadd.f32 %v3311, %v3567
    %v3569 = vpop.f32.mrb[0].mxu0
    %v3570 = vadd.f32 %v3313, %v3569
    %3571 = vmatprep.mubr.f32.mxu0 %v2390
    %3572 = vmatmul.mubr.f32.gmra.mrb[0].mxu0 %v2358
    %v3573 = vpop.f32.mrb[0].mxu0
    %v3574 = vadd.f32 %v3317, %v3573
    %v3575 = vpop.f32.mrb[0].mxu0
    %v3576 = vadd.f32 %v3319, %v3575
    %3577 = vmatprep.mubr.f32.mxu0 %v2391
    %3578 = vmatmul.mubr.f32.gmra.mrb[0].mxu0 %v2359
    %v3579 = vpop.f32.mrb[0].mxu0
    %v3580 = vadd.f32 %v3323, %v3579
    %v3581 = vpop.f32.mrb[0].mxu0
    %v3582 = vadd.f32 %v3325, %v3581
    %3583 = vdwg.mxu0
    %3584 = vmatprep.subr.mxu0 %v2713
    %3585 = vmatpush1.msra.mxu0 %v2712
    %3586 = vmatprep.subr.mxu0 %v2716
    %3587 = vmatpush1.msra.mxu0 %v2715
    %3588 = vmatprep.subr.mxu0 %v2719
    %3589 = vmatpush1.msra.mxu0 %v2718
    %3590 = vmatprep.subr.mxu0 %v2722
    %3591 = vmatpush1.msra.mxu0 %v2721
    %3592 = vmatprep.subr.mxu0 %v2725
    %3593 = vmatpush1.msra.mxu0 %v2724
    %3594 = vmatprep.subr.mxu0 %v2728
    %3595 = vmatpush1.msra.mxu0 %v2727
    %3596 = vmatprep.subr.mxu0 %v2731
    %3597 = vmatpush1.msra.mxu0 %v2730
    %3598 = vmatprep.subr.mxu0 %v2734
    %3599 = vmatpush1.msra.mxu0 %v2733
    %3600 = vmatprep.subr.mxu0 %v2737
    %3601 = vmatpush1.msra.mxu0 %v2736
    %3602 = vmatprep.subr.mxu0 %v2740
    %3603 = vmatpush1.msra.mxu0 %v2739
    %3604 = vmatprep.subr.mxu0 %v2743
    %3605 = vmatpush1.msra.mxu0 %v2742
    %3606 = vmatprep.subr.mxu0 %v2746
    %3607 = vmatpush1.msra.mxu0 %v2745
    %3608 = vmatprep.subr.mxu0 %v2749
    %3609 = vmatpush1.msra.mxu0 %v2748
    %3610 = vmatprep.subr.mxu0 %v2752
    %3611 = vmatpush1.msra.mxu0 %v2751
    %3612 = vmatprep.subr.mxu0 %v2755
    %3613 = vmatpush1.msra.mxu0 %v2754
    %3614 = vmatprep.subr.mxu0 %v2758
    %3615 = vmatpush1.msra.mxu0 %v2757
    %3616 = vmatprep.subr.mxu0 %v2761
    %3617 = vmatpush1.msra.mxu0 %v2760
    %3618 = vmatprep.subr.mxu0 %v2764
    %3619 = vmatpush1.msra.mxu0 %v2763
    %3620 = vmatprep.subr.mxu0 %v2767
    %3621 = vmatpush1.msra.mxu0 %v2766
    %3622 = vmatprep.subr.mxu0 %v2770
    %3623 = vmatpush1.msra.mxu0 %v2769
    %3624 = vmatprep.subr.mxu0 %v2773
    %3625 = vmatpush1.msra.mxu0 %v2772
    %3626 = vmatprep.subr.mxu0 %v2776
    %3627 = vmatpush1.msra.mxu0 %v2775
    %3628 = vmatprep.subr.mxu0 %v2779
    %3629 = vmatpush1.msra.mxu0 %v2778
    %3630 = vmatprep.subr.mxu0 %v2782
    %3631 = vmatpush1.msra.mxu0 %v2781
    %3632 = vmatprep.subr.mxu0 %v2785
    %3633 = vmatpush1.msra.mxu0 %v2784
    %3634 = vmatprep.subr.mxu0 %v2788
    %3635 = vmatpush1.msra.mxu0 %v2787
    %3636 = vmatprep.subr.mxu0 %v2791
    %3637 = vmatpush1.msra.mxu0 %v2790
    %3638 = vmatprep.subr.mxu0 %v2794
    %3639 = vmatpush1.msra.mxu0 %v2793
    %3640 = vmatprep.subr.mxu0 %v2797
    %3641 = vmatpush1.msra.mxu0 %v2796
    %3642 = vmatprep.subr.mxu0 %v2800
    %3643 = vmatpush1.msra.mxu0 %v2799
    %3644 = vmatprep.subr.mxu0 %v2803
    %3645 = vmatpush1.msra.mxu0 %v2802
    %3646 = vmatprep.subr.mxu0 %v2806
    %3647 = vmatpush1.msra.mxu0 %v2805
    %3648 = vmatprep.mubr.f32.mxu0 %v2424
    %3649 = vmatmul.mubr.f32.gmra.mrb[0].mxu0 %v2392
    %v3650 = vpop.f32.mrb[0].mxu0
    %v3651 = vadd.f32 %v3394, %v3650
    %v3652 = vpop.f32.mrb[0].mxu0
    %v3653 = vadd.f32 %v3396, %v3652
    %3654 = vmatprep.mubr.f32.mxu0 %v2425
    %3655 = vmatmul.mubr.f32.gmra.mrb[0].mxu0 %v2393
    %v3656 = vpop.f32.mrb[0].mxu0
    %v3657 = vadd.f32 %v3400, %v3656
    %v3658 = vpop.f32.mrb[0].mxu0
    %v3659 = vadd.f32 %v3402, %v3658
    %3660 = vmatprep.mubr.f32.mxu0 %v2426
    %3661 = vmatmul.mubr.f32.gmra.mrb[0].mxu0 %v2394
    %v3662 = vpop.f32.mrb[0].mxu0
    %v3663 = vadd.f32 %v3406, %v3662
    %v3664 = vpop.f32.mrb[0].mxu0
    %v3665 = vadd.f32 %v3408, %v3664
    %3666 = vmatprep.mubr.f32.mxu0 %v2427
    %3667 = vmatmul.mubr.f32.gmra.mrb[0].mxu0 %v2395
    %v3668 = vpop.f32.mrb[0].mxu0
    %v3669 = vadd.f32 %v3412, %v3668
    %v3670 = vpop.f32.mrb[0].mxu0
    %v3671 = vadd.f32 %v3414, %v3670
    %3672 = vmatprep.mubr.f32.mxu0 %v2428
    %3673 = vmatmul.mubr.f32.gmra.mrb[0].mxu0 %v2396
    %v3674 = vpop.f32.mrb[0].mxu0
    %v3675 = vadd.f32 %v3418, %v3674
    %v3676 = vpop.f32.mrb[0].mxu0
    %v3677 = vadd.f32 %v3420, %v3676
    %3678 = vmatprep.mubr.f32.mxu0 %v2429
    %3679 = vmatmul.mubr.f32.gmra.mrb[0].mxu0 %v2397
    %v3680 = vpop.f32.mrb[0].mxu0
    %v3681 = vadd.f32 %v3424, %v3680
    %v3682 = vpop.f32.mrb[0].mxu0
    %v3683 = vadd.f32 %v3426, %v3682
    %3684 = vmatprep.mubr.f32.mxu0 %v2430
    %3685 = vmatmul.mubr.f32.gmra.mrb[0].mxu0 %v2398
    %v3686 = vpop.f32.mrb[0].mxu0
    %v3687 = vadd.f32 %v3430, %v3686
    %v3688 = vpop.f32.mrb[0].mxu0
    %v3689 = vadd.f32 %v3432, %v3688
    %3690 = vmatprep.mubr.f32.mxu0 %v2431
    %3691 = vmatmul.mubr.f32.gmra.mrb[0].mxu0 %v2399
    %v3692 = vpop.f32.mrb[0].mxu0
    %v3693 = vadd.f32 %v3436, %v3692
    %v3694 = vpop.f32.mrb[0].mxu0
    %v3695 = vadd.f32 %v3438, %v3694
    %3696 = vmatprep.mubr.f32.mxu0 %v2432
    %3697 = vmatmul.mubr.f32.gmra.mrb[0].mxu0 %v2400
    %v3698 = vpop.f32.mrb[0].mxu0
    %v3699 = vadd.f32 %v3442, %v3698
    %v3700 = vpop.f32.mrb[0].mxu0
    %v3701 = vadd.f32 %v3444, %v3700
    %3702 = vmatprep.mubr.f32.mxu0 %v2433
    %3703 = vmatmul.mubr.f32.gmra.mrb[0].mxu0 %v2401
    %v3704 = vpop.f32.mrb[0].mxu0
    %v3705 = vadd.f32 %v3448, %v3704
    %v3706 = vpop.f32.mrb[0].mxu0
    %v3707 = vadd.f32 %v3450, %v3706
    %3708 = vmatprep.mubr.f32.mxu0 %v2434
    %3709 = vmatmul.mubr.f32.gmra.mrb[0].mxu0 %v2402
    %v3710 = vpop.f32.mrb[0].mxu0
    %v3711 = vadd.f32 %v3454, %v3710
    %v3712 = vpop.f32.mrb[0].mxu0
    %v3713 = vadd.f32 %v3456, %v3712
    %3714 = vmatprep.mubr.f32.mxu0 %v2435
    %3715 = vmatmul.mubr.f32.gmra.mrb[0].mxu0 %v2403
    %v3716 = vpop.f32.mrb[0].mxu0
    %v3717 = vadd.f32 %v3460, %v3716
    %v3718 = vpop.f32.mrb[0].mxu0
    %v3719 = vadd.f32 %v3462, %v3718
    %3720 = vmatprep.mubr.f32.mxu0 %v2436
    %3721 = vmatmul.mubr.f32.gmra.mrb[0].mxu0 %v2404
    %v3722 = vpop.f32.mrb[0].mxu0
    %v3723 = vadd.f32 %v3466, %v3722
    %v3724 = vpop.f32.mrb[0].mxu0
    %v3725 = vadd.f32 %v3468, %v3724
    %3726 = vmatprep.mubr.f32.mxu0 %v2437
    %3727 = vmatmul.mubr.f32.gmra.mrb[0].mxu0 %v2405
    %v3728 = vpop.f32.mrb[0].mxu0
    %v3729 = vadd.f32 %v3472, %v3728
    %v3730 = vpop.f32.mrb[0].mxu0
    %v3731 = vadd.f32 %v3474, %v3730
    %3732 = vmatprep.mubr.f32.mxu0 %v2438
    %3733 = vmatmul.mubr.f32.gmra.mrb[0].mxu0 %v2406
    %v3734 = vpop.f32.mrb[0].mxu0
    %v3735 = vadd.f32 %v3478, %v3734
    %v3736 = vpop.f32.mrb[0].mxu0
    %v3737 = vadd.f32 %v3480, %v3736
    %3738 = vmatprep.mubr.f32.mxu0 %v2439
    %3739 = vmatmul.mubr.f32.gmra.mrb[0].mxu0 %v2407
    %v3740 = vpop.f32.mrb[0].mxu0
    %v3741 = vadd.f32 %v3484, %v3740
    %v3742 = vpop.f32.mrb[0].mxu0
    %v3743 = vadd.f32 %v3486, %v3742
    %3744 = vmatprep.mubr.f32.mxu0 %v2440
    %3745 = vmatmul.mubr.f32.gmra.mrb[0].mxu0 %v2408
    %v3746 = vpop.f32.mrb[0].mxu0
    %v3747 = vadd.f32 %v3490, %v3746
    %v3748 = vpop.f32.mrb[0].mxu0
    %v3749 = vadd.f32 %v3492, %v3748
    %3750 = vmatprep.mubr.f32.mxu0 %v2441
    %3751 = vmatmul.mubr.f32.gmra.mrb[0].mxu0 %v2409
    %v3752 = vpop.f32.mrb[0].mxu0
    %v3753 = vadd.f32 %v3496, %v3752
    %v3754 = vpop.f32.mrb[0].mxu0
    %v3755 = vadd.f32 %v3498, %v3754
    %3756 = vmatprep.mubr.f32.mxu0 %v2442
    %3757 = vmatmul.mubr.f32.gmra.mrb[0].mxu0 %v2410
    %v3758 = vpop.f32.mrb[0].mxu0
    %v3759 = vadd.f32 %v3502, %v3758
    %v3760 = vpop.f32.mrb[0].mxu0
    %v3761 = vadd.f32 %v3504, %v3760
    %3762 = vmatprep.mubr.f32.mxu0 %v2443
    %3763 = vmatmul.mubr.f32.gmra.mrb[0].mxu0 %v2411
    %v3764 = vpop.f32.mrb[0].mxu0
    %v3765 = vadd.f32 %v3508, %v3764
    %v3766 = vpop.f32.mrb[0].mxu0
    %v3767 = vadd.f32 %v3510, %v3766
    %3768 = vmatprep.mubr.f32.mxu0 %v2444
    %3769 = vmatmul.mubr.f32.gmra.mrb[0].mxu0 %v2412
    %v3770 = vpop.f32.mrb[0].mxu0
    %v3771 = vadd.f32 %v3514, %v3770
    %v3772 = vpop.f32.mrb[0].mxu0
    %v3773 = vadd.f32 %v3516, %v3772
    %3774 = vmatprep.mubr.f32.mxu0 %v2445
    %3775 = vmatmul.mubr.f32.gmra.mrb[0].mxu0 %v2413
    %v3776 = vpop.f32.mrb[0].mxu0
    %v3777 = vadd.f32 %v3520, %v3776
    %v3778 = vpop.f32.mrb[0].mxu0
    %v3779 = vadd.f32 %v3522, %v3778
    %3780 = vmatprep.mubr.f32.mxu0 %v2446
    %3781 = vmatmul.mubr.f32.gmra.mrb[0].mxu0 %v2414
    %v3782 = vpop.f32.mrb[0].mxu0
    %v3783 = vadd.f32 %v3526, %v3782
    %v3784 = vpop.f32.mrb[0].mxu0
    %v3785 = vadd.f32 %v3528, %v3784
    %3786 = vmatprep.mubr.f32.mxu0 %v2447
    %3787 = vmatmul.mubr.f32.gmra.mrb[0].mxu0 %v2415
    %v3788 = vpop.f32.mrb[0].mxu0
    %v3789 = vadd.f32 %v3532, %v3788
    %v3790 = vpop.f32.mrb[0].mxu0
    %v3791 = vadd.f32 %v3534, %v3790
    %3792 = vmatprep.mubr.f32.mxu0 %v2448
    %3793 = vmatmul.mubr.f32.gmra.mrb[0].mxu0 %v2416
    %v3794 = vpop.f32.mrb[0].mxu0
    %v3795 = vadd.f32 %v3538, %v3794
    %v3796 = vpop.f32.mrb[0].mxu0
    %v3797 = vadd.f32 %v3540, %v3796
    %3798 = vmatprep.mubr.f32.mxu0 %v2449
    %3799 = vmatmul.mubr.f32.gmra.mrb[0].mxu0 %v2417
    %v3800 = vpop.f32.mrb[0].mxu0
    %v3801 = vadd.f32 %v3544, %v3800
    %v3802 = vpop.f32.mrb[0].mxu0
    %v3803 = vadd.f32 %v3546, %v3802
    %3804 = vmatprep.mubr.f32.mxu0 %v2450
    %3805 = vmatmul.mubr.f32.gmra.mrb[0].mxu0 %v2418
    %v3806 = vpop.f32.mrb[0].mxu0
    %v3807 = vadd.f32 %v3550, %v3806
    %v3808 = vpop.f32.mrb[0].mxu0
    %v3809 = vadd.f32 %v3552, %v3808
    %3810 = vmatprep.mubr.f32.mxu0 %v2451
    %3811 = vmatmul.mubr.f32.gmra.mrb[0].mxu0 %v2419
    %v3812 = vpop.f32.mrb[0].mxu0
    %v3813 = vadd.f32 %v3556, %v3812
    %v3814 = vpop.f32.mrb[0].mxu0
    %v3815 = vadd.f32 %v3558, %v3814
    %3816 = vmatprep.mubr.f32.mxu0 %v2452
    %3817 = vmatmul.mubr.f32.gmra.mrb[0].mxu0 %v2420
    %v3818 = vpop.f32.mrb[0].mxu0
    %v3819 = vadd.f32 %v3562, %v3818
    %v3820 = vpop.f32.mrb[0].mxu0
    %v3821 = vadd.f32 %v3564, %v3820
    %3822 = vmatprep.mubr.f32.mxu0 %v2453
    %3823 = vmatmul.mubr.f32.gmra.mrb[0].mxu0 %v2421
    %v3824 = vpop.f32.mrb[0].mxu0
    %v3825 = vadd.f32 %v3568, %v3824
    %v3826 = vpop.f32.mrb[0].mxu0
    %v3827 = vadd.f32 %v3570, %v3826
    %3828 = vmatprep.mubr.f32.mxu0 %v2454
    %3829 = vmatmul.mubr.f32.gmra.mrb[0].mxu0 %v2422
    %v3830 = vpop.f32.mrb[0].mxu0
    %v3831 = vadd.f32 %v3574, %v3830
    %v3832 = vpop.f32.mrb[0].mxu0
    %v3833 = vadd.f32 %v3576, %v3832
    %3834 = vmatprep.mubr.f32.mxu0 %v2455
    %3835 = vmatmul.mubr.f32.gmra.mrb[0].mxu0 %v2423
    %v3836 = vpop.f32.mrb[0].mxu0
    %v3837 = vadd.f32 %v3580, %v3836
    %v3838 = vpop.f32.mrb[0].mxu0
    %v3839 = vadd.f32 %v3582, %v3838
    %3840 = vdwg.mxu0
    %3841 = vmatprep.subr.mxu0 %v2809
    %3842 = vmatpush1.msra.mxu0 %v2808
    %3843 = vmatprep.subr.mxu0 %v2812
    %3844 = vmatpush1.msra.mxu0 %v2811
    %3845 = vmatprep.subr.mxu0 %v2815
    %3846 = vmatpush1.msra.mxu0 %v2814
    %3847 = vmatprep.subr.mxu0 %v2818
    %3848 = vmatpush1.msra.mxu0 %v2817
    %3849 = vmatprep.subr.mxu0 %v2821
    %3850 = vmatpush1.msra.mxu0 %v2820
    %3851 = vmatprep.subr.mxu0 %v2824
    %3852 = vmatpush1.msra.mxu0 %v2823
    %3853 = vmatprep.subr.mxu0 %v2827
    %3854 = vmatpush1.msra.mxu0 %v2826
    %3855 = vmatprep.subr.mxu0 %v2830
    %3856 = vmatpush1.msra.mxu0 %v2829
    %3857 = vmatprep.subr.mxu0 %v2833
    %3858 = vmatpush1.msra.mxu0 %v2832
    %3859 = vmatprep.subr.mxu0 %v2836
    %3860 = vmatpush1.msra.mxu0 %v2835
    %3861 = vmatprep.subr.mxu0 %v2839
    %3862 = vmatpush1.msra.mxu0 %v2838
    %3863 = vmatprep.subr.mxu0 %v2842
    %3864 = vmatpush1.msra.mxu0 %v2841
    %3865 = vmatprep.subr.mxu0 %v2845
    %3866 = vmatpush1.msra.mxu0 %v2844
    %3867 = vmatprep.subr.mxu0 %v2848
    %3868 = vmatpush1.msra.mxu0 %v2847
    %3869 = vmatprep.subr.mxu0 %v2851
    %3870 = vmatpush1.msra.mxu0 %v2850
    %3871 = vmatprep.subr.mxu0 %v2854
    %3872 = vmatpush1.msra.mxu0 %v2853
    %3873 = vmatprep.subr.mxu0 %v2857
    %3874 = vmatpush1.msra.mxu0 %v2856
    %3875 = vmatprep.subr.mxu0 %v2860
    %3876 = vmatpush1.msra.mxu0 %v2859
    %3877 = vmatprep.subr.mxu0 %v2863
    %3878 = vmatpush1.msra.mxu0 %v2862
    %3879 = vmatprep.subr.mxu0 %v2866
    %3880 = vmatpush1.msra.mxu0 %v2865
    %3881 = vmatprep.subr.mxu0 %v2869
    %3882 = vmatpush1.msra.mxu0 %v2868
    %3883 = vmatprep.subr.mxu0 %v2872
    %3884 = vmatpush1.msra.mxu0 %v2871
    %3885 = vmatprep.subr.mxu0 %v2875
    %3886 = vmatpush1.msra.mxu0 %v2874
    %3887 = vmatprep.subr.mxu0 %v2878
    %3888 = vmatpush1.msra.mxu0 %v2877
    %3889 = vmatprep.subr.mxu0 %v2881
    %3890 = vmatpush1.msra.mxu0 %v2880
    %3891 = vmatprep.subr.mxu0 %v2884
    %3892 = vmatpush1.msra.mxu0 %v2883
    %3893 = vmatprep.subr.mxu0 %v2887
    %3894 = vmatpush1.msra.mxu0 %v2886
    %3895 = vmatprep.subr.mxu0 %v2890
    %3896 = vmatpush1.msra.mxu0 %v2889
    %3897 = vmatprep.subr.mxu0 %v2893
    %3898 = vmatpush1.msra.mxu0 %v2892
    %3899 = vmatprep.subr.mxu0 %v2896
    %3900 = vmatpush1.msra.mxu0 %v2895
    %3901 = vmatprep.subr.mxu0 %v2899
    %3902 = vmatpush1.msra.mxu0 %v2898
    %3903 = vmatprep.subr.mxu0 %v2902
    %3904 = vmatpush1.msra.mxu0 %v2901
    %3905 = vmatprep.mubr.f32.mxu0 %v2488
    %3906 = vmatmul.mubr.f32.gmra.mrb[0].mxu0 %v2456
    %v3907 = vpop.f32.mrb[0].mxu0
    %v3908 = vadd.f32 %v3651, %v3907
    %v3909 = vpop.f32.mrb[0].mxu0
    %v3910 = vadd.f32 %v3653, %v3909
    %3911 = vmatprep.mubr.f32.mxu0 %v2489
    %3912 = vmatmul.mubr.f32.gmra.mrb[0].mxu0 %v2457
    %v3913 = vpop.f32.mrb[0].mxu0
    %v3914 = vadd.f32 %v3657, %v3913
    %v3915 = vpop.f32.mrb[0].mxu0
    %v3916 = vadd.f32 %v3659, %v3915
    %3917 = vmatprep.mubr.f32.mxu0 %v2490
    %3918 = vmatmul.mubr.f32.gmra.mrb[0].mxu0 %v2458
    %v3919 = vpop.f32.mrb[0].mxu0
    %v3920 = vadd.f32 %v3663, %v3919
    %v3921 = vpop.f32.mrb[0].mxu0
    %v3922 = vadd.f32 %v3665, %v3921
    %3923 = vmatprep.mubr.f32.mxu0 %v2491
    %3924 = vmatmul.mubr.f32.gmra.mrb[0].mxu0 %v2459
    %v3925 = vpop.f32.mrb[0].mxu0
    %v3926 = vadd.f32 %v3669, %v3925
    %v3927 = vpop.f32.mrb[0].mxu0
    %v3928 = vadd.f32 %v3671, %v3927
    %3929 = vmatprep.mubr.f32.mxu0 %v2492
    %3930 = vmatmul.mubr.f32.gmra.mrb[0].mxu0 %v2460
    %v3931 = vpop.f32.mrb[0].mxu0
    %v3932 = vadd.f32 %v3675, %v3931
    %v3933 = vpop.f32.mrb[0].mxu0
    %v3934 = vadd.f32 %v3677, %v3933
    %3935 = vmatprep.mubr.f32.mxu0 %v2493
    %3936 = vmatmul.mubr.f32.gmra.mrb[0].mxu0 %v2461
    %v3937 = vpop.f32.mrb[0].mxu0
    %v3938 = vadd.f32 %v3681, %v3937
    %v3939 = vpop.f32.mrb[0].mxu0
    %v3940 = vadd.f32 %v3683, %v3939
    %3941 = vmatprep.mubr.f32.mxu0 %v2494
    %3942 = vmatmul.mubr.f32.gmra.mrb[0].mxu0 %v2462
    %v3943 = vpop.f32.mrb[0].mxu0
    %v3944 = vadd.f32 %v3687, %v3943
    %v3945 = vpop.f32.mrb[0].mxu0
    %v3946 = vadd.f32 %v3689, %v3945
    %3947 = vmatprep.mubr.f32.mxu0 %v2495
    %3948 = vmatmul.mubr.f32.gmra.mrb[0].mxu0 %v2463
    %v3949 = vpop.f32.mrb[0].mxu0
    %v3950 = vadd.f32 %v3693, %v3949
    %v3951 = vpop.f32.mrb[0].mxu0
    %v3952 = vadd.f32 %v3695, %v3951
    %3953 = vmatprep.mubr.f32.mxu0 %v2496
    %3954 = vmatmul.mubr.f32.gmra.mrb[0].mxu0 %v2464
    %v3955 = vpop.f32.mrb[0].mxu0
    %v3956 = vadd.f32 %v3699, %v3955
    %v3957 = vpop.f32.mrb[0].mxu0
    %v3958 = vadd.f32 %v3701, %v3957
    %3959 = vmatprep.mubr.f32.mxu0 %v2497
    %3960 = vmatmul.mubr.f32.gmra.mrb[0].mxu0 %v2465
    %v3961 = vpop.f32.mrb[0].mxu0
    %v3962 = vadd.f32 %v3705, %v3961
    %v3963 = vpop.f32.mrb[0].mxu0
    %v3964 = vadd.f32 %v3707, %v3963
    %3965 = vmatprep.mubr.f32.mxu0 %v2498
    %3966 = vmatmul.mubr.f32.gmra.mrb[0].mxu0 %v2466
    %v3967 = vpop.f32.mrb[0].mxu0
    %v3968 = vadd.f32 %v3711, %v3967
    %v3969 = vpop.f32.mrb[0].mxu0
    %v3970 = vadd.f32 %v3713, %v3969
    %3971 = vmatprep.mubr.f32.mxu0 %v2499
    %3972 = vmatmul.mubr.f32.gmra.mrb[0].mxu0 %v2467
    %v3973 = vpop.f32.mrb[0].mxu0
    %v3974 = vadd.f32 %v3717, %v3973
    %v3975 = vpop.f32.mrb[0].mxu0
    %v3976 = vadd.f32 %v3719, %v3975
    %3977 = vmatprep.mubr.f32.mxu0 %v2500
    %3978 = vmatmul.mubr.f32.gmra.mrb[0].mxu0 %v2468
    %v3979 = vpop.f32.mrb[0].mxu0
    %v3980 = vadd.f32 %v3723, %v3979
    %v3981 = vpop.f32.mrb[0].mxu0
    %v3982 = vadd.f32 %v3725, %v3981
    %3983 = vmatprep.mubr.f32.mxu0 %v2501
    %3984 = vmatmul.mubr.f32.gmra.mrb[0].mxu0 %v2469
    %v3985 = vpop.f32.mrb[0].mxu0
    %v3986 = vadd.f32 %v3729, %v3985
    %v3987 = vpop.f32.mrb[0].mxu0
    %v3988 = vadd.f32 %v3731, %v3987
    %3989 = vmatprep.mubr.f32.mxu0 %v2502
    %3990 = vmatmul.mubr.f32.gmra.mrb[0].mxu0 %v2470
    %v3991 = vpop.f32.mrb[0].mxu0
    %v3992 = vadd.f32 %v3735, %v3991
    %v3993 = vpop.f32.mrb[0].mxu0
    %v3994 = vadd.f32 %v3737, %v3993
    %3995 = vmatprep.mubr.f32.mxu0 %v2503
    %3996 = vmatmul.mubr.f32.gmra.mrb[0].mxu0 %v2471
    %v3997 = vpop.f32.mrb[0].mxu0
    %v3998 = vadd.f32 %v3741, %v3997
    %v3999 = vpop.f32.mrb[0].mxu0
    %v4000 = vadd.f32 %v3743, %v3999
    %4001 = vmatprep.mubr.f32.mxu0 %v2504
    %4002 = vmatmul.mubr.f32.gmra.mrb[0].mxu0 %v2472
    %v4003 = vpop.f32.mrb[0].mxu0
    %v4004 = vadd.f32 %v3747, %v4003
    %v4005 = vpop.f32.mrb[0].mxu0
    %v4006 = vadd.f32 %v3749, %v4005
    %4007 = vmatprep.mubr.f32.mxu0 %v2505
    %4008 = vmatmul.mubr.f32.gmra.mrb[0].mxu0 %v2473
    %v4009 = vpop.f32.mrb[0].mxu0
    %v4010 = vadd.f32 %v3753, %v4009
    %v4011 = vpop.f32.mrb[0].mxu0
    %v4012 = vadd.f32 %v3755, %v4011
    %4013 = vmatprep.mubr.f32.mxu0 %v2506
    %4014 = vmatmul.mubr.f32.gmra.mrb[0].mxu0 %v2474
    %v4015 = vpop.f32.mrb[0].mxu0
    %v4016 = vadd.f32 %v3759, %v4015
    %v4017 = vpop.f32.mrb[0].mxu0
    %v4018 = vadd.f32 %v3761, %v4017
    %4019 = vmatprep.mubr.f32.mxu0 %v2507
    %4020 = vmatmul.mubr.f32.gmra.mrb[0].mxu0 %v2475
    %v4021 = vpop.f32.mrb[0].mxu0
    %v4022 = vadd.f32 %v3765, %v4021
    %v4023 = vpop.f32.mrb[0].mxu0
    %v4024 = vadd.f32 %v3767, %v4023
    %4025 = vmatprep.mubr.f32.mxu0 %v2508
    %4026 = vmatmul.mubr.f32.gmra.mrb[0].mxu0 %v2476
    %v4027 = vpop.f32.mrb[0].mxu0
    %v4028 = vadd.f32 %v3771, %v4027
    %v4029 = vpop.f32.mrb[0].mxu0
    %v4030 = vadd.f32 %v3773, %v4029
    %4031 = vmatprep.mubr.f32.mxu0 %v2509
    %4032 = vmatmul.mubr.f32.gmra.mrb[0].mxu0 %v2477
    %v4033 = vpop.f32.mrb[0].mxu0
    %v4034 = vadd.f32 %v3777, %v4033
    %v4035 = vpop.f32.mrb[0].mxu0
    %v4036 = vadd.f32 %v3779, %v4035
    %4037 = vmatprep.mubr.f32.mxu0 %v2510
    %4038 = vmatmul.mubr.f32.gmra.mrb[0].mxu0 %v2478
    %v4039 = vpop.f32.mrb[0].mxu0
    %v4040 = vadd.f32 %v3783, %v4039
    %v4041 = vpop.f32.mrb[0].mxu0
    %v4042 = vadd.f32 %v3785, %v4041
    %4043 = vmatprep.mubr.f32.mxu0 %v2511
    %4044 = vmatmul.mubr.f32.gmra.mrb[0].mxu0 %v2479
    %v4045 = vpop.f32.mrb[0].mxu0
    %v4046 = vadd.f32 %v3789, %v4045
    %v4047 = vpop.f32.mrb[0].mxu0
    %v4048 = vadd.f32 %v3791, %v4047
    %4049 = vmatprep.mubr.f32.mxu0 %v2512
    %4050 = vmatmul.mubr.f32.gmra.mrb[0].mxu0 %v2480
    %v4051 = vpop.f32.mrb[0].mxu0
    %v4052 = vadd.f32 %v3795, %v4051
    %v4053 = vpop.f32.mrb[0].mxu0
    %v4054 = vadd.f32 %v3797, %v4053
    %4055 = vmatprep.mubr.f32.mxu0 %v2513
    %4056 = vmatmul.mubr.f32.gmra.mrb[0].mxu0 %v2481
    %v4057 = vpop.f32.mrb[0].mxu0
    %v4058 = vadd.f32 %v3801, %v4057
    %v4059 = vpop.f32.mrb[0].mxu0
    %v4060 = vadd.f32 %v3803, %v4059
    %4061 = vmatprep.mubr.f32.mxu0 %v2514
    %4062 = vmatmul.mubr.f32.gmra.mrb[0].mxu0 %v2482
    %v4063 = vpop.f32.mrb[0].mxu0
    %v4064 = vadd.f32 %v3807, %v4063
    %v4065 = vpop.f32.mrb[0].mxu0
    %v4066 = vadd.f32 %v3809, %v4065
    %4067 = vmatprep.mubr.f32.mxu0 %v2515
    %4068 = vmatmul.mubr.f32.gmra.mrb[0].mxu0 %v2483
    %v4069 = vpop.f32.mrb[0].mxu0
    %v4070 = vadd.f32 %v3813, %v4069
    %v4071 = vpop.f32.mrb[0].mxu0
    %v4072 = vadd.f32 %v3815, %v4071
    %4073 = vmatprep.mubr.f32.mxu0 %v2516
    %4074 = vmatmul.mubr.f32.gmra.mrb[0].mxu0 %v2484
    %v4075 = vpop.f32.mrb[0].mxu0
    %v4076 = vadd.f32 %v3819, %v4075
    %v4077 = vpop.f32.mrb[0].mxu0
    %v4078 = vadd.f32 %v3821, %v4077
    %4079 = vmatprep.mubr.f32.mxu0 %v2517
    %4080 = vmatmul.mubr.f32.gmra.mrb[0].mxu0 %v2485
    %v4081 = vpop.f32.mrb[0].mxu0
    %v4082 = vadd.f32 %v3825, %v4081
    %v4083 = vpop.f32.mrb[0].mxu0
    %v4084 = vadd.f32 %v3827, %v4083
    %4085 = vmatprep.mubr.f32.mxu0 %v2518
    %4086 = vmatmul.mubr.f32.gmra.mrb[0].mxu0 %v2486
    %v4087 = vpop.f32.mrb[0].mxu0
    %v4088 = vadd.f32 %v3831, %v4087
    %v4089 = vpop.f32.mrb[0].mxu0
    %v4090 = vadd.f32 %v3833, %v4089
    %4091 = vmatprep.mubr.f32.mxu0 %v2519
    %4092 = vmatmul.mubr.f32.gmra.mrb[0].mxu0 %v2487
    %v4093 = vpop.f32.mrb[0].mxu0
    %v4094 = vadd.f32 %v3837, %v4093
    %v4095 = vpop.f32.mrb[0].mxu0
    %v4096 = vadd.f32 %v3839, %v4095
    %4097 = vdwg.mxu0
    %4098 = vmatprep.subr.mxu0 %v2905
    %4099 = vmatpush1.msra.mxu0 %v2904
    %4100 = vmatprep.subr.mxu0 %v2908
    %4101 = vmatpush1.msra.mxu0 %v2907
    %4102 = vmatprep.subr.mxu0 %v2911
    %4103 = vmatpush1.msra.mxu0 %v2910
    %4104 = vmatprep.subr.mxu0 %v2914
    %4105 = vmatpush1.msra.mxu0 %v2913
    %4106 = vmatprep.subr.mxu0 %v2917
    %4107 = vmatpush1.msra.mxu0 %v2916
    %4108 = vmatprep.subr.mxu0 %v2920
    %4109 = vmatpush1.msra.mxu0 %v2919
    %4110 = vmatprep.subr.mxu0 %v2923
    %4111 = vmatpush1.msra.mxu0 %v2922
    %4112 = vmatprep.subr.mxu0 %v2926
    %4113 = vmatpush1.msra.mxu0 %v2925
    %4114 = vmatprep.subr.mxu0 %v2929
    %4115 = vmatpush1.msra.mxu0 %v2928
    %4116 = vmatprep.subr.mxu0 %v2932
    %4117 = vmatpush1.msra.mxu0 %v2931
    %4118 = vmatprep.subr.mxu0 %v2935
    %4119 = vmatpush1.msra.mxu0 %v2934
    %4120 = vmatprep.subr.mxu0 %v2938
    %4121 = vmatpush1.msra.mxu0 %v2937
    %4122 = vmatprep.subr.mxu0 %v2941
    %4123 = vmatpush1.msra.mxu0 %v2940
    %4124 = vmatprep.subr.mxu0 %v2944
    %4125 = vmatpush1.msra.mxu0 %v2943
    %4126 = vmatprep.subr.mxu0 %v2947
    %4127 = vmatpush1.msra.mxu0 %v2946
    %4128 = vmatprep.subr.mxu0 %v2950
    %4129 = vmatpush1.msra.mxu0 %v2949
    %4130 = vmatprep.subr.mxu0 %v2953
    %4131 = vmatpush1.msra.mxu0 %v2952
    %4132 = vmatprep.subr.mxu0 %v2956
    %4133 = vmatpush1.msra.mxu0 %v2955
    %4134 = vmatprep.subr.mxu0 %v2959
    %4135 = vmatpush1.msra.mxu0 %v2958
    %4136 = vmatprep.subr.mxu0 %v2962
    %4137 = vmatpush1.msra.mxu0 %v2961
    %4138 = vmatprep.subr.mxu0 %v2965
    %4139 = vmatpush1.msra.mxu0 %v2964
    %4140 = vmatprep.subr.mxu0 %v2968
    %4141 = vmatpush1.msra.mxu0 %v2967
    %4142 = vmatprep.subr.mxu0 %v2971
    %4143 = vmatpush1.msra.mxu0 %v2970
    %4144 = vmatprep.subr.mxu0 %v2974
    %4145 = vmatpush1.msra.mxu0 %v2973
    %4146 = vmatprep.subr.mxu0 %v2977
    %4147 = vmatpush1.msra.mxu0 %v2976
    %4148 = vmatprep.subr.mxu0 %v2980
    %4149 = vmatpush1.msra.mxu0 %v2979
    %4150 = vmatprep.subr.mxu0 %v2983
    %4151 = vmatpush1.msra.mxu0 %v2982
    %4152 = vmatprep.subr.mxu0 %v2986
    %4153 = vmatpush1.msra.mxu0 %v2985
    %4154 = vmatprep.subr.mxu0 %v2989
    %4155 = vmatpush1.msra.mxu0 %v2988
    %4156 = vmatprep.subr.mxu0 %v2992
    %4157 = vmatpush1.msra.mxu0 %v2991
    %4158 = vmatprep.subr.mxu0 %v2995
    %4159 = vmatpush1.msra.mxu0 %v2994
    %4160 = vmatprep.subr.mxu0 %v2998
    %4161 = vmatpush1.msra.mxu0 %v2997
    %4162 = vmatprep.mubr.f32.mxu0 %v499
    %4163 = vmatmul.mubr.f32.gmra.mrb[0].mxu0 %v2200
    %v4164 = vpop.f32.mrb[0].mxu0
    %v4165 = vadd.f32 %v3908, %v4164
    %v4166 = vpop.f32.mrb[0].mxu0
    %v4167 = vadd.f32 %v3910, %v4166
    %4168 = vmatprep.mubr.f32.mxu0 %v504
    %4169 = vmatmul.mubr.f32.gmra.mrb[0].mxu0 %v2201
    %v4170 = vpop.f32.mrb[0].mxu0
    %v4171 = vadd.f32 %v3914, %v4170
    %v4172 = vpop.f32.mrb[0].mxu0
    %v4173 = vadd.f32 %v3916, %v4172
    %4174 = vmatprep.mubr.f32.mxu0 %v509
    %4175 = vmatmul.mubr.f32.gmra.mrb[0].mxu0 %v2202
    %v4176 = vpop.f32.mrb[0].mxu0
    %v4177 = vadd.f32 %v3920, %v4176
    %v4178 = vpop.f32.mrb[0].mxu0
    %v4179 = vadd.f32 %v3922, %v4178
    %4180 = vmatprep.mubr.f32.mxu0 %v514
    %4181 = vmatmul.mubr.f32.gmra.mrb[0].mxu0 %v2203
    %v4182 = vpop.f32.mrb[0].mxu0
    %v4183 = vadd.f32 %v3926, %v4182
    %v4184 = vpop.f32.mrb[0].mxu0
    %v4185 = vadd.f32 %v3928, %v4184
    %4186 = vmatprep.mubr.f32.mxu0 %v519
    %4187 = vmatmul.mubr.f32.gmra.mrb[0].mxu0 %v2204
    %v4188 = vpop.f32.mrb[0].mxu0
    %v4189 = vadd.f32 %v3932, %v4188
    %v4190 = vpop.f32.mrb[0].mxu0
    %v4191 = vadd.f32 %v3934, %v4190
    %4192 = vmatprep.mubr.f32.mxu0 %v524
    %4193 = vmatmul.mubr.f32.gmra.mrb[0].mxu0 %v2205
    %v4194 = vpop.f32.mrb[0].mxu0
    %v4195 = vadd.f32 %v3938, %v4194
    %v4196 = vpop.f32.mrb[0].mxu0
    %v4197 = vadd.f32 %v3940, %v4196
    %4198 = vmatprep.mubr.f32.mxu0 %v529
    %4199 = vmatmul.mubr.f32.gmra.mrb[0].mxu0 %v2206
    %v4200 = vpop.f32.mrb[0].mxu0
    %v4201 = vadd.f32 %v3944, %v4200
    %v4202 = vpop.f32.mrb[0].mxu0
    %v4203 = vadd.f32 %v3946, %v4202
    %4204 = vmatprep.mubr.f32.mxu0 %v534
    %4205 = vmatmul.mubr.f32.gmra.mrb[0].mxu0 %v2207
    %v4206 = vpop.f32.mrb[0].mxu0
    %v4207 = vadd.f32 %v3950, %v4206
    %v4208 = vpop.f32.mrb[0].mxu0
    %v4209 = vadd.f32 %v3952, %v4208
    %4210 = vmatprep.mubr.f32.mxu0 %v539
    %4211 = vmatmul.mubr.f32.gmra.mrb[0].mxu0 %v2208
    %v4212 = vpop.f32.mrb[0].mxu0
    %v4213 = vadd.f32 %v3956, %v4212
    %v4214 = vpop.f32.mrb[0].mxu0
    %v4215 = vadd.f32 %v3958, %v4214
    %4216 = vmatprep.mubr.f32.mxu0 %v544
    %4217 = vmatmul.mubr.f32.gmra.mrb[0].mxu0 %v2209
    %v4218 = vpop.f32.mrb[0].mxu0
    %v4219 = vadd.f32 %v3962, %v4218
    %v4220 = vpop.f32.mrb[0].mxu0
    %v4221 = vadd.f32 %v3964, %v4220
    %4222 = vmatprep.mubr.f32.mxu0 %v549
    %4223 = vmatmul.mubr.f32.gmra.mrb[0].mxu0 %v2210
    %v4224 = vpop.f32.mrb[0].mxu0
    %v4225 = vadd.f32 %v3968, %v4224
    %v4226 = vpop.f32.mrb[0].mxu0
    %v4227 = vadd.f32 %v3970, %v4226
    %4228 = vmatprep.mubr.f32.mxu0 %v554
    %4229 = vmatmul.mubr.f32.gmra.mrb[0].mxu0 %v2211
    %v4230 = vpop.f32.mrb[0].mxu0
    %v4231 = vadd.f32 %v3974, %v4230
    %v4232 = vpop.f32.mrb[0].mxu0
    %v4233 = vadd.f32 %v3976, %v4232
    %4234 = vmatprep.mubr.f32.mxu0 %v559
    %4235 = vmatmul.mubr.f32.gmra.mrb[0].mxu0 %v2212
    %v4236 = vpop.f32.mrb[0].mxu0
    %v4237 = vadd.f32 %v3980, %v4236
    %v4238 = vpop.f32.mrb[0].mxu0
    %v4239 = vadd.f32 %v3982, %v4238
    %4240 = vmatprep.mubr.f32.mxu0 %v564
    %4241 = vmatmul.mubr.f32.gmra.mrb[0].mxu0 %v2213
    %v4242 = vpop.f32.mrb[0].mxu0
    %v4243 = vadd.f32 %v3986, %v4242
    %v4244 = vpop.f32.mrb[0].mxu0
    %v4245 = vadd.f32 %v3988, %v4244
    %4246 = vmatprep.mubr.f32.mxu0 %v569
    %4247 = vmatmul.mubr.f32.gmra.mrb[0].mxu0 %v2214
    %v4248 = vpop.f32.mrb[0].mxu0
    %v4249 = vadd.f32 %v3992, %v4248
    %v4250 = vpop.f32.mrb[0].mxu0
    %v4251 = vadd.f32 %v3994, %v4250
    %4252 = vmatprep.mubr.f32.mxu0 %v574
    %4253 = vmatmul.mubr.f32.gmra.mrb[0].mxu0 %v2215
    %v4254 = vpop.f32.mrb[0].mxu0
    %v4255 = vadd.f32 %v3998, %v4254
    %v4256 = vpop.f32.mrb[0].mxu0
    %v4257 = vadd.f32 %v4000, %v4256
    %4258 = vmatprep.mubr.f32.mxu0 %v579
    %4259 = vmatmul.mubr.f32.gmra.mrb[0].mxu0 %v2216
    %v4260 = vpop.f32.mrb[0].mxu0
    %v4261 = vadd.f32 %v4004, %v4260
    %v4262 = vpop.f32.mrb[0].mxu0
    %v4263 = vadd.f32 %v4006, %v4262
    %4264 = vmatprep.mubr.f32.mxu0 %v584
    %4265 = vmatmul.mubr.f32.gmra.mrb[0].mxu0 %v2217
    %v4266 = vpop.f32.mrb[0].mxu0
    %v4267 = vadd.f32 %v4010, %v4266
    %v4268 = vpop.f32.mrb[0].mxu0
    %v4269 = vadd.f32 %v4012, %v4268
    %4270 = vmatprep.mubr.f32.mxu0 %v589
    %4271 = vmatmul.mubr.f32.gmra.mrb[0].mxu0 %v2218
    %v4272 = vpop.f32.mrb[0].mxu0
    %v4273 = vadd.f32 %v4016, %v4272
    %v4274 = vpop.f32.mrb[0].mxu0
    %v4275 = vadd.f32 %v4018, %v4274
    %4276 = vmatprep.mubr.f32.mxu0 %v594
    %4277 = vmatmul.mubr.f32.gmra.mrb[0].mxu0 %v2219
    %v4278 = vpop.f32.mrb[0].mxu0
    %v4279 = vadd.f32 %v4022, %v4278
    %v4280 = vpop.f32.mrb[0].mxu0
    %v4281 = vadd.f32 %v4024, %v4280
    %4282 = vmatprep.mubr.f32.mxu0 %v599
    %4283 = vmatmul.mubr.f32.gmra.mrb[0].mxu0 %v2220
    %v4284 = vpop.f32.mrb[0].mxu0
    %v4285 = vadd.f32 %v4028, %v4284
    %v4286 = vpop.f32.mrb[0].mxu0
    %v4287 = vadd.f32 %v4030, %v4286
    %4288 = vmatprep.mubr.f32.mxu0 %v604
    %4289 = vmatmul.mubr.f32.gmra.mrb[0].mxu0 %v2221
    %v4290 = vpop.f32.mrb[0].mxu0
    %v4291 = vadd.f32 %v4034, %v4290
    %v4292 = vpop.f32.mrb[0].mxu0
    %v4293 = vadd.f32 %v4036, %v4292
    %4294 = vmatprep.mubr.f32.mxu0 %v609
    %4295 = vmatmul.mubr.f32.gmra.mrb[0].mxu0 %v2222
    %v4296 = vpop.f32.mrb[0].mxu0
    %v4297 = vadd.f32 %v4040, %v4296
    %v4298 = vpop.f32.mrb[0].mxu0
    %v4299 = vadd.f32 %v4042, %v4298
    %4300 = vmatprep.mubr.f32.mxu0 %v614
    %4301 = vmatmul.mubr.f32.gmra.mrb[0].mxu0 %v2223
    %v4302 = vpop.f32.mrb[0].mxu0
    %v4303 = vadd.f32 %v4046, %v4302
    %v4304 = vpop.f32.mrb[0].mxu0
    %v4305 = vadd.f32 %v4048, %v4304
    %4306 = vmatprep.mubr.f32.mxu0 %v619
    %4307 = vmatmul.mubr.f32.gmra.mrb[0].mxu0 %v2224
    %v4308 = vpop.f32.mrb[0].mxu0
    %v4309 = vadd.f32 %v4052, %v4308
    %v4310 = vpop.f32.mrb[0].mxu0
    %v4311 = vadd.f32 %v4054, %v4310
    %4312 = vmatprep.mubr.f32.mxu0 %v624
    %4313 = vmatmul.mubr.f32.gmra.mrb[0].mxu0 %v2225
    %v4314 = vpop.f32.mrb[0].mxu0
    %v4315 = vadd.f32 %v4058, %v4314
    %v4316 = vpop.f32.mrb[0].mxu0
    %v4317 = vadd.f32 %v4060, %v4316
    %4318 = vmatprep.mubr.f32.mxu0 %v629
    %4319 = vmatmul.mubr.f32.gmra.mrb[0].mxu0 %v2226
    %v4320 = vpop.f32.mrb[0].mxu0
    %v4321 = vadd.f32 %v4064, %v4320
    %v4322 = vpop.f32.mrb[0].mxu0
    %v4323 = vadd.f32 %v4066, %v4322
    %4324 = vmatprep.mubr.f32.mxu0 %v634
    %4325 = vmatmul.mubr.f32.gmra.mrb[0].mxu0 %v2227
    %v4326 = vpop.f32.mrb[0].mxu0
    %v4327 = vadd.f32 %v4070, %v4326
    %v4328 = vpop.f32.mrb[0].mxu0
    %v4329 = vadd.f32 %v4072, %v4328
    %4330 = vmatprep.mubr.f32.mxu0 %v655
    %4331 = vmatmul.mubr.f32.gmra.mrb[0].mxu0 %v2228
    %v4332 = vpop.f32.mrb[0].mxu0
    %v4333 = vadd.f32 %v4076, %v4332
    %v4334 = vpop.f32.mrb[0].mxu0
    %v4335 = vadd.f32 %v4078, %v4334
    %4336 = vmatprep.mubr.f32.mxu0 %v660
    %4337 = vmatmul.mubr.f32.gmra.mrb[0].mxu0 %v2229
    %v4338 = vpop.f32.mrb[0].mxu0
    %v4339 = vadd.f32 %v4082, %v4338
    %v4340 = vpop.f32.mrb[0].mxu0
    %v4341 = vadd.f32 %v4084, %v4340
    %4342 = vmatprep.mubr.f32.mxu0 %v681
    %4343 = vmatmul.mubr.f32.gmra.mrb[0].mxu0 %v2230
    %v4344 = vpop.f32.mrb[0].mxu0
    %v4345 = vadd.f32 %v4088, %v4344
    %v4346 = vpop.f32.mrb[0].mxu0
    %v4347 = vadd.f32 %v4090, %v4346
    %4348 = vmatprep.mubr.f32.mxu0 %v686
    %4349 = vmatmul.mubr.f32.gmra.mrb[0].mxu0 %v2231
    %v4350 = vpop.f32.mrb[0].mxu0
    %v4351 = vadd.f32 %v4094, %v4350
    %v4352 = vpop.f32.mrb[0].mxu0
    %v4353 = vadd.f32 %v4096, %v4352
    %4354 = vdwg.mxu0
    %4355 = vmatprep.subr.mxu0 %v3001
    %4356 = vmatpush1.msra.mxu0 %v3000
    %4357 = vmatprep.subr.mxu0 %v3004
    %4358 = vmatpush1.msra.mxu0 %v3003
    %4359 = vmatprep.subr.mxu0 0.0
    %4360 = vmatpush1.msra.mxu0 0.0
    %4361 = vmatprep.subr.mxu0 0.0
    %4362 = vmatpush1.msra.mxu0 0.0
    %4363 = vmatprep.subr.mxu0 0.0
    %4364 = vmatpush1.msra.mxu0 0.0
    %4365 = vmatprep.subr.mxu0 0.0
    %4366 = vmatpush1.msra.mxu0 0.0
    %4367 = vmatprep.subr.mxu0 0.0
    %4368 = vmatpush1.msra.mxu0 0.0
    %4369 = vmatprep.subr.mxu0 0.0
    %4370 = vmatpush1.msra.mxu0 0.0
    %4371 = vmatprep.subr.mxu0 0.0
    %4372 = vmatpush1.msra.mxu0 0.0
    %4373 = vmatprep.subr.mxu0 0.0
    %4374 = vmatpush1.msra.mxu0 0.0
    %4375 = vmatprep.subr.mxu0 0.0
    %4376 = vmatpush1.msra.mxu0 0.0
    %4377 = vmatprep.subr.mxu0 0.0
    %4378 = vmatpush1.msra.mxu0 0.0
    %4379 = vmatprep.subr.mxu0 0.0
    %4380 = vmatpush1.msra.mxu0 0.0
    %4381 = vmatprep.subr.mxu0 0.0
    %4382 = vmatpush1.msra.mxu0 0.0
    %4383 = vmatprep.subr.mxu0 0.0
    %4384 = vmatpush1.msra.mxu0 0.0
    %4385 = vmatprep.subr.mxu0 0.0
    %4386 = vmatpush1.msra.mxu0 0.0
    %4387 = vmatprep.subr.mxu0 0.0
    %4388 = vmatpush1.msra.mxu0 0.0
    %4389 = vmatprep.subr.mxu0 0.0
    %4390 = vmatpush1.msra.mxu0 0.0
    %4391 = vmatprep.subr.mxu0 0.0
    %4392 = vmatpush1.msra.mxu0 0.0
    %4393 = vmatprep.subr.mxu0 0.0
    %4394 = vmatpush1.msra.mxu0 0.0
    %4395 = vmatprep.subr.mxu0 0.0
    %4396 = vmatpush1.msra.mxu0 0.0
    %4397 = vmatprep.subr.mxu0 0.0
    %4398 = vmatpush1.msra.mxu0 0.0
    %4399 = vmatprep.subr.mxu0 0.0
    %4400 = vmatpush1.msra.mxu0 0.0
    %4401 = vmatprep.subr.mxu0 0.0
    %4402 = vmatpush1.msra.mxu0 0.0
    %4403 = vmatprep.subr.mxu0 0.0
    %4404 = vmatpush1.msra.mxu0 0.0
    %4405 = vmatprep.subr.mxu0 0.0
    %4406 = vmatpush1.msra.mxu0 0.0
    %4407 = vmatprep.subr.mxu0 0.0
    %4408 = vmatpush1.msra.mxu0 0.0
    %4409 = vmatprep.subr.mxu0 0.0
    %4410 = vmatpush1.msra.mxu0 0.0
    %4411 = vmatprep.subr.mxu0 0.0
    %4412 = vmatpush1.msra.mxu0 0.0
    %4413 = vmatprep.subr.mxu0 0.0
    %4414 = vmatpush1.msra.mxu0 0.0
    %4415 = vmatprep.subr.mxu0 0.0
    %4416 = vmatpush1.msra.mxu0 0.0
    %4417 = vmatprep.subr.mxu0 0.0
    %4418 = vmatpush1.msra.mxu0 0.0
    %4419 = vmatprep.mubr.f32.mxu0 0.0
    %4420 = vmatmul.mubr.f32.gmra.mrb[0].mxu0 %v3006
    %v4421 = vpop.f32.mrb[0].mxu0
    %v4422 = vadd.f32 %v4165, %v4421
    %v4423 = vpop.f32.mrb[0].mxu0
    %v4424 = vadd.f32 %v4167, %v4423
    %4425 = vmatprep.mubr.f32.mxu0 0.0
    %4426 = vmatmul.mubr.f32.gmra.mrb[0].mxu0 %v3008
    %v4427 = vpop.f32.mrb[0].mxu0
    %v4428 = vadd.f32 %v4171, %v4427
    %v4429 = vpop.f32.mrb[0].mxu0
    %v4430 = vadd.f32 %v4173, %v4429
    %4431 = vmatprep.mubr.f32.mxu0 0.0
    %4432 = vmatmul.mubr.f32.gmra.mrb[0].mxu0 %v3010
    %v4433 = vpop.f32.mrb[0].mxu0
    %v4434 = vadd.f32 %v4177, %v4433
    %v4435 = vpop.f32.mrb[0].mxu0
    %v4436 = vadd.f32 %v4179, %v4435
    %4437 = vmatprep.mubr.f32.mxu0 0.0
    %4438 = vmatmul.mubr.f32.gmra.mrb[0].mxu0 %v3012
    %v4439 = vpop.f32.mrb[0].mxu0
    %v4440 = vadd.f32 %v4183, %v4439
    %v4441 = vpop.f32.mrb[0].mxu0
    %v4442 = vadd.f32 %v4185, %v4441
    %4443 = vmatprep.mubr.f32.mxu0 0.0
    %4444 = vmatmul.mubr.f32.gmra.mrb[0].mxu0 %v3014
    %v4445 = vpop.f32.mrb[0].mxu0
    %v4446 = vadd.f32 %v4189, %v4445
    %v4447 = vpop.f32.mrb[0].mxu0
    %v4448 = vadd.f32 %v4191, %v4447
    %4449 = vmatprep.mubr.f32.mxu0 0.0
    %4450 = vmatmul.mubr.f32.gmra.mrb[0].mxu0 %v3016
    %v4451 = vpop.f32.mrb[0].mxu0
    %v4452 = vadd.f32 %v4195, %v4451
    %v4453 = vpop.f32.mrb[0].mxu0
    %v4454 = vadd.f32 %v4197, %v4453
    %4455 = vmatprep.mubr.f32.mxu0 0.0
    %4456 = vmatmul.mubr.f32.gmra.mrb[0].mxu0 %v3018
    %v4457 = vpop.f32.mrb[0].mxu0
    %v4458 = vadd.f32 %v4201, %v4457
    %v4459 = vpop.f32.mrb[0].mxu0
    %v4460 = vadd.f32 %v4203, %v4459
    %4461 = vmatprep.mubr.f32.mxu0 0.0
    %4462 = vmatmul.mubr.f32.gmra.mrb[0].mxu0 %v3020
    %v4463 = vpop.f32.mrb[0].mxu0
    %v4464 = vadd.f32 %v4207, %v4463
    %v4465 = vpop.f32.mrb[0].mxu0
    %v4466 = vadd.f32 %v4209, %v4465
    %4467 = vmatprep.mubr.f32.mxu0 0.0
    %4468 = vmatmul.mubr.f32.gmra.mrb[0].mxu0 %v3022
    %v4469 = vpop.f32.mrb[0].mxu0
    %v4470 = vadd.f32 %v4213, %v4469
    %v4471 = vpop.f32.mrb[0].mxu0
    %v4472 = vadd.f32 %v4215, %v4471
    %4473 = vmatprep.mubr.f32.mxu0 0.0
    %4474 = vmatmul.mubr.f32.gmra.mrb[0].mxu0 %v3024
    %v4475 = vpop.f32.mrb[0].mxu0
    %v4476 = vadd.f32 %v4219, %v4475
    %v4477 = vpop.f32.mrb[0].mxu0
    %v4478 = vadd.f32 %v4221, %v4477
    %4479 = vmatprep.mubr.f32.mxu0 0.0
    %4480 = vmatmul.mubr.f32.gmra.mrb[0].mxu0 %v3026
    %v4481 = vpop.f32.mrb[0].mxu0
    %v4482 = vadd.f32 %v4225, %v4481
    %v4483 = vpop.f32.mrb[0].mxu0
    %v4484 = vadd.f32 %v4227, %v4483
    %4485 = vmatprep.mubr.f32.mxu0 0.0
    %4486 = vmatmul.mubr.f32.gmra.mrb[0].mxu0 %v3028
    %v4487 = vpop.f32.mrb[0].mxu0
    %v4488 = vadd.f32 %v4231, %v4487
    %v4489 = vpop.f32.mrb[0].mxu0
    %v4490 = vadd.f32 %v4233, %v4489
    %4491 = vmatprep.mubr.f32.mxu0 0.0
    %4492 = vmatmul.mubr.f32.gmra.mrb[0].mxu0 %v3030
    %v4493 = vpop.f32.mrb[0].mxu0
    %v4494 = vadd.f32 %v4237, %v4493
    %v4495 = vpop.f32.mrb[0].mxu0
    %v4496 = vadd.f32 %v4239, %v4495
    %4497 = vmatprep.mubr.f32.mxu0 0.0
    %4498 = vmatmul.mubr.f32.gmra.mrb[0].mxu0 %v3032
    %v4499 = vpop.f32.mrb[0].mxu0
    %v4500 = vadd.f32 %v4243, %v4499
    %v4501 = vpop.f32.mrb[0].mxu0
    %v4502 = vadd.f32 %v4245, %v4501
    %4503 = vmatprep.mubr.f32.mxu0 0.0
    %4504 = vmatmul.mubr.f32.gmra.mrb[0].mxu0 %v3034
    %v4505 = vpop.f32.mrb[0].mxu0
    %v4506 = vadd.f32 %v4249, %v4505
    %v4507 = vpop.f32.mrb[0].mxu0
    %v4508 = vadd.f32 %v4251, %v4507
    %4509 = vmatprep.mubr.f32.mxu0 0.0
    %4510 = vmatmul.mubr.f32.gmra.mrb[0].mxu0 %v3036
    %v4511 = vpop.f32.mrb[0].mxu0
    %v4512 = vadd.f32 %v4255, %v4511
    %v4513 = vpop.f32.mrb[0].mxu0
    %v4514 = vadd.f32 %v4257, %v4513
    %4515 = vmatprep.mubr.f32.mxu0 0.0
    %4516 = vmatmul.mubr.f32.gmra.mrb[0].mxu0 %v3038
    %v4517 = vpop.f32.mrb[0].mxu0
    %v4518 = vadd.f32 %v4261, %v4517
    %v4519 = vpop.f32.mrb[0].mxu0
    %v4520 = vadd.f32 %v4263, %v4519
    %4521 = vmatprep.mubr.f32.mxu0 0.0
    %4522 = vmatmul.mubr.f32.gmra.mrb[0].mxu0 %v3040
    %v4523 = vpop.f32.mrb[0].mxu0
    %v4524 = vadd.f32 %v4267, %v4523
    %v4525 = vpop.f32.mrb[0].mxu0
    %v4526 = vadd.f32 %v4269, %v4525
    %4527 = vmatprep.mubr.f32.mxu0 0.0
    %4528 = vmatmul.mubr.f32.gmra.mrb[0].mxu0 %v3042
    %v4529 = vpop.f32.mrb[0].mxu0
    %v4530 = vadd.f32 %v4273, %v4529
    %v4531 = vpop.f32.mrb[0].mxu0
    %v4532 = vadd.f32 %v4275, %v4531
    %4533 = vmatprep.mubr.f32.mxu0 0.0
    %4534 = vmatmul.mubr.f32.gmra.mrb[0].mxu0 %v3044
    %v4535 = vpop.f32.mrb[0].mxu0
    %v4536 = vadd.f32 %v4279, %v4535
    %v4537 = vpop.f32.mrb[0].mxu0
    %v4538 = vadd.f32 %v4281, %v4537
    %4539 = vmatprep.mubr.f32.mxu0 0.0
    %4540 = vmatmul.mubr.f32.gmra.mrb[0].mxu0 %v3046
    %v4541 = vpop.f32.mrb[0].mxu0
    %v4542 = vadd.f32 %v4285, %v4541
    %v4543 = vpop.f32.mrb[0].mxu0
    %v4544 = vadd.f32 %v4287, %v4543
    %4545 = vmatprep.mubr.f32.mxu0 0.0
    %4546 = vmatmul.mubr.f32.gmra.mrb[0].mxu0 %v3048
    %v4547 = vpop.f32.mrb[0].mxu0
    %v4548 = vadd.f32 %v4291, %v4547
    %v4549 = vpop.f32.mrb[0].mxu0
    %v4550 = vadd.f32 %v4293, %v4549
    %4551 = vmatprep.mubr.f32.mxu0 0.0
    %4552 = vmatmul.mubr.f32.gmra.mrb[0].mxu0 %v3050
    %v4553 = vpop.f32.mrb[0].mxu0
    %v4554 = vadd.f32 %v4297, %v4553
    %v4555 = vpop.f32.mrb[0].mxu0
    %v4556 = vadd.f32 %v4299, %v4555
    %4557 = vmatprep.mubr.f32.mxu0 0.0
    %4558 = vmatmul.mubr.f32.gmra.mrb[0].mxu0 %v3052
    %v4559 = vpop.f32.mrb[0].mxu0
    %v4560 = vadd.f32 %v4303, %v4559
    %v4561 = vpop.f32.mrb[0].mxu0
    %v4562 = vadd.f32 %v4305, %v4561
    %4563 = vmatprep.mubr.f32.mxu0 0.0
    %4564 = vmatmul.mubr.f32.gmra.mrb[0].mxu0 %v3054
    %v4565 = vpop.f32.mrb[0].mxu0
    %v4566 = vadd.f32 %v4309, %v4565
    %v4567 = vpop.f32.mrb[0].mxu0
    %v4568 = vadd.f32 %v4311, %v4567
    %4569 = vmatprep.mubr.f32.mxu0 0.0
    %4570 = vmatmul.mubr.f32.gmra.mrb[0].mxu0 %v3056
    %v4571 = vpop.f32.mrb[0].mxu0
    %v4572 = vadd.f32 %v4315, %v4571
    %v4573 = vpop.f32.mrb[0].mxu0
    %v4574 = vadd.f32 %v4317, %v4573
    %4575 = vmatprep.mubr.f32.mxu0 0.0
    %4576 = vmatmul.mubr.f32.gmra.mrb[0].mxu0 %v3058
    %v4577 = vpop.f32.mrb[0].mxu0
    %v4578 = vadd.f32 %v4321, %v4577
    %v4579 = vpop.f32.mrb[0].mxu0
    %v4580 = vadd.f32 %v4323, %v4579
    %4581 = vmatprep.mubr.f32.mxu0 0.0
    %4582 = vmatmul.mubr.f32.gmra.mrb[0].mxu0 %v3060
    %v4583 = vpop.f32.mrb[0].mxu0
    %v4584 = vadd.f32 %v4327, %v4583
    %v4585 = vpop.f32.mrb[0].mxu0
    %v4586 = vadd.f32 %v4329, %v4585
    %4587 = vmatprep.mubr.f32.mxu0 0.0
    %4588 = vmatmul.mubr.f32.gmra.mrb[0].mxu0 %v3062
    %v4589 = vpop.f32.mrb[0].mxu0
    %v4590 = vadd.f32 %v4333, %v4589
    %v4591 = vpop.f32.mrb[0].mxu0
    %v4592 = vadd.f32 %v4335, %v4591
    %4593 = vmatprep.mubr.f32.mxu0 0.0
    %4594 = vmatmul.mubr.f32.gmra.mrb[0].mxu0 %v3064
    %v4595 = vpop.f32.mrb[0].mxu0
    %v4596 = vadd.f32 %v4339, %v4595
    %v4597 = vpop.f32.mrb[0].mxu0
    %v4598 = vadd.f32 %v4341, %v4597
    %4599 = vmatprep.mubr.f32.mxu0 0.0
    %4600 = vmatmul.mubr.f32.gmra.mrb[0].mxu0 %v3066
    %v4601 = vpop.f32.mrb[0].mxu0
    %v4602 = vadd.f32 %v4345, %v4601
    %v4603 = vpop.f32.mrb[0].mxu0
    %v4604 = vadd.f32 %v4347, %v4603
    %4605 = vmatprep.mubr.f32.mxu0 0.0
    %4606 = vmatmul.mubr.f32.gmra.mrb[0].mxu0 %v3068
    %v4607 = vpop.f32.mrb[0].mxu0
    %v4608 = vadd.f32 %v4351, %v4607
    %v4609 = vpop.f32.mrb[0].mxu0
    %v4610 = vadd.f32 %v4353, %v4609
    %4611 = vdwg.mxu0
    %4612 = vmatprep.subr.mxu0 0.0
    %4613 = vmatpush1.msra.mxu0 %v2522
    %4614 = vmatprep.subr.mxu0 0.0
    %4615 = vmatpush1.msra.mxu0 %v2525
    %4616 = vmatprep.subr.mxu0 0.0
    %4617 = vmatpush1.msra.mxu0 %v2528
    %4618 = vmatprep.subr.mxu0 0.0
    %4619 = vmatpush1.msra.mxu0 %v2531
    %4620 = vmatprep.subr.mxu0 0.0
    %4621 = vmatpush1.msra.mxu0 %v2534
    %4622 = vmatprep.subr.mxu0 0.0
    %4623 = vmatpush1.msra.mxu0 %v2537
    %4624 = vmatprep.subr.mxu0 0.0
    %4625 = vmatpush1.msra.mxu0 %v2540
    %4626 = vmatprep.subr.mxu0 0.0
    %4627 = vmatpush1.msra.mxu0 %v2543
    %4628 = vmatprep.subr.mxu0 0.0
    %4629 = vmatpush1.msra.mxu0 %v2546
    %4630 = vmatprep.subr.mxu0 0.0
    %4631 = vmatpush1.msra.mxu0 %v2549
    %4632 = vmatprep.subr.mxu0 0.0
    %4633 = vmatpush1.msra.mxu0 %v2552
    %4634 = vmatprep.subr.mxu0 0.0
    %4635 = vmatpush1.msra.mxu0 %v2555
    %4636 = vmatprep.subr.mxu0 0.0
    %4637 = vmatpush1.msra.mxu0 %v2558
    %4638 = vmatprep.subr.mxu0 0.0
    %4639 = vmatpush1.msra.mxu0 %v2561
    %4640 = vmatprep.subr.mxu0 0.0
    %4641 = vmatpush1.msra.mxu0 %v2564
    %4642 = vmatprep.subr.mxu0 0.0
    %4643 = vmatpush1.msra.mxu0 %v2567
    %4644 = vmatprep.subr.mxu0 0.0
    %4645 = vmatpush1.msra.mxu0 %v2570
    %4646 = vmatprep.subr.mxu0 0.0
    %4647 = vmatpush1.msra.mxu0 %v2573
    %4648 = vmatprep.subr.mxu0 0.0
    %4649 = vmatpush1.msra.mxu0 %v2576
    %4650 = vmatprep.subr.mxu0 0.0
    %4651 = vmatpush1.msra.mxu0 %v2579
    %4652 = vmatprep.subr.mxu0 0.0
    %4653 = vmatpush1.msra.mxu0 %v2582
    %4654 = vmatprep.subr.mxu0 0.0
    %4655 = vmatpush1.msra.mxu0 %v2585
    %4656 = vmatprep.subr.mxu0 0.0
    %4657 = vmatpush1.msra.mxu0 %v2588
    %4658 = vmatprep.subr.mxu0 0.0
    %4659 = vmatpush1.msra.mxu0 %v2591
    %4660 = vmatprep.subr.mxu0 0.0
    %4661 = vmatpush1.msra.mxu0 %v2594
    %4662 = vmatprep.subr.mxu0 0.0
    %4663 = vmatpush1.msra.mxu0 %v2597
    %4664 = vmatprep.subr.mxu0 0.0
    %4665 = vmatpush1.msra.mxu0 %v2600
    %4666 = vmatprep.subr.mxu0 0.0
    %4667 = vmatpush1.msra.mxu0 %v2603
    %4668 = vmatprep.subr.mxu0 0.0
    %4669 = vmatpush1.msra.mxu0 %v2606
    %4670 = vmatprep.subr.mxu0 0.0
    %4671 = vmatpush1.msra.mxu0 %v2609
    %4672 = vmatprep.subr.mxu0 0.0
    %4673 = vmatpush1.msra.mxu0 %v2612
    %4674 = vmatprep.subr.mxu0 0.0
    %4675 = vmatpush1.msra.mxu0 %v2615
    %4676 = vmatprep.mubr.f32.mxu0 %v2296
    %4677 = vmatmul.mubr.f32.gmra.mrb[0].mxu0 %v101
    %v4678 = vpop.f32.mrb[0].mxu0
    %v4679 = vadd.f32 0.0, %v4678
    %v4680 = vpop.f32.mrb[0].mxu0
    %4681 = vmatprep.mubr.f32.mxu0 %v2297
    %4682 = vmatmul.mubr.f32.gmra.mrb[0].mxu0 %v103
    %v4683 = vpop.f32.mrb[0].mxu0
    %v4684 = vadd.f32 0.0, %v4683
    %v4685 = vpop.f32.mrb[0].mxu0
    %4686 = vmatprep.mubr.f32.mxu0 %v2298
    %4687 = vmatmul.mubr.f32.gmra.mrb[0].mxu0 %v123
    %v4688 = vpop.f32.mrb[0].mxu0
    %v4689 = vadd.f32 0.0, %v4688
    %v4690 = vpop.f32.mrb[0].mxu0
    %4691 = vmatprep.mubr.f32.mxu0 %v2299
    %4692 = vmatmul.mubr.f32.gmra.mrb[0].mxu0 %v125
    %v4693 = vpop.f32.mrb[0].mxu0
    %v4694 = vadd.f32 0.0, %v4693
    %v4695 = vpop.f32.mrb[0].mxu0
    %4696 = vmatprep.mubr.f32.mxu0 %v2300
    %4697 = vmatmul.mubr.f32.gmra.mrb[0].mxu0 %v129
    %v4698 = vpop.f32.mrb[0].mxu0
    %v4699 = vadd.f32 0.0, %v4698
    %v4700 = vpop.f32.mrb[0].mxu0
    %4701 = vmatprep.mubr.f32.mxu0 %v2301
    %4702 = vmatmul.mubr.f32.gmra.mrb[0].mxu0 %v131
    %v4703 = vpop.f32.mrb[0].mxu0
    %v4704 = vadd.f32 0.0, %v4703
    %v4705 = vpop.f32.mrb[0].mxu0
    %4706 = vmatprep.mubr.f32.mxu0 %v2302
    %4707 = vmatmul.mubr.f32.gmra.mrb[0].mxu0 %v135
    %v4708 = vpop.f32.mrb[0].mxu0
    %v4709 = vadd.f32 0.0, %v4708
    %v4710 = vpop.f32.mrb[0].mxu0
    %4711 = vmatprep.mubr.f32.mxu0 %v2303
    %4712 = vmatmul.mubr.f32.gmra.mrb[0].mxu0 %v137
    %v4713 = vpop.f32.mrb[0].mxu0
    %v4714 = vadd.f32 0.0, %v4713
    %v4715 = vpop.f32.mrb[0].mxu0
    %4716 = vmatprep.mubr.f32.mxu0 %v2304
    %4717 = vmatmul.mubr.f32.gmra.mrb[0].mxu0 %v141
    %v4718 = vpop.f32.mrb[0].mxu0
    %v4719 = vadd.f32 0.0, %v4718
    %v4720 = vpop.f32.mrb[0].mxu0
    %4721 = vmatprep.mubr.f32.mxu0 %v2305
    %4722 = vmatmul.mubr.f32.gmra.mrb[0].mxu0 %v143
    %v4723 = vpop.f32.mrb[0].mxu0
    %v4724 = vadd.f32 0.0, %v4723
    %v4725 = vpop.f32.mrb[0].mxu0
    %4726 = vmatprep.mubr.f32.mxu0 %v2306
    %4727 = vmatmul.mubr.f32.gmra.mrb[0].mxu0 %v147
    %v4728 = vpop.f32.mrb[0].mxu0
    %v4729 = vadd.f32 0.0, %v4728
    %v4730 = vpop.f32.mrb[0].mxu0
    %4731 = vmatprep.mubr.f32.mxu0 %v2307
    %4732 = vmatmul.mubr.f32.gmra.mrb[0].mxu0 %v149
    %v4733 = vpop.f32.mrb[0].mxu0
    %v4734 = vadd.f32 0.0, %v4733
    %v4735 = vpop.f32.mrb[0].mxu0
    %4736 = vmatprep.mubr.f32.mxu0 %v2308
    %4737 = vmatmul.mubr.f32.gmra.mrb[0].mxu0 %v153
    %v4738 = vpop.f32.mrb[0].mxu0
    %v4739 = vadd.f32 0.0, %v4738
    %v4740 = vpop.f32.mrb[0].mxu0
    %4741 = vmatprep.mubr.f32.mxu0 %v2309
    %4742 = vmatmul.mubr.f32.gmra.mrb[0].mxu0 %v155
    %v4743 = vpop.f32.mrb[0].mxu0
    %v4744 = vadd.f32 0.0, %v4743
    %v4745 = vpop.f32.mrb[0].mxu0
    %4746 = vmatprep.mubr.f32.mxu0 %v2310
    %4747 = vmatmul.mubr.f32.gmra.mrb[0].mxu0 %v159
    %v4748 = vpop.f32.mrb[0].mxu0
    %v4749 = vadd.f32 0.0, %v4748
    %v4750 = vpop.f32.mrb[0].mxu0
    %4751 = vmatprep.mubr.f32.mxu0 %v2311
    %4752 = vmatmul.mubr.f32.gmra.mrb[0].mxu0 %v161
    %v4753 = vpop.f32.mrb[0].mxu0
    %v4754 = vadd.f32 0.0, %v4753
    %v4755 = vpop.f32.mrb[0].mxu0
    %4756 = vmatprep.mubr.f32.mxu0 %v2312
    %4757 = vmatmul.mubr.f32.gmra.mrb[0].mxu0 %v165
    %v4758 = vpop.f32.mrb[0].mxu0
    %v4759 = vadd.f32 0.0, %v4758
    %v4760 = vpop.f32.mrb[0].mxu0
    %4761 = vmatprep.mubr.f32.mxu0 %v2313
    %4762 = vmatmul.mubr.f32.gmra.mrb[0].mxu0 %v167
    %v4763 = vpop.f32.mrb[0].mxu0
    %v4764 = vadd.f32 0.0, %v4763
    %v4765 = vpop.f32.mrb[0].mxu0
    %4766 = vmatprep.mubr.f32.mxu0 %v2314
    %4767 = vmatmul.mubr.f32.gmra.mrb[0].mxu0 %v171
    %v4768 = vpop.f32.mrb[0].mxu0
    %v4769 = vadd.f32 0.0, %v4768
    %v4770 = vpop.f32.mrb[0].mxu0
    %4771 = vmatprep.mubr.f32.mxu0 %v2315
    %4772 = vmatmul.mubr.f32.gmra.mrb[0].mxu0 %v173
    %v4773 = vpop.f32.mrb[0].mxu0
    %v4774 = vadd.f32 0.0, %v4773
    %v4775 = vpop.f32.mrb[0].mxu0
    %4776 = vmatprep.mubr.f32.mxu0 %v2316
    %4777 = vmatmul.mubr.f32.gmra.mrb[0].mxu0 %v177
    %v4778 = vpop.f32.mrb[0].mxu0
    %v4779 = vadd.f32 0.0, %v4778
    %v4780 = vpop.f32.mrb[0].mxu0
    %4781 = vmatprep.mubr.f32.mxu0 %v2317
    %4782 = vmatmul.mubr.f32.gmra.mrb[0].mxu0 %v179
    %v4783 = vpop.f32.mrb[0].mxu0
    %v4784 = vadd.f32 0.0, %v4783
    %v4785 = vpop.f32.mrb[0].mxu0
    %4786 = vmatprep.mubr.f32.mxu0 %v2318
    %4787 = vmatmul.mubr.f32.gmra.mrb[0].mxu0 %v183
    %v4788 = vpop.f32.mrb[0].mxu0
    %v4789 = vadd.f32 0.0, %v4788
    %v4790 = vpop.f32.mrb[0].mxu0
    %4791 = vmatprep.mubr.f32.mxu0 %v2319
    %4792 = vmatmul.mubr.f32.gmra.mrb[0].mxu0 %v185
    %v4793 = vpop.f32.mrb[0].mxu0
    %v4794 = vadd.f32 0.0, %v4793
    %v4795 = vpop.f32.mrb[0].mxu0
    %4796 = vmatprep.mubr.f32.mxu0 %v2320
    %4797 = vmatmul.mubr.f32.gmra.mrb[0].mxu0 %v189
    %v4798 = vpop.f32.mrb[0].mxu0
    %v4799 = vadd.f32 0.0, %v4798
    %v4800 = vpop.f32.mrb[0].mxu0
    %4801 = vmatprep.mubr.f32.mxu0 %v2321
    %4802 = vmatmul.mubr.f32.gmra.mrb[0].mxu0 %v191
    %v4803 = vpop.f32.mrb[0].mxu0
    %v4804 = vadd.f32 0.0, %v4803
    %v4805 = vpop.f32.mrb[0].mxu0
    %4806 = vmatprep.mubr.f32.mxu0 %v2322
    %4807 = vmatmul.mubr.f32.gmra.mrb[0].mxu0 %v195
    %v4808 = vpop.f32.mrb[0].mxu0
    %v4809 = vadd.f32 0.0, %v4808
    %v4810 = vpop.f32.mrb[0].mxu0
    %4811 = vmatprep.mubr.f32.mxu0 %v2323
    %4812 = vmatmul.mubr.f32.gmra.mrb[0].mxu0 %v197
    %v4813 = vpop.f32.mrb[0].mxu0
    %v4814 = vadd.f32 0.0, %v4813
    %v4815 = vpop.f32.mrb[0].mxu0
    %4816 = vmatprep.mubr.f32.mxu0 %v2324
    %4817 = vmatmul.mubr.f32.gmra.mrb[0].mxu0 %v201
    %v4818 = vpop.f32.mrb[0].mxu0
    %v4819 = vadd.f32 0.0, %v4818
    %v4820 = vpop.f32.mrb[0].mxu0
    %4821 = vmatprep.mubr.f32.mxu0 %v2325
    %4822 = vmatmul.mubr.f32.gmra.mrb[0].mxu0 %v203
    %v4823 = vpop.f32.mrb[0].mxu0
    %v4824 = vadd.f32 0.0, %v4823
    %v4825 = vpop.f32.mrb[0].mxu0
    %4826 = vmatprep.mubr.f32.mxu0 %v2326
    %4827 = vmatmul.mubr.f32.gmra.mrb[0].mxu0 %v207
    %v4828 = vpop.f32.mrb[0].mxu0
    %v4829 = vadd.f32 0.0, %v4828
    %v4830 = vpop.f32.mrb[0].mxu0
    %4831 = vmatprep.mubr.f32.mxu0 %v2327
    %4832 = vmatmul.mubr.f32.gmra.mrb[0].mxu0 %v209
    %v4833 = vpop.f32.mrb[0].mxu0
    %v4834 = vadd.f32 0.0, %v4833
    %v4835 = vpop.f32.mrb[0].mxu0
    %4836 = vdwg.mxu0
    %4837 = vmatprep.subr.mxu0 0.0
    %4838 = vmatpush1.msra.mxu0 %v2618
    %4839 = vmatprep.subr.mxu0 0.0
    %4840 = vmatpush1.msra.mxu0 %v2621
    %4841 = vmatprep.subr.mxu0 0.0
    %4842 = vmatpush1.msra.mxu0 %v2624
    %4843 = vmatprep.subr.mxu0 0.0
    %4844 = vmatpush1.msra.mxu0 %v2627
    %4845 = vmatprep.subr.mxu0 0.0
    %4846 = vmatpush1.msra.mxu0 %v2630
    %4847 = vmatprep.subr.mxu0 0.0
    %4848 = vmatpush1.msra.mxu0 %v2633
    %4849 = vmatprep.subr.mxu0 0.0
    %4850 = vmatpush1.msra.mxu0 %v2636
    %4851 = vmatprep.subr.mxu0 0.0
    %4852 = vmatpush1.msra.mxu0 %v2639
    %4853 = vmatprep.subr.mxu0 0.0
    %4854 = vmatpush1.msra.mxu0 %v2642
    %4855 = vmatprep.subr.mxu0 0.0
    %4856 = vmatpush1.msra.mxu0 %v2645
    %4857 = vmatprep.subr.mxu0 0.0
    %4858 = vmatpush1.msra.mxu0 %v2648
    %4859 = vmatprep.subr.mxu0 0.0
    %4860 = vmatpush1.msra.mxu0 %v2651
    %4861 = vmatprep.subr.mxu0 0.0
    %4862 = vmatpush1.msra.mxu0 %v2654
    %4863 = vmatprep.subr.mxu0 0.0
    %4864 = vmatpush1.msra.mxu0 %v2657
    %4865 = vmatprep.subr.mxu0 0.0
    %4866 = vmatpush1.msra.mxu0 %v2660
    %4867 = vmatprep.subr.mxu0 0.0
    %4868 = vmatpush1.msra.mxu0 %v2663
    %4869 = vmatprep.subr.mxu0 0.0
    %4870 = vmatpush1.msra.mxu0 %v2666
    %4871 = vmatprep.subr.mxu0 0.0
    %4872 = vmatpush1.msra.mxu0 %v2669
    %4873 = vmatprep.subr.mxu0 0.0
    %4874 = vmatpush1.msra.mxu0 %v2672
    %4875 = vmatprep.subr.mxu0 0.0
    %4876 = vmatpush1.msra.mxu0 %v2675
    %4877 = vmatprep.subr.mxu0 0.0
    %4878 = vmatpush1.msra.mxu0 %v2678
    %4879 = vmatprep.subr.mxu0 0.0
    %4880 = vmatpush1.msra.mxu0 %v2681
    %4881 = vmatprep.subr.mxu0 0.0
    %4882 = vmatpush1.msra.mxu0 %v2684
    %4883 = vmatprep.subr.mxu0 0.0
    %4884 = vmatpush1.msra.mxu0 %v2687
    %4885 = vmatprep.subr.mxu0 0.0
    %4886 = vmatpush1.msra.mxu0 %v2690
    %4887 = vmatprep.subr.mxu0 0.0
    %4888 = vmatpush1.msra.mxu0 %v2693
    %4889 = vmatprep.subr.mxu0 0.0
    %4890 = vmatpush1.msra.mxu0 %v2696
    %4891 = vmatprep.subr.mxu0 0.0
    %4892 = vmatpush1.msra.mxu0 %v2699
    %4893 = vmatprep.subr.mxu0 0.0
    %4894 = vmatpush1.msra.mxu0 %v2702
    %4895 = vmatprep.subr.mxu0 0.0
    %4896 = vmatpush1.msra.mxu0 %v2705
    %4897 = vmatprep.subr.mxu0 0.0
    %4898 = vmatpush1.msra.mxu0 %v2708
    %4899 = vmatprep.subr.mxu0 0.0
    %4900 = vmatpush1.msra.mxu0 %v2711
    %4901 = vmatprep.mubr.f32.mxu0 %v2360
    %4902 = vmatmul.mubr.f32.gmra.mrb[0].mxu0 %v2328
    %v4903 = vpop.f32.mrb[0].mxu0
    %v4904 = vadd.f32 %v4679, %v4903
    %v4905 = vpop.f32.mrb[0].mxu0
    %4906 = vmatprep.mubr.f32.mxu0 %v2361
    %4907 = vmatmul.mubr.f32.gmra.mrb[0].mxu0 %v2329
    %v4908 = vpop.f32.mrb[0].mxu0
    %v4909 = vadd.f32 %v4684, %v4908
    %v4910 = vpop.f32.mrb[0].mxu0
    %4911 = vmatprep.mubr.f32.mxu0 %v2362
    %4912 = vmatmul.mubr.f32.gmra.mrb[0].mxu0 %v2330
    %v4913 = vpop.f32.mrb[0].mxu0
    %v4914 = vadd.f32 %v4689, %v4913
    %v4915 = vpop.f32.mrb[0].mxu0
    %4916 = vmatprep.mubr.f32.mxu0 %v2363
    %4917 = vmatmul.mubr.f32.gmra.mrb[0].mxu0 %v2331
    %v4918 = vpop.f32.mrb[0].mxu0
    %v4919 = vadd.f32 %v4694, %v4918
    %v4920 = vpop.f32.mrb[0].mxu0
    %4921 = vmatprep.mubr.f32.mxu0 %v2364
    %4922 = vmatmul.mubr.f32.gmra.mrb[0].mxu0 %v2332
    %v4923 = vpop.f32.mrb[0].mxu0
    %v4924 = vadd.f32 %v4699, %v4923
    %v4925 = vpop.f32.mrb[0].mxu0
    %4926 = vmatprep.mubr.f32.mxu0 %v2365
    %4927 = vmatmul.mubr.f32.gmra.mrb[0].mxu0 %v2333
    %v4928 = vpop.f32.mrb[0].mxu0
    %v4929 = vadd.f32 %v4704, %v4928
    %v4930 = vpop.f32.mrb[0].mxu0
    %4931 = vmatprep.mubr.f32.mxu0 %v2366
    %4932 = vmatmul.mubr.f32.gmra.mrb[0].mxu0 %v2334
    %v4933 = vpop.f32.mrb[0].mxu0
    %v4934 = vadd.f32 %v4709, %v4933
    %v4935 = vpop.f32.mrb[0].mxu0
    %4936 = vmatprep.mubr.f32.mxu0 %v2367
    %4937 = vmatmul.mubr.f32.gmra.mrb[0].mxu0 %v2335
    %v4938 = vpop.f32.mrb[0].mxu0
    %v4939 = vadd.f32 %v4714, %v4938
    %v4940 = vpop.f32.mrb[0].mxu0
    %4941 = vmatprep.mubr.f32.mxu0 %v2368
    %4942 = vmatmul.mubr.f32.gmra.mrb[0].mxu0 %v2336
    %v4943 = vpop.f32.mrb[0].mxu0
    %v4944 = vadd.f32 %v4719, %v4943
    %v4945 = vpop.f32.mrb[0].mxu0
    %4946 = vmatprep.mubr.f32.mxu0 %v2369
    %4947 = vmatmul.mubr.f32.gmra.mrb[0].mxu0 %v2337
    %v4948 = vpop.f32.mrb[0].mxu0
    %v4949 = vadd.f32 %v4724, %v4948
    %v4950 = vpop.f32.mrb[0].mxu0
    %4951 = vmatprep.mubr.f32.mxu0 %v2370
    %4952 = vmatmul.mubr.f32.gmra.mrb[0].mxu0 %v2338
    %v4953 = vpop.f32.mrb[0].mxu0
    %v4954 = vadd.f32 %v4729, %v4953
    %v4955 = vpop.f32.mrb[0].mxu0
    %4956 = vmatprep.mubr.f32.mxu0 %v2371
    %4957 = vmatmul.mubr.f32.gmra.mrb[0].mxu0 %v2339
    %v4958 = vpop.f32.mrb[0].mxu0
    %v4959 = vadd.f32 %v4734, %v4958
    %v4960 = vpop.f32.mrb[0].mxu0
    %4961 = vmatprep.mubr.f32.mxu0 %v2372
    %4962 = vmatmul.mubr.f32.gmra.mrb[0].mxu0 %v2340
    %v4963 = vpop.f32.mrb[0].mxu0
    %v4964 = vadd.f32 %v4739, %v4963
    %v4965 = vpop.f32.mrb[0].mxu0
    %4966 = vmatprep.mubr.f32.mxu0 %v2373
    %4967 = vmatmul.mubr.f32.gmra.mrb[0].mxu0 %v2341
    %v4968 = vpop.f32.mrb[0].mxu0
    %v4969 = vadd.f32 %v4744, %v4968
    %v4970 = vpop.f32.mrb[0].mxu0
    %4971 = vmatprep.mubr.f32.mxu0 %v2374
    %4972 = vmatmul.mubr.f32.gmra.mrb[0].mxu0 %v2342
    %v4973 = vpop.f32.mrb[0].mxu0
    %v4974 = vadd.f32 %v4749, %v4973
    %v4975 = vpop.f32.mrb[0].mxu0
    %4976 = vmatprep.mubr.f32.mxu0 %v2375
    %4977 = vmatmul.mubr.f32.gmra.mrb[0].mxu0 %v2343
    %v4978 = vpop.f32.mrb[0].mxu0
    %v4979 = vadd.f32 %v4754, %v4978
    %v4980 = vpop.f32.mrb[0].mxu0
    %4981 = vmatprep.mubr.f32.mxu0 %v2376
    %4982 = vmatmul.mubr.f32.gmra.mrb[0].mxu0 %v2344
    %v4983 = vpop.f32.mrb[0].mxu0
    %v4984 = vadd.f32 %v4759, %v4983
    %v4985 = vpop.f32.mrb[0].mxu0
    %4986 = vmatprep.mubr.f32.mxu0 %v2377
    %4987 = vmatmul.mubr.f32.gmra.mrb[0].mxu0 %v2345
    %v4988 = vpop.f32.mrb[0].mxu0
    %v4989 = vadd.f32 %v4764, %v4988
    %v4990 = vpop.f32.mrb[0].mxu0
    %4991 = vmatprep.mubr.f32.mxu0 %v2378
    %4992 = vmatmul.mubr.f32.gmra.mrb[0].mxu0 %v2346
    %v4993 = vpop.f32.mrb[0].mxu0
    %v4994 = vadd.f32 %v4769, %v4993
    %v4995 = vpop.f32.mrb[0].mxu0
    %4996 = vmatprep.mubr.f32.mxu0 %v2379
    %4997 = vmatmul.mubr.f32.gmra.mrb[0].mxu0 %v2347
    %v4998 = vpop.f32.mrb[0].mxu0
    %v4999 = vadd.f32 %v4774, %v4998
    %v5000 = vpop.f32.mrb[0].mxu0
    %5001 = vmatprep.mubr.f32.mxu0 %v2380
    %5002 = vmatmul.mubr.f32.gmra.mrb[0].mxu0 %v2348
    %v5003 = vpop.f32.mrb[0].mxu0
    %v5004 = vadd.f32 %v4779, %v5003
    %v5005 = vpop.f32.mrb[0].mxu0
    %5006 = vmatprep.mubr.f32.mxu0 %v2381
    %5007 = vmatmul.mubr.f32.gmra.mrb[0].mxu0 %v2349
    %v5008 = vpop.f32.mrb[0].mxu0
    %v5009 = vadd.f32 %v4784, %v5008
    %v5010 = vpop.f32.mrb[0].mxu0
    %5011 = vmatprep.mubr.f32.mxu0 %v2382
    %5012 = vmatmul.mubr.f32.gmra.mrb[0].mxu0 %v2350
    %v5013 = vpop.f32.mrb[0].mxu0
    %v5014 = vadd.f32 %v4789, %v5013
    %v5015 = vpop.f32.mrb[0].mxu0
    %5016 = vmatprep.mubr.f32.mxu0 %v2383
    %5017 = vmatmul.mubr.f32.gmra.mrb[0].mxu0 %v2351
    %v5018 = vpop.f32.mrb[0].mxu0
    %v5019 = vadd.f32 %v4794, %v5018
    %v5020 = vpop.f32.mrb[0].mxu0
    %5021 = vmatprep.mubr.f32.mxu0 %v2384
    %5022 = vmatmul.mubr.f32.gmra.mrb[0].mxu0 %v2352
    %v5023 = vpop.f32.mrb[0].mxu0
    %v5024 = vadd.f32 %v4799, %v5023
    %v5025 = vpop.f32.mrb[0].mxu0
    %5026 = vmatprep.mubr.f32.mxu0 %v2385
    %5027 = vmatmul.mubr.f32.gmra.mrb[0].mxu0 %v2353
    %v5028 = vpop.f32.mrb[0].mxu0
    %v5029 = vadd.f32 %v4804, %v5028
    %v5030 = vpop.f32.mrb[0].mxu0
    %5031 = vmatprep.mubr.f32.mxu0 %v2386
    %5032 = vmatmul.mubr.f32.gmra.mrb[0].mxu0 %v2354
    %v5033 = vpop.f32.mrb[0].mxu0
    %v5034 = vadd.f32 %v4809, %v5033
    %v5035 = vpop.f32.mrb[0].mxu0
    %5036 = vmatprep.mubr.f32.mxu0 %v2387
    %5037 = vmatmul.mubr.f32.gmra.mrb[0].mxu0 %v2355
    %v5038 = vpop.f32.mrb[0].mxu0
    %v5039 = vadd.f32 %v4814, %v5038
    %v5040 = vpop.f32.mrb[0].mxu0
    %5041 = vmatprep.mubr.f32.mxu0 %v2388
    %5042 = vmatmul.mubr.f32.gmra.mrb[0].mxu0 %v2356
    %v5043 = vpop.f32.mrb[0].mxu0
    %v5044 = vadd.f32 %v4819, %v5043
    %v5045 = vpop.f32.mrb[0].mxu0
    %5046 = vmatprep.mubr.f32.mxu0 %v2389
    %5047 = vmatmul.mubr.f32.gmra.mrb[0].mxu0 %v2357
    %v5048 = vpop.f32.mrb[0].mxu0
    %v5049 = vadd.f32 %v4824, %v5048
    %v5050 = vpop.f32.mrb[0].mxu0
    %5051 = vmatprep.mubr.f32.mxu0 %v2390
    %5052 = vmatmul.mubr.f32.gmra.mrb[0].mxu0 %v2358
    %v5053 = vpop.f32.mrb[0].mxu0
    %v5054 = vadd.f32 %v4829, %v5053
    %v5055 = vpop.f32.mrb[0].mxu0
    %5056 = vmatprep.mubr.f32.mxu0 %v2391
    %5057 = vmatmul.mubr.f32.gmra.mrb[0].mxu0 %v2359
    %v5058 = vpop.f32.mrb[0].mxu0
    %v5059 = vadd.f32 %v4834, %v5058
    %v5060 = vpop.f32.mrb[0].mxu0
    %5061 = vdwg.mxu0
    %5062 = vmatprep.subr.mxu0 0.0
    %5063 = vmatpush1.msra.mxu0 %v2714
    %5064 = vmatprep.subr.mxu0 0.0
    %5065 = vmatpush1.msra.mxu0 %v2717
    %5066 = vmatprep.subr.mxu0 0.0
    %5067 = vmatpush1.msra.mxu0 %v2720
    %5068 = vmatprep.subr.mxu0 0.0
    %5069 = vmatpush1.msra.mxu0 %v2723
    %5070 = vmatprep.subr.mxu0 0.0
    %5071 = vmatpush1.msra.mxu0 %v2726
    %5072 = vmatprep.subr.mxu0 0.0
    %5073 = vmatpush1.msra.mxu0 %v2729
    %5074 = vmatprep.subr.mxu0 0.0
    %5075 = vmatpush1.msra.mxu0 %v2732
    %5076 = vmatprep.subr.mxu0 0.0
    %5077 = vmatpush1.msra.mxu0 %v2735
    %5078 = vmatprep.subr.mxu0 0.0
    %5079 = vmatpush1.msra.mxu0 %v2738
    %5080 = vmatprep.subr.mxu0 0.0
    %5081 = vmatpush1.msra.mxu0 %v2741
    %5082 = vmatprep.subr.mxu0 0.0
    %5083 = vmatpush1.msra.mxu0 %v2744
    %5084 = vmatprep.subr.mxu0 0.0
    %5085 = vmatpush1.msra.mxu0 %v2747
    %5086 = vmatprep.subr.mxu0 0.0
    %5087 = vmatpush1.msra.mxu0 %v2750
    %5088 = vmatprep.subr.mxu0 0.0
    %5089 = vmatpush1.msra.mxu0 %v2753
    %5090 = vmatprep.subr.mxu0 0.0
    %5091 = vmatpush1.msra.mxu0 %v2756
    %5092 = vmatprep.subr.mxu0 0.0
    %5093 = vmatpush1.msra.mxu0 %v2759
    %5094 = vmatprep.subr.mxu0 0.0
    %5095 = vmatpush1.msra.mxu0 %v2762
    %5096 = vmatprep.subr.mxu0 0.0
    %5097 = vmatpush1.msra.mxu0 %v2765
    %5098 = vmatprep.subr.mxu0 0.0
    %5099 = vmatpush1.msra.mxu0 %v2768
    %5100 = vmatprep.subr.mxu0 0.0
    %5101 = vmatpush1.msra.mxu0 %v2771
    %5102 = vmatprep.subr.mxu0 0.0
    %5103 = vmatpush1.msra.mxu0 %v2774
    %5104 = vmatprep.subr.mxu0 0.0
    %5105 = vmatpush1.msra.mxu0 %v2777
    %5106 = vmatprep.subr.mxu0 0.0
    %5107 = vmatpush1.msra.mxu0 %v2780
    %5108 = vmatprep.subr.mxu0 0.0
    %5109 = vmatpush1.msra.mxu0 %v2783
    %5110 = vmatprep.subr.mxu0 0.0
    %5111 = vmatpush1.msra.mxu0 %v2786
    %5112 = vmatprep.subr.mxu0 0.0
    %5113 = vmatpush1.msra.mxu0 %v2789
    %5114 = vmatprep.subr.mxu0 0.0
    %5115 = vmatpush1.msra.mxu0 %v2792
    %5116 = vmatprep.subr.mxu0 0.0
    %5117 = vmatpush1.msra.mxu0 %v2795
    %5118 = vmatprep.subr.mxu0 0.0
    %5119 = vmatpush1.msra.mxu0 %v2798
    %5120 = vmatprep.subr.mxu0 0.0
    %5121 = vmatpush1.msra.mxu0 %v2801
    %5122 = vmatprep.subr.mxu0 0.0
    %5123 = vmatpush1.msra.mxu0 %v2804
    %5124 = vmatprep.subr.mxu0 0.0
    %5125 = vmatpush1.msra.mxu0 %v2807
    %5126 = vmatprep.mubr.f32.mxu0 %v2424
    %5127 = vmatmul.mubr.f32.gmra.mrb[0].mxu0 %v2392
    %v5128 = vpop.f32.mrb[0].mxu0
    %v5129 = vadd.f32 %v4904, %v5128
    %v5130 = vpop.f32.mrb[0].mxu0
    %5131 = vmatprep.mubr.f32.mxu0 %v2425
    %5132 = vmatmul.mubr.f32.gmra.mrb[0].mxu0 %v2393
    %v5133 = vpop.f32.mrb[0].mxu0
    %v5134 = vadd.f32 %v4909, %v5133
    %v5135 = vpop.f32.mrb[0].mxu0
    %5136 = vmatprep.mubr.f32.mxu0 %v2426
    %5137 = vmatmul.mubr.f32.gmra.mrb[0].mxu0 %v2394
    %v5138 = vpop.f32.mrb[0].mxu0
    %v5139 = vadd.f32 %v4914, %v5138
    %v5140 = vpop.f32.mrb[0].mxu0
    %5141 = vmatprep.mubr.f32.mxu0 %v2427
    %5142 = vmatmul.mubr.f32.gmra.mrb[0].mxu0 %v2395
    %v5143 = vpop.f32.mrb[0].mxu0
    %v5144 = vadd.f32 %v4919, %v5143
    %v5145 = vpop.f32.mrb[0].mxu0
    %5146 = vmatprep.mubr.f32.mxu0 %v2428
    %5147 = vmatmul.mubr.f32.gmra.mrb[0].mxu0 %v2396
    %v5148 = vpop.f32.mrb[0].mxu0
    %v5149 = vadd.f32 %v4924, %v5148
    %v5150 = vpop.f32.mrb[0].mxu0
    %5151 = vmatprep.mubr.f32.mxu0 %v2429
    %5152 = vmatmul.mubr.f32.gmra.mrb[0].mxu0 %v2397
    %v5153 = vpop.f32.mrb[0].mxu0
    %v5154 = vadd.f32 %v4929, %v5153
    %v5155 = vpop.f32.mrb[0].mxu0
    %5156 = vmatprep.mubr.f32.mxu0 %v2430
    %5157 = vmatmul.mubr.f32.gmra.mrb[0].mxu0 %v2398
    %v5158 = vpop.f32.mrb[0].mxu0
    %v5159 = vadd.f32 %v4934, %v5158
    %v5160 = vpop.f32.mrb[0].mxu0
    %5161 = vmatprep.mubr.f32.mxu0 %v2431
    %5162 = vmatmul.mubr.f32.gmra.mrb[0].mxu0 %v2399
    %v5163 = vpop.f32.mrb[0].mxu0
    %v5164 = vadd.f32 %v4939, %v5163
    %v5165 = vpop.f32.mrb[0].mxu0
    %5166 = vmatprep.mubr.f32.mxu0 %v2432
    %5167 = vmatmul.mubr.f32.gmra.mrb[0].mxu0 %v2400
    %v5168 = vpop.f32.mrb[0].mxu0
    %v5169 = vadd.f32 %v4944, %v5168
    %v5170 = vpop.f32.mrb[0].mxu0
    %5171 = vmatprep.mubr.f32.mxu0 %v2433
    %5172 = vmatmul.mubr.f32.gmra.mrb[0].mxu0 %v2401
    %v5173 = vpop.f32.mrb[0].mxu0
    %v5174 = vadd.f32 %v4949, %v5173
    %v5175 = vpop.f32.mrb[0].mxu0
    %5176 = vmatprep.mubr.f32.mxu0 %v2434
    %5177 = vmatmul.mubr.f32.gmra.mrb[0].mxu0 %v2402
    %v5178 = vpop.f32.mrb[0].mxu0
    %v5179 = vadd.f32 %v4954, %v5178
    %v5180 = vpop.f32.mrb[0].mxu0
    %5181 = vmatprep.mubr.f32.mxu0 %v2435
    %5182 = vmatmul.mubr.f32.gmra.mrb[0].mxu0 %v2403
    %v5183 = vpop.f32.mrb[0].mxu0
    %v5184 = vadd.f32 %v4959, %v5183
    %v5185 = vpop.f32.mrb[0].mxu0
    %5186 = vmatprep.mubr.f32.mxu0 %v2436
    %5187 = vmatmul.mubr.f32.gmra.mrb[0].mxu0 %v2404
    %v5188 = vpop.f32.mrb[0].mxu0
    %v5189 = vadd.f32 %v4964, %v5188
    %v5190 = vpop.f32.mrb[0].mxu0
    %5191 = vmatprep.mubr.f32.mxu0 %v2437
    %5192 = vmatmul.mubr.f32.gmra.mrb[0].mxu0 %v2405
    %v5193 = vpop.f32.mrb[0].mxu0
    %v5194 = vadd.f32 %v4969, %v5193
    %v5195 = vpop.f32.mrb[0].mxu0
    %5196 = vmatprep.mubr.f32.mxu0 %v2438
    %5197 = vmatmul.mubr.f32.gmra.mrb[0].mxu0 %v2406
    %v5198 = vpop.f32.mrb[0].mxu0
    %v5199 = vadd.f32 %v4974, %v5198
    %v5200 = vpop.f32.mrb[0].mxu0
    %5201 = vmatprep.mubr.f32.mxu0 %v2439
    %5202 = vmatmul.mubr.f32.gmra.mrb[0].mxu0 %v2407
    %v5203 = vpop.f32.mrb[0].mxu0
    %v5204 = vadd.f32 %v4979, %v5203
    %v5205 = vpop.f32.mrb[0].mxu0
    %5206 = vmatprep.mubr.f32.mxu0 %v2440
    %5207 = vmatmul.mubr.f32.gmra.mrb[0].mxu0 %v2408
    %v5208 = vpop.f32.mrb[0].mxu0
    %v5209 = vadd.f32 %v4984, %v5208
    %v5210 = vpop.f32.mrb[0].mxu0
    %5211 = vmatprep.mubr.f32.mxu0 %v2441
    %5212 = vmatmul.mubr.f32.gmra.mrb[0].mxu0 %v2409
    %v5213 = vpop.f32.mrb[0].mxu0
    %v5214 = vadd.f32 %v4989, %v5213
    %v5215 = vpop.f32.mrb[0].mxu0
    %5216 = vmatprep.mubr.f32.mxu0 %v2442
    %5217 = vmatmul.mubr.f32.gmra.mrb[0].mxu0 %v2410
    %v5218 = vpop.f32.mrb[0].mxu0
    %v5219 = vadd.f32 %v4994, %v5218
    %v5220 = vpop.f32.mrb[0].mxu0
    %5221 = vmatprep.mubr.f32.mxu0 %v2443
    %5222 = vmatmul.mubr.f32.gmra.mrb[0].mxu0 %v2411
    %v5223 = vpop.f32.mrb[0].mxu0
    %v5224 = vadd.f32 %v4999, %v5223
    %v5225 = vpop.f32.mrb[0].mxu0
    %5226 = vmatprep.mubr.f32.mxu0 %v2444
    %5227 = vmatmul.mubr.f32.gmra.mrb[0].mxu0 %v2412
    %v5228 = vpop.f32.mrb[0].mxu0
    %v5229 = vadd.f32 %v5004, %v5228
    %v5230 = vpop.f32.mrb[0].mxu0
    %5231 = vmatprep.mubr.f32.mxu0 %v2445
    %5232 = vmatmul.mubr.f32.gmra.mrb[0].mxu0 %v2413
    %v5233 = vpop.f32.mrb[0].mxu0
    %v5234 = vadd.f32 %v5009, %v5233
    %v5235 = vpop.f32.mrb[0].mxu0
    %5236 = vmatprep.mubr.f32.mxu0 %v2446
    %5237 = vmatmul.mubr.f32.gmra.mrb[0].mxu0 %v2414
    %v5238 = vpop.f32.mrb[0].mxu0
    %v5239 = vadd.f32 %v5014, %v5238
    %v5240 = vpop.f32.mrb[0].mxu0
    %5241 = vmatprep.mubr.f32.mxu0 %v2447
    %5242 = vmatmul.mubr.f32.gmra.mrb[0].mxu0 %v2415
    %v5243 = vpop.f32.mrb[0].mxu0
    %v5244 = vadd.f32 %v5019, %v5243
    %v5245 = vpop.f32.mrb[0].mxu0
    %5246 = vmatprep.mubr.f32.mxu0 %v2448
    %5247 = vmatmul.mubr.f32.gmra.mrb[0].mxu0 %v2416
    %v5248 = vpop.f32.mrb[0].mxu0
    %v5249 = vadd.f32 %v5024, %v5248
    %v5250 = vpop.f32.mrb[0].mxu0
    %5251 = vmatprep.mubr.f32.mxu0 %v2449
    %5252 = vmatmul.mubr.f32.gmra.mrb[0].mxu0 %v2417
    %v5253 = vpop.f32.mrb[0].mxu0
    %v5254 = vadd.f32 %v5029, %v5253
    %v5255 = vpop.f32.mrb[0].mxu0
    %5256 = vmatprep.mubr.f32.mxu0 %v2450
    %5257 = vmatmul.mubr.f32.gmra.mrb[0].mxu0 %v2418
    %v5258 = vpop.f32.mrb[0].mxu0
    %v5259 = vadd.f32 %v5034, %v5258
    %v5260 = vpop.f32.mrb[0].mxu0
    %5261 = vmatprep.mubr.f32.mxu0 %v2451
    %5262 = vmatmul.mubr.f32.gmra.mrb[0].mxu0 %v2419
    %v5263 = vpop.f32.mrb[0].mxu0
    %v5264 = vadd.f32 %v5039, %v5263
    %v5265 = vpop.f32.mrb[0].mxu0
    %5266 = vmatprep.mubr.f32.mxu0 %v2452
    %5267 = vmatmul.mubr.f32.gmra.mrb[0].mxu0 %v2420
    %v5268 = vpop.f32.mrb[0].mxu0
    %v5269 = vadd.f32 %v5044, %v5268
    %v5270 = vpop.f32.mrb[0].mxu0
    %5271 = vmatprep.mubr.f32.mxu0 %v2453
    %5272 = vmatmul.mubr.f32.gmra.mrb[0].mxu0 %v2421
    %v5273 = vpop.f32.mrb[0].mxu0
    %v5274 = vadd.f32 %v5049, %v5273
    %v5275 = vpop.f32.mrb[0].mxu0
    %5276 = vmatprep.mubr.f32.mxu0 %v2454
    %5277 = vmatmul.mubr.f32.gmra.mrb[0].mxu0 %v2422
    %v5278 = vpop.f32.mrb[0].mxu0
    %v5279 = vadd.f32 %v5054, %v5278
    %v5280 = vpop.f32.mrb[0].mxu0
    %5281 = vmatprep.mubr.f32.mxu0 %v2455
    %5282 = vmatmul.mubr.f32.gmra.mrb[0].mxu0 %v2423
    %v5283 = vpop.f32.mrb[0].mxu0
    %v5284 = vadd.f32 %v5059, %v5283
    %v5285 = vpop.f32.mrb[0].mxu0
    %5286 = vdwg.mxu0
    %5287 = vmatprep.subr.mxu0 0.0
    %5288 = vmatpush1.msra.mxu0 %v2810
    %5289 = vmatprep.subr.mxu0 0.0
    %5290 = vmatpush1.msra.mxu0 %v2813
    %5291 = vmatprep.subr.mxu0 0.0
    %5292 = vmatpush1.msra.mxu0 %v2816
    %5293 = vmatprep.subr.mxu0 0.0
    %5294 = vmatpush1.msra.mxu0 %v2819
    %5295 = vmatprep.subr.mxu0 0.0
    %5296 = vmatpush1.msra.mxu0 %v2822
    %5297 = vmatprep.subr.mxu0 0.0
    %5298 = vmatpush1.msra.mxu0 %v2825
    %5299 = vmatprep.subr.mxu0 0.0
    %5300 = vmatpush1.msra.mxu0 %v2828
    %5301 = vmatprep.subr.mxu0 0.0
    %5302 = vmatpush1.msra.mxu0 %v2831
    %5303 = vmatprep.subr.mxu0 0.0
    %5304 = vmatpush1.msra.mxu0 %v2834
    %5305 = vmatprep.subr.mxu0 0.0
    %5306 = vmatpush1.msra.mxu0 %v2837
    %5307 = vmatprep.subr.mxu0 0.0
    %5308 = vmatpush1.msra.mxu0 %v2840
    %5309 = vmatprep.subr.mxu0 0.0
    %5310 = vmatpush1.msra.mxu0 %v2843
    %5311 = vmatprep.subr.mxu0 0.0
    %5312 = vmatpush1.msra.mxu0 %v2846
    %5313 = vmatprep.subr.mxu0 0.0
    %5314 = vmatpush1.msra.mxu0 %v2849
    %5315 = vmatprep.subr.mxu0 0.0
    %5316 = vmatpush1.msra.mxu0 %v2852
    %5317 = vmatprep.subr.mxu0 0.0
    %5318 = vmatpush1.msra.mxu0 %v2855
    %5319 = vmatprep.subr.mxu0 0.0
    %5320 = vmatpush1.msra.mxu0 %v2858
    %5321 = vmatprep.subr.mxu0 0.0
    %5322 = vmatpush1.msra.mxu0 %v2861
    %5323 = vmatprep.subr.mxu0 0.0
    %5324 = vmatpush1.msra.mxu0 %v2864
    %5325 = vmatprep.subr.mxu0 0.0
    %5326 = vmatpush1.msra.mxu0 %v2867
    %5327 = vmatprep.subr.mxu0 0.0
    %5328 = vmatpush1.msra.mxu0 %v2870
    %5329 = vmatprep.subr.mxu0 0.0
    %5330 = vmatpush1.msra.mxu0 %v2873
    %5331 = vmatprep.subr.mxu0 0.0
    %5332 = vmatpush1.msra.mxu0 %v2876
    %5333 = vmatprep.subr.mxu0 0.0
    %5334 = vmatpush1.msra.mxu0 %v2879
    %5335 = vmatprep.subr.mxu0 0.0
    %5336 = vmatpush1.msra.mxu0 %v2882
    %5337 = vmatprep.subr.mxu0 0.0
    %5338 = vmatpush1.msra.mxu0 %v2885
    %5339 = vmatprep.subr.mxu0 0.0
    %5340 = vmatpush1.msra.mxu0 %v2888
    %5341 = vmatprep.subr.mxu0 0.0
    %5342 = vmatpush1.msra.mxu0 %v2891
    %5343 = vmatprep.subr.mxu0 0.0
    %5344 = vmatpush1.msra.mxu0 %v2894
    %5345 = vmatprep.subr.mxu0 0.0
    %5346 = vmatpush1.msra.mxu0 %v2897
    %5347 = vmatprep.subr.mxu0 0.0
    %5348 = vmatpush1.msra.mxu0 %v2900
    %5349 = vmatprep.subr.mxu0 0.0
    %5350 = vmatpush1.msra.mxu0 %v2903
    %5351 = vmatprep.mubr.f32.mxu0 %v2488
    %5352 = vmatmul.mubr.f32.gmra.mrb[0].mxu0 %v2456
    %v5353 = vpop.f32.mrb[0].mxu0
    %v5354 = vadd.f32 %v5129, %v5353
    %v5355 = vpop.f32.mrb[0].mxu0
    %5356 = vmatprep.mubr.f32.mxu0 %v2489
    %5357 = vmatmul.mubr.f32.gmra.mrb[0].mxu0 %v2457
    %v5358 = vpop.f32.mrb[0].mxu0
    %v5359 = vadd.f32 %v5134, %v5358
    %v5360 = vpop.f32.mrb[0].mxu0
    %5361 = vmatprep.mubr.f32.mxu0 %v2490
    %5362 = vmatmul.mubr.f32.gmra.mrb[0].mxu0 %v2458
    %v5363 = vpop.f32.mrb[0].mxu0
    %v5364 = vadd.f32 %v5139, %v5363
    %v5365 = vpop.f32.mrb[0].mxu0
    %5366 = vmatprep.mubr.f32.mxu0 %v2491
    %5367 = vmatmul.mubr.f32.gmra.mrb[0].mxu0 %v2459
    %v5368 = vpop.f32.mrb[0].mxu0
    %v5369 = vadd.f32 %v5144, %v5368
    %v5370 = vpop.f32.mrb[0].mxu0
    %5371 = vmatprep.mubr.f32.mxu0 %v2492
    %5372 = vmatmul.mubr.f32.gmra.mrb[0].mxu0 %v2460
    %v5373 = vpop.f32.mrb[0].mxu0
    %v5374 = vadd.f32 %v5149, %v5373
    %v5375 = vpop.f32.mrb[0].mxu0
    %5376 = vmatprep.mubr.f32.mxu0 %v2493
    %5377 = vmatmul.mubr.f32.gmra.mrb[0].mxu0 %v2461
    %v5378 = vpop.f32.mrb[0].mxu0
    %v5379 = vadd.f32 %v5154, %v5378
    %v5380 = vpop.f32.mrb[0].mxu0
    %5381 = vmatprep.mubr.f32.mxu0 %v2494
    %5382 = vmatmul.mubr.f32.gmra.mrb[0].mxu0 %v2462
    %v5383 = vpop.f32.mrb[0].mxu0
    %v5384 = vadd.f32 %v5159, %v5383
    %v5385 = vpop.f32.mrb[0].mxu0
    %5386 = vmatprep.mubr.f32.mxu0 %v2495
    %5387 = vmatmul.mubr.f32.gmra.mrb[0].mxu0 %v2463
    %v5388 = vpop.f32.mrb[0].mxu0
    %v5389 = vadd.f32 %v5164, %v5388
    %v5390 = vpop.f32.mrb[0].mxu0
    %5391 = vmatprep.mubr.f32.mxu0 %v2496
    %5392 = vmatmul.mubr.f32.gmra.mrb[0].mxu0 %v2464
    %v5393 = vpop.f32.mrb[0].mxu0
    %v5394 = vadd.f32 %v5169, %v5393
    %v5395 = vpop.f32.mrb[0].mxu0
    %5396 = vmatprep.mubr.f32.mxu0 %v2497
    %5397 = vmatmul.mubr.f32.gmra.mrb[0].mxu0 %v2465
    %v5398 = vpop.f32.mrb[0].mxu0
    %v5399 = vadd.f32 %v5174, %v5398
    %v5400 = vpop.f32.mrb[0].mxu0
    %5401 = vmatprep.mubr.f32.mxu0 %v2498
    %5402 = vmatmul.mubr.f32.gmra.mrb[0].mxu0 %v2466
    %v5403 = vpop.f32.mrb[0].mxu0
    %v5404 = vadd.f32 %v5179, %v5403
    %v5405 = vpop.f32.mrb[0].mxu0
    %5406 = vmatprep.mubr.f32.mxu0 %v2499
    %5407 = vmatmul.mubr.f32.gmra.mrb[0].mxu0 %v2467
    %v5408 = vpop.f32.mrb[0].mxu0
    %v5409 = vadd.f32 %v5184, %v5408
    %v5410 = vpop.f32.mrb[0].mxu0
    %5411 = vmatprep.mubr.f32.mxu0 %v2500
    %5412 = vmatmul.mubr.f32.gmra.mrb[0].mxu0 %v2468
    %v5413 = vpop.f32.mrb[0].mxu0
    %v5414 = vadd.f32 %v5189, %v5413
    %v5415 = vpop.f32.mrb[0].mxu0
    %5416 = vmatprep.mubr.f32.mxu0 %v2501
    %5417 = vmatmul.mubr.f32.gmra.mrb[0].mxu0 %v2469
    %v5418 = vpop.f32.mrb[0].mxu0
    %v5419 = vadd.f32 %v5194, %v5418
    %v5420 = vpop.f32.mrb[0].mxu0
    %5421 = vmatprep.mubr.f32.mxu0 %v2502
    %5422 = vmatmul.mubr.f32.gmra.mrb[0].mxu0 %v2470
    %v5423 = vpop.f32.mrb[0].mxu0
    %v5424 = vadd.f32 %v5199, %v5423
    %v5425 = vpop.f32.mrb[0].mxu0
    %5426 = vmatprep.mubr.f32.mxu0 %v2503
    %5427 = vmatmul.mubr.f32.gmra.mrb[0].mxu0 %v2471
    %v5428 = vpop.f32.mrb[0].mxu0
    %v5429 = vadd.f32 %v5204, %v5428
    %v5430 = vpop.f32.mrb[0].mxu0
    %5431 = vmatprep.mubr.f32.mxu0 %v2504
    %5432 = vmatmul.mubr.f32.gmra.mrb[0].mxu0 %v2472
    %v5433 = vpop.f32.mrb[0].mxu0
    %v5434 = vadd.f32 %v5209, %v5433
    %v5435 = vpop.f32.mrb[0].mxu0
    %5436 = vmatprep.mubr.f32.mxu0 %v2505
    %5437 = vmatmul.mubr.f32.gmra.mrb[0].mxu0 %v2473
    %v5438 = vpop.f32.mrb[0].mxu0
    %v5439 = vadd.f32 %v5214, %v5438
    %v5440 = vpop.f32.mrb[0].mxu0
    %5441 = vmatprep.mubr.f32.mxu0 %v2506
    %5442 = vmatmul.mubr.f32.gmra.mrb[0].mxu0 %v2474
    %v5443 = vpop.f32.mrb[0].mxu0
    %v5444 = vadd.f32 %v5219, %v5443
    %v5445 = vpop.f32.mrb[0].mxu0
    %5446 = vmatprep.mubr.f32.mxu0 %v2507
    %5447 = vmatmul.mubr.f32.gmra.mrb[0].mxu0 %v2475
    %v5448 = vpop.f32.mrb[0].mxu0
    %v5449 = vadd.f32 %v5224, %v5448
    %v5450 = vpop.f32.mrb[0].mxu0
    %5451 = vmatprep.mubr.f32.mxu0 %v2508
    %5452 = vmatmul.mubr.f32.gmra.mrb[0].mxu0 %v2476
    %v5453 = vpop.f32.mrb[0].mxu0
    %v5454 = vadd.f32 %v5229, %v5453
    %v5455 = vpop.f32.mrb[0].mxu0
    %5456 = vmatprep.mubr.f32.mxu0 %v2509
    %5457 = vmatmul.mubr.f32.gmra.mrb[0].mxu0 %v2477
    %v5458 = vpop.f32.mrb[0].mxu0
    %v5459 = vadd.f32 %v5234, %v5458
    %v5460 = vpop.f32.mrb[0].mxu0
    %5461 = vmatprep.mubr.f32.mxu0 %v2510
    %5462 = vmatmul.mubr.f32.gmra.mrb[0].mxu0 %v2478
    %v5463 = vpop.f32.mrb[0].mxu0
    %v5464 = vadd.f32 %v5239, %v5463
    %v5465 = vpop.f32.mrb[0].mxu0
    %5466 = vmatprep.mubr.f32.mxu0 %v2511
    %5467 = vmatmul.mubr.f32.gmra.mrb[0].mxu0 %v2479
    %v5468 = vpop.f32.mrb[0].mxu0
    %v5469 = vadd.f32 %v5244, %v5468
    %v5470 = vpop.f32.mrb[0].mxu0
    %5471 = vmatprep.mubr.f32.mxu0 %v2512
    %5472 = vmatmul.mubr.f32.gmra.mrb[0].mxu0 %v2480
    %v5473 = vpop.f32.mrb[0].mxu0
    %v5474 = vadd.f32 %v5249, %v5473
    %v5475 = vpop.f32.mrb[0].mxu0
    %5476 = vmatprep.mubr.f32.mxu0 %v2513
    %5477 = vmatmul.mubr.f32.gmra.mrb[0].mxu0 %v2481
    %v5478 = vpop.f32.mrb[0].mxu0
    %v5479 = vadd.f32 %v5254, %v5478
    %v5480 = vpop.f32.mrb[0].mxu0
    %5481 = vmatprep.mubr.f32.mxu0 %v2514
    %5482 = vmatmul.mubr.f32.gmra.mrb[0].mxu0 %v2482
    %v5483 = vpop.f32.mrb[0].mxu0
    %v5484 = vadd.f32 %v5259, %v5483
    %v5485 = vpop.f32.mrb[0].mxu0
    %5486 = vmatprep.mubr.f32.mxu0 %v2515
    %5487 = vmatmul.mubr.f32.gmra.mrb[0].mxu0 %v2483
    %v5488 = vpop.f32.mrb[0].mxu0
    %v5489 = vadd.f32 %v5264, %v5488
    %v5490 = vpop.f32.mrb[0].mxu0
    %5491 = vmatprep.mubr.f32.mxu0 %v2516
    %5492 = vmatmul.mubr.f32.gmra.mrb[0].mxu0 %v2484
    %v5493 = vpop.f32.mrb[0].mxu0
    %v5494 = vadd.f32 %v5269, %v5493
    %v5495 = vpop.f32.mrb[0].mxu0
    %5496 = vmatprep.mubr.f32.mxu0 %v2517
    %5497 = vmatmul.mubr.f32.gmra.mrb[0].mxu0 %v2485
    %v5498 = vpop.f32.mrb[0].mxu0
    %v5499 = vadd.f32 %v5274, %v5498
    %v5500 = vpop.f32.mrb[0].mxu0
    %5501 = vmatprep.mubr.f32.mxu0 %v2518
    %5502 = vmatmul.mubr.f32.gmra.mrb[0].mxu0 %v2486
    %v5503 = vpop.f32.mrb[0].mxu0
    %v5504 = vadd.f32 %v5279, %v5503
    %v5505 = vpop.f32.mrb[0].mxu0
    %5506 = vmatprep.mubr.f32.mxu0 %v2519
    %5507 = vmatmul.mubr.f32.gmra.mrb[0].mxu0 %v2487
    %v5508 = vpop.f32.mrb[0].mxu0
    %v5509 = vadd.f32 %v5284, %v5508
    %v5510 = vpop.f32.mrb[0].mxu0
    %5511 = vdwg.mxu0
    %5512 = vmatprep.subr.mxu0 0.0
    %5513 = vmatpush1.msra.mxu0 %v2906
    %5514 = vmatprep.subr.mxu0 0.0
    %5515 = vmatpush1.msra.mxu0 %v2909
    %5516 = vmatprep.subr.mxu0 0.0
    %5517 = vmatpush1.msra.mxu0 %v2912
    %5518 = vmatprep.subr.mxu0 0.0
    %5519 = vmatpush1.msra.mxu0 %v2915
    %5520 = vmatprep.subr.mxu0 0.0
    %5521 = vmatpush1.msra.mxu0 %v2918
    %5522 = vmatprep.subr.mxu0 0.0
    %5523 = vmatpush1.msra.mxu0 %v2921
    %5524 = vmatprep.subr.mxu0 0.0
    %5525 = vmatpush1.msra.mxu0 %v2924
    %5526 = vmatprep.subr.mxu0 0.0
    %5527 = vmatpush1.msra.mxu0 %v2927
    %5528 = vmatprep.subr.mxu0 0.0
    %5529 = vmatpush1.msra.mxu0 %v2930
    %5530 = vmatprep.subr.mxu0 0.0
    %5531 = vmatpush1.msra.mxu0 %v2933
    %5532 = vmatprep.subr.mxu0 0.0
    %5533 = vmatpush1.msra.mxu0 %v2936
    %5534 = vmatprep.subr.mxu0 0.0
    %5535 = vmatpush1.msra.mxu0 %v2939
    %5536 = vmatprep.subr.mxu0 0.0
    %5537 = vmatpush1.msra.mxu0 %v2942
    %5538 = vmatprep.subr.mxu0 0.0
    %5539 = vmatpush1.msra.mxu0 %v2945
    %5540 = vmatprep.subr.mxu0 0.0
    %5541 = vmatpush1.msra.mxu0 %v2948
    %5542 = vmatprep.subr.mxu0 0.0
    %5543 = vmatpush1.msra.mxu0 %v2951
    %5544 = vmatprep.subr.mxu0 0.0
    %5545 = vmatpush1.msra.mxu0 %v2954
    %5546 = vmatprep.subr.mxu0 0.0
    %5547 = vmatpush1.msra.mxu0 %v2957
    %5548 = vmatprep.subr.mxu0 0.0
    %5549 = vmatpush1.msra.mxu0 %v2960
    %5550 = vmatprep.subr.mxu0 0.0
    %5551 = vmatpush1.msra.mxu0 %v2963
    %5552 = vmatprep.subr.mxu0 0.0
    %5553 = vmatpush1.msra.mxu0 %v2966
    %5554 = vmatprep.subr.mxu0 0.0
    %5555 = vmatpush1.msra.mxu0 %v2969
    %5556 = vmatprep.subr.mxu0 0.0
    %5557 = vmatpush1.msra.mxu0 %v2972
    %5558 = vmatprep.subr.mxu0 0.0
    %5559 = vmatpush1.msra.mxu0 %v2975
    %5560 = vmatprep.subr.mxu0 0.0
    %5561 = vmatpush1.msra.mxu0 %v2978
    %5562 = vmatprep.subr.mxu0 0.0
    %5563 = vmatpush1.msra.mxu0 %v2981
    %5564 = vmatprep.subr.mxu0 0.0
    %5565 = vmatpush1.msra.mxu0 %v2984
    %5566 = vmatprep.subr.mxu0 0.0
    %5567 = vmatpush1.msra.mxu0 %v2987
    %5568 = vmatprep.subr.mxu0 0.0
    %5569 = vmatpush1.msra.mxu0 %v2990
    %5570 = vmatprep.subr.mxu0 0.0
    %5571 = vmatpush1.msra.mxu0 %v2993
    %5572 = vmatprep.subr.mxu0 0.0
    %5573 = vmatpush1.msra.mxu0 %v2996
    %5574 = vmatprep.subr.mxu0 0.0
    %5575 = vmatpush1.msra.mxu0 %v2999
    %5576 = vmatprep.mubr.f32.mxu0 %v499
    %5577 = vmatmul.mubr.f32.gmra.mrb[0].mxu0 %v2200
    %v5578 = vpop.f32.mrb[0].mxu0
    %v5579 = vadd.f32 %v5354, %v5578
    %v5580 = vpop.f32.mrb[0].mxu0
    %5581 = vmatprep.mubr.f32.mxu0 %v504
    %5582 = vmatmul.mubr.f32.gmra.mrb[0].mxu0 %v2201
    %v5583 = vpop.f32.mrb[0].mxu0
    %v5584 = vadd.f32 %v5359, %v5583
    %v5585 = vpop.f32.mrb[0].mxu0
    %5586 = vmatprep.mubr.f32.mxu0 %v509
    %5587 = vmatmul.mubr.f32.gmra.mrb[0].mxu0 %v2202
    %v5588 = vpop.f32.mrb[0].mxu0
    %v5589 = vadd.f32 %v5364, %v5588
    %v5590 = vpop.f32.mrb[0].mxu0
    %5591 = vmatprep.mubr.f32.mxu0 %v514
    %5592 = vmatmul.mubr.f32.gmra.mrb[0].mxu0 %v2203
    %v5593 = vpop.f32.mrb[0].mxu0
    %v5594 = vadd.f32 %v5369, %v5593
    %v5595 = vpop.f32.mrb[0].mxu0
    %5596 = vmatprep.mubr.f32.mxu0 %v519
    %5597 = vmatmul.mubr.f32.gmra.mrb[0].mxu0 %v2204
    %v5598 = vpop.f32.mrb[0].mxu0
    %v5599 = vadd.f32 %v5374, %v5598
    %v5600 = vpop.f32.mrb[0].mxu0
    %5601 = vmatprep.mubr.f32.mxu0 %v524
    %5602 = vmatmul.mubr.f32.gmra.mrb[0].mxu0 %v2205
    %v5603 = vpop.f32.mrb[0].mxu0
    %v5604 = vadd.f32 %v5379, %v5603
    %v5605 = vpop.f32.mrb[0].mxu0
    %5606 = vmatprep.mubr.f32.mxu0 %v529
    %5607 = vmatmul.mubr.f32.gmra.mrb[0].mxu0 %v2206
    %v5608 = vpop.f32.mrb[0].mxu0
    %v5609 = vadd.f32 %v5384, %v5608
    %v5610 = vpop.f32.mrb[0].mxu0
    %5611 = vmatprep.mubr.f32.mxu0 %v534
    %5612 = vmatmul.mubr.f32.gmra.mrb[0].mxu0 %v2207
    %v5613 = vpop.f32.mrb[0].mxu0
    %v5614 = vadd.f32 %v5389, %v5613
    %v5615 = vpop.f32.mrb[0].mxu0
    %5616 = vmatprep.mubr.f32.mxu0 %v539
    %5617 = vmatmul.mubr.f32.gmra.mrb[0].mxu0 %v2208
    %v5618 = vpop.f32.mrb[0].mxu0
    %v5619 = vadd.f32 %v5394, %v5618
    %v5620 = vpop.f32.mrb[0].mxu0
    %5621 = vmatprep.mubr.f32.mxu0 %v544
    %5622 = vmatmul.mubr.f32.gmra.mrb[0].mxu0 %v2209
    %v5623 = vpop.f32.mrb[0].mxu0
    %v5624 = vadd.f32 %v5399, %v5623
    %v5625 = vpop.f32.mrb[0].mxu0
    %5626 = vmatprep.mubr.f32.mxu0 %v549
    %5627 = vmatmul.mubr.f32.gmra.mrb[0].mxu0 %v2210
    %v5628 = vpop.f32.mrb[0].mxu0
    %v5629 = vadd.f32 %v5404, %v5628
    %v5630 = vpop.f32.mrb[0].mxu0
    %5631 = vmatprep.mubr.f32.mxu0 %v554
    %5632 = vmatmul.mubr.f32.gmra.mrb[0].mxu0 %v2211
    %v5633 = vpop.f32.mrb[0].mxu0
    %v5634 = vadd.f32 %v5409, %v5633
    %v5635 = vpop.f32.mrb[0].mxu0
    %5636 = vmatprep.mubr.f32.mxu0 %v559
    %5637 = vmatmul.mubr.f32.gmra.mrb[0].mxu0 %v2212
    %v5638 = vpop.f32.mrb[0].mxu0
    %v5639 = vadd.f32 %v5414, %v5638
    %v5640 = vpop.f32.mrb[0].mxu0
    %5641 = vmatprep.mubr.f32.mxu0 %v564
    %5642 = vmatmul.mubr.f32.gmra.mrb[0].mxu0 %v2213
    %v5643 = vpop.f32.mrb[0].mxu0
    %v5644 = vadd.f32 %v5419, %v5643
    %v5645 = vpop.f32.mrb[0].mxu0
    %5646 = vmatprep.mubr.f32.mxu0 %v569
    %5647 = vmatmul.mubr.f32.gmra.mrb[0].mxu0 %v2214
    %v5648 = vpop.f32.mrb[0].mxu0
    %v5649 = vadd.f32 %v5424, %v5648
    %v5650 = vpop.f32.mrb[0].mxu0
    %5651 = vmatprep.mubr.f32.mxu0 %v574
    %5652 = vmatmul.mubr.f32.gmra.mrb[0].mxu0 %v2215
    %v5653 = vpop.f32.mrb[0].mxu0
    %v5654 = vadd.f32 %v5429, %v5653
    %v5655 = vpop.f32.mrb[0].mxu0
    %5656 = vmatprep.mubr.f32.mxu0 %v579
    %5657 = vmatmul.mubr.f32.gmra.mrb[0].mxu0 %v2216
    %v5658 = vpop.f32.mrb[0].mxu0
    %v5659 = vadd.f32 %v5434, %v5658
    %v5660 = vpop.f32.mrb[0].mxu0
    %5661 = vmatprep.mubr.f32.mxu0 %v584
    %5662 = vmatmul.mubr.f32.gmra.mrb[0].mxu0 %v2217
    %v5663 = vpop.f32.mrb[0].mxu0
    %v5664 = vadd.f32 %v5439, %v5663
    %v5665 = vpop.f32.mrb[0].mxu0
    %5666 = vmatprep.mubr.f32.mxu0 %v589
    %5667 = vmatmul.mubr.f32.gmra.mrb[0].mxu0 %v2218
    %v5668 = vpop.f32.mrb[0].mxu0
    %v5669 = vadd.f32 %v5444, %v5668
    %v5670 = vpop.f32.mrb[0].mxu0
    %5671 = vmatprep.mubr.f32.mxu0 %v594
    %5672 = vmatmul.mubr.f32.gmra.mrb[0].mxu0 %v2219
    %v5673 = vpop.f32.mrb[0].mxu0
    %v5674 = vadd.f32 %v5449, %v5673
    %v5675 = vpop.f32.mrb[0].mxu0
    %5676 = vmatprep.mubr.f32.mxu0 %v599
    %5677 = vmatmul.mubr.f32.gmra.mrb[0].mxu0 %v2220
    %v5678 = vpop.f32.mrb[0].mxu0
    %v5679 = vadd.f32 %v5454, %v5678
    %v5680 = vpop.f32.mrb[0].mxu0
    %5681 = vmatprep.mubr.f32.mxu0 %v604
    %5682 = vmatmul.mubr.f32.gmra.mrb[0].mxu0 %v2221
    %v5683 = vpop.f32.mrb[0].mxu0
    %v5684 = vadd.f32 %v5459, %v5683
    %v5685 = vpop.f32.mrb[0].mxu0
    %5686 = vmatprep.mubr.f32.mxu0 %v609
    %5687 = vmatmul.mubr.f32.gmra.mrb[0].mxu0 %v2222
    %v5688 = vpop.f32.mrb[0].mxu0
    %v5689 = vadd.f32 %v5464, %v5688
    %v5690 = vpop.f32.mrb[0].mxu0
    %5691 = vmatprep.mubr.f32.mxu0 %v614
    %5692 = vmatmul.mubr.f32.gmra.mrb[0].mxu0 %v2223
    %v5693 = vpop.f32.mrb[0].mxu0
    %v5694 = vadd.f32 %v5469, %v5693
    %v5695 = vpop.f32.mrb[0].mxu0
    %5696 = vmatprep.mubr.f32.mxu0 %v619
    %5697 = vmatmul.mubr.f32.gmra.mrb[0].mxu0 %v2224
    %v5698 = vpop.f32.mrb[0].mxu0
    %v5699 = vadd.f32 %v5474, %v5698
    %v5700 = vpop.f32.mrb[0].mxu0
    %5701 = vmatprep.mubr.f32.mxu0 %v624
    %5702 = vmatmul.mubr.f32.gmra.mrb[0].mxu0 %v2225
    %v5703 = vpop.f32.mrb[0].mxu0
    %v5704 = vadd.f32 %v5479, %v5703
    %v5705 = vpop.f32.mrb[0].mxu0
    %5706 = vmatprep.mubr.f32.mxu0 %v629
    %5707 = vmatmul.mubr.f32.gmra.mrb[0].mxu0 %v2226
    %v5708 = vpop.f32.mrb[0].mxu0
    %v5709 = vadd.f32 %v5484, %v5708
    %v5710 = vpop.f32.mrb[0].mxu0
    %5711 = vmatprep.mubr.f32.mxu0 %v634
    %5712 = vmatmul.mubr.f32.gmra.mrb[0].mxu0 %v2227
    %v5713 = vpop.f32.mrb[0].mxu0
    %v5714 = vadd.f32 %v5489, %v5713
    %v5715 = vpop.f32.mrb[0].mxu0
    %5716 = vmatprep.mubr.f32.mxu0 %v655
    %5717 = vmatmul.mubr.f32.gmra.mrb[0].mxu0 %v2228
    %v5718 = vpop.f32.mrb[0].mxu0
    %v5719 = vadd.f32 %v5494, %v5718
    %v5720 = vpop.f32.mrb[0].mxu0
    %5721 = vmatprep.mubr.f32.mxu0 %v660
    %5722 = vmatmul.mubr.f32.gmra.mrb[0].mxu0 %v2229
    %v5723 = vpop.f32.mrb[0].mxu0
    %v5724 = vadd.f32 %v5499, %v5723
    %v5725 = vpop.f32.mrb[0].mxu0
    %5726 = vmatprep.mubr.f32.mxu0 %v681
    %5727 = vmatmul.mubr.f32.gmra.mrb[0].mxu0 %v2230
    %v5728 = vpop.f32.mrb[0].mxu0
    %v5729 = vadd.f32 %v5504, %v5728
    %v5730 = vpop.f32.mrb[0].mxu0
    %5731 = vmatprep.mubr.f32.mxu0 %v686
    %5732 = vmatmul.mubr.f32.gmra.mrb[0].mxu0 %v2231
    %v5733 = vpop.f32.mrb[0].mxu0
    %v5734 = vadd.f32 %v5509, %v5733
    %v5735 = vpop.f32.mrb[0].mxu0
    %5736 = vdwg.mxu0
    %5737 = vmatprep.subr.mxu0 0.0
    %5738 = vmatpush1.msra.mxu0 %v3002
    %5739 = vmatprep.subr.mxu0 0.0
    %5740 = vmatpush1.msra.mxu0 %v3005
    %5741 = vmatprep.subr.mxu0 0.0
    %5742 = vmatpush1.msra.mxu0 0.0
    %5743 = vmatprep.subr.mxu0 0.0
    %5744 = vmatpush1.msra.mxu0 0.0
    %5745 = vmatprep.subr.mxu0 0.0
    %5746 = vmatpush1.msra.mxu0 0.0
    %5747 = vmatprep.subr.mxu0 0.0
    %5748 = vmatpush1.msra.mxu0 0.0
    %5749 = vmatprep.subr.mxu0 0.0
    %5750 = vmatpush1.msra.mxu0 0.0
    %5751 = vmatprep.subr.mxu0 0.0
    %5752 = vmatpush1.msra.mxu0 0.0
    %5753 = vmatprep.subr.mxu0 0.0
    %5754 = vmatpush1.msra.mxu0 0.0
    %5755 = vmatprep.subr.mxu0 0.0
    %5756 = vmatpush1.msra.mxu0 0.0
    %5757 = vmatprep.subr.mxu0 0.0
    %5758 = vmatpush1.msra.mxu0 0.0
    %5759 = vmatprep.subr.mxu0 0.0
    %5760 = vmatpush1.msra.mxu0 0.0
    %5761 = vmatprep.subr.mxu0 0.0
    %5762 = vmatpush1.msra.mxu0 0.0
    %5763 = vmatprep.subr.mxu0 0.0
    %5764 = vmatpush1.msra.mxu0 0.0
    %5765 = vmatprep.subr.mxu0 0.0
    %5766 = vmatpush1.msra.mxu0 0.0
    %5767 = vmatprep.subr.mxu0 0.0
    %5768 = vmatpush1.msra.mxu0 0.0
    %5769 = vmatprep.subr.mxu0 0.0
    %5770 = vmatpush1.msra.mxu0 0.0
    %5771 = vmatprep.subr.mxu0 0.0
    %5772 = vmatpush1.msra.mxu0 0.0
    %5773 = vmatprep.subr.mxu0 0.0
    %5774 = vmatpush1.msra.mxu0 0.0
    %5775 = vmatprep.subr.mxu0 0.0
    %5776 = vmatpush1.msra.mxu0 0.0
    %5777 = vmatprep.subr.mxu0 0.0
    %5778 = vmatpush1.msra.mxu0 0.0
    %5779 = vmatprep.subr.mxu0 0.0
    %5780 = vmatpush1.msra.mxu0 0.0
    %5781 = vmatprep.subr.mxu0 0.0
    %5782 = vmatpush1.msra.mxu0 0.0
    %5783 = vmatprep.subr.mxu0 0.0
    %5784 = vmatpush1.msra.mxu0 0.0
    %5785 = vmatprep.subr.mxu0 0.0
    %5786 = vmatpush1.msra.mxu0 0.0
    %5787 = vmatprep.subr.mxu0 0.0
    %5788 = vmatpush1.msra.mxu0 0.0
    %5789 = vmatprep.subr.mxu0 0.0
    %5790 = vmatpush1.msra.mxu0 0.0
    %5791 = vmatprep.subr.mxu0 0.0
    %5792 = vmatpush1.msra.mxu0 0.0
    %5793 = vmatprep.subr.mxu0 0.0
    %5794 = vmatpush1.msra.mxu0 0.0
    %5795 = vmatprep.subr.mxu0 0.0
    %5796 = vmatpush1.msra.mxu0 0.0
    %5797 = vmatprep.subr.mxu0 0.0
    %5798 = vmatpush1.msra.mxu0 0.0
    %5799 = vmatprep.subr.mxu0 0.0
    %5800 = vmatpush1.msra.mxu0 0.0
    %5801 = vmatprep.mubr.f32.mxu0 0.0
    %5802 = vmatmul.mubr.f32.gmra.mrb[0].mxu0 %v3006
    %v5803 = vpop.f32.mrb[0].mxu0
    %v5804 = vadd.f32 %v5579, %v5803
    %v5805 = vpop.f32.mrb[0].mxu0
    %5806 = vmatprep.mubr.f32.mxu0 0.0
    %5807 = vmatmul.mubr.f32.gmra.mrb[0].mxu0 %v3008
    %v5808 = vpop.f32.mrb[0].mxu0
    %v5809 = vadd.f32 %v5584, %v5808
    %v5810 = vpop.f32.mrb[0].mxu0
    %5811 = vmatprep.mubr.f32.mxu0 0.0
    %5812 = vmatmul.mubr.f32.gmra.mrb[0].mxu0 %v3010
    %v5813 = vpop.f32.mrb[0].mxu0
    %v5814 = vadd.f32 %v5589, %v5813
    %v5815 = vpop.f32.mrb[0].mxu0
    %5816 = vmatprep.mubr.f32.mxu0 0.0
    %5817 = vmatmul.mubr.f32.gmra.mrb[0].mxu0 %v3012
    %v5818 = vpop.f32.mrb[0].mxu0
    %v5819 = vadd.f32 %v5594, %v5818
    %v5820 = vpop.f32.mrb[0].mxu0
    %5821 = vmatprep.mubr.f32.mxu0 0.0
    %5822 = vmatmul.mubr.f32.gmra.mrb[0].mxu0 %v3014
    %v5823 = vpop.f32.mrb[0].mxu0
    %v5824 = vadd.f32 %v5599, %v5823
    %v5825 = vpop.f32.mrb[0].mxu0
    %5826 = vmatprep.mubr.f32.mxu0 0.0
    %5827 = vmatmul.mubr.f32.gmra.mrb[0].mxu0 %v3016
    %v5828 = vpop.f32.mrb[0].mxu0
    %v5829 = vadd.f32 %v5604, %v5828
    %v5830 = vpop.f32.mrb[0].mxu0
    %5831 = vmatprep.mubr.f32.mxu0 0.0
    %5832 = vmatmul.mubr.f32.gmra.mrb[0].mxu0 %v3018
    %v5833 = vpop.f32.mrb[0].mxu0
    %v5834 = vadd.f32 %v5609, %v5833
    %v5835 = vpop.f32.mrb[0].mxu0
    %5836 = vmatprep.mubr.f32.mxu0 0.0
    %5837 = vmatmul.mubr.f32.gmra.mrb[0].mxu0 %v3020
    %v5838 = vpop.f32.mrb[0].mxu0
    %v5839 = vadd.f32 %v5614, %v5838
    %v5840 = vpop.f32.mrb[0].mxu0
    %5841 = vmatprep.mubr.f32.mxu0 0.0
    %5842 = vmatmul.mubr.f32.gmra.mrb[0].mxu0 %v3022
    %v5843 = vpop.f32.mrb[0].mxu0
    %v5844 = vadd.f32 %v5619, %v5843
    %v5845 = vpop.f32.mrb[0].mxu0
    %5846 = vmatprep.mubr.f32.mxu0 0.0
    %5847 = vmatmul.mubr.f32.gmra.mrb[0].mxu0 %v3024
    %v5848 = vpop.f32.mrb[0].mxu0
    %v5849 = vadd.f32 %v5624, %v5848
    %v5850 = vpop.f32.mrb[0].mxu0
    %5851 = vmatprep.mubr.f32.mxu0 0.0
    %5852 = vmatmul.mubr.f32.gmra.mrb[0].mxu0 %v3026
    %v5853 = vpop.f32.mrb[0].mxu0
    %v5854 = vadd.f32 %v5629, %v5853
    %v5855 = vpop.f32.mrb[0].mxu0
    %5856 = vmatprep.mubr.f32.mxu0 0.0
    %5857 = vmatmul.mubr.f32.gmra.mrb[0].mxu0 %v3028
    %v5858 = vpop.f32.mrb[0].mxu0
    %v5859 = vadd.f32 %v5634, %v5858
    %v5860 = vpop.f32.mrb[0].mxu0
    %5861 = vmatprep.mubr.f32.mxu0 0.0
    %5862 = vmatmul.mubr.f32.gmra.mrb[0].mxu0 %v3030
    %v5863 = vpop.f32.mrb[0].mxu0
    %v5864 = vadd.f32 %v5639, %v5863
    %v5865 = vpop.f32.mrb[0].mxu0
    %5866 = vmatprep.mubr.f32.mxu0 0.0
    %5867 = vmatmul.mubr.f32.gmra.mrb[0].mxu0 %v3032
    %v5868 = vpop.f32.mrb[0].mxu0
    %v5869 = vadd.f32 %v5644, %v5868
    %v5870 = vpop.f32.mrb[0].mxu0
    %5871 = vmatprep.mubr.f32.mxu0 0.0
    %5872 = vmatmul.mubr.f32.gmra.mrb[0].mxu0 %v3034
    %v5873 = vpop.f32.mrb[0].mxu0
    %v5874 = vadd.f32 %v5649, %v5873
    %v5875 = vpop.f32.mrb[0].mxu0
    %5876 = vmatprep.mubr.f32.mxu0 0.0
    %5877 = vmatmul.mubr.f32.gmra.mrb[0].mxu0 %v3036
    %v5878 = vpop.f32.mrb[0].mxu0
    %v5879 = vadd.f32 %v5654, %v5878
    %v5880 = vpop.f32.mrb[0].mxu0
    %5881 = vmatprep.mubr.f32.mxu0 0.0
    %5882 = vmatmul.mubr.f32.gmra.mrb[0].mxu0 %v3038
    %v5883 = vpop.f32.mrb[0].mxu0
    %v5884 = vadd.f32 %v5659, %v5883
    %v5885 = vpop.f32.mrb[0].mxu0
    %5886 = vmatprep.mubr.f32.mxu0 0.0
    %5887 = vmatmul.mubr.f32.gmra.mrb[0].mxu0 %v3040
    %v5888 = vpop.f32.mrb[0].mxu0
    %v5889 = vadd.f32 %v5664, %v5888
    %v5890 = vpop.f32.mrb[0].mxu0
    %5891 = vmatprep.mubr.f32.mxu0 0.0
    %5892 = vmatmul.mubr.f32.gmra.mrb[0].mxu0 %v3042
    %v5893 = vpop.f32.mrb[0].mxu0
    %v5894 = vadd.f32 %v5669, %v5893
    %v5895 = vpop.f32.mrb[0].mxu0
    %5896 = vmatprep.mubr.f32.mxu0 0.0
    %5897 = vmatmul.mubr.f32.gmra.mrb[0].mxu0 %v3044
    %v5898 = vpop.f32.mrb[0].mxu0
    %v5899 = vadd.f32 %v5674, %v5898
    %v5900 = vpop.f32.mrb[0].mxu0
    %5901 = vmatprep.mubr.f32.mxu0 0.0
    %5902 = vmatmul.mubr.f32.gmra.mrb[0].mxu0 %v3046
    %v5903 = vpop.f32.mrb[0].mxu0
    %v5904 = vadd.f32 %v5679, %v5903
    %v5905 = vpop.f32.mrb[0].mxu0
    %5906 = vmatprep.mubr.f32.mxu0 0.0
    %5907 = vmatmul.mubr.f32.gmra.mrb[0].mxu0 %v3048
    %v5908 = vpop.f32.mrb[0].mxu0
    %v5909 = vadd.f32 %v5684, %v5908
    %v5910 = vpop.f32.mrb[0].mxu0
    %5911 = vmatprep.mubr.f32.mxu0 0.0
    %5912 = vmatmul.mubr.f32.gmra.mrb[0].mxu0 %v3050
    %v5913 = vpop.f32.mrb[0].mxu0
    %v5914 = vadd.f32 %v5689, %v5913
    %v5915 = vpop.f32.mrb[0].mxu0
    %5916 = vmatprep.mubr.f32.mxu0 0.0
    %5917 = vmatmul.mubr.f32.gmra.mrb[0].mxu0 %v3052
    %v5918 = vpop.f32.mrb[0].mxu0
    %v5919 = vadd.f32 %v5694, %v5918
    %v5920 = vpop.f32.mrb[0].mxu0
    %5921 = vmatprep.mubr.f32.mxu0 0.0
    %5922 = vmatmul.mubr.f32.gmra.mrb[0].mxu0 %v3054
    %v5923 = vpop.f32.mrb[0].mxu0
    %v5924 = vadd.f32 %v5699, %v5923
    %v5925 = vpop.f32.mrb[0].mxu0
    %5926 = vmatprep.mubr.f32.mxu0 0.0
    %5927 = vmatmul.mubr.f32.gmra.mrb[0].mxu0 %v3056
    %v5928 = vpop.f32.mrb[0].mxu0
    %v5929 = vadd.f32 %v5704, %v5928
    %v5930 = vpop.f32.mrb[0].mxu0
    %5931 = vmatprep.mubr.f32.mxu0 0.0
    %5932 = vmatmul.mubr.f32.gmra.mrb[0].mxu0 %v3058
    %v5933 = vpop.f32.mrb[0].mxu0
    %v5934 = vadd.f32 %v5709, %v5933
    %v5935 = vpop.f32.mrb[0].mxu0
    %5936 = vmatprep.mubr.f32.mxu0 0.0
    %5937 = vmatmul.mubr.f32.gmra.mrb[0].mxu0 %v3060
    %v5938 = vpop.f32.mrb[0].mxu0
    %v5939 = vadd.f32 %v5714, %v5938
    %v5940 = vpop.f32.mrb[0].mxu0
    %5941 = vmatprep.mubr.f32.mxu0 0.0
    %5942 = vmatmul.mubr.f32.gmra.mrb[0].mxu0 %v3062
    %v5943 = vpop.f32.mrb[0].mxu0
    %v5944 = vadd.f32 %v5719, %v5943
    %v5945 = vpop.f32.mrb[0].mxu0
    %5946 = vmatprep.mubr.f32.mxu0 0.0
    %5947 = vmatmul.mubr.f32.gmra.mrb[0].mxu0 %v3064
    %v5948 = vpop.f32.mrb[0].mxu0
    %v5949 = vadd.f32 %v5724, %v5948
    %v5950 = vpop.f32.mrb[0].mxu0
    %5951 = vmatprep.mubr.f32.mxu0 0.0
    %5952 = vmatmul.mubr.f32.gmra.mrb[0].mxu0 %v3066
    %v5953 = vpop.f32.mrb[0].mxu0
    %v5954 = vadd.f32 %v5729, %v5953
    %v5955 = vpop.f32.mrb[0].mxu0
    %5956 = vmatprep.mubr.f32.mxu0 0.0
    %5957 = vmatmul.mubr.f32.gmra.mrb[0].mxu0 %v3068
    %v5958 = vpop.f32.mrb[0].mxu0
    %v5959 = vadd.f32 %v5734, %v5958
    %v5960 = vpop.f32.mrb[0].mxu0
    %5961 = vdwg.mxu0
    %v5962 = vld [vmem:[%s4] sm:$0x7]
    %v5964 = vlaneseq
    %v5965 = vshrl.u32 %v5964, 7
    %v5966 = vsub.s32 0, %v5965
    %v5967 = vrot.slane %v5962, %v5966
    %v5968 = vlaneseq
    %v5969 = vshrl.u32 %v5968, 7
    %v5970 = vsub.s32 1, %v5969
    %v5971 = vrot.slane %v5962, %v5970
    %v5972 = vlaneseq
    %v5973 = vshrl.u32 %v5972, 7
    %v5974 = vsub.s32 2, %v5973
    %v5975 = vrot.slane %v5962, %v5974
    %v5979 = vadd.f32 %v4422, %v5967
    %v5980 = vadd.f32 %v4424, %v5971
    %v5981 = vadd.f32 %v5804, %v5975
    %v5982 = vadd.f32 %v4428, %v5967
    %v5983 = vadd.f32 %v4430, %v5971
    %v5984 = vadd.f32 %v5809, %v5975
    %v5985 = vadd.f32 %v4434, %v5967
    %v5986 = vadd.f32 %v4436, %v5971
    %v5987 = vadd.f32 %v5814, %v5975
    %v5988 = vadd.f32 %v4440, %v5967
    %v5989 = vadd.f32 %v4442, %v5971
    %v5990 = vadd.f32 %v5819, %v5975
    %v5991 = vadd.f32 %v4446, %v5967
    %v5992 = vadd.f32 %v4448, %v5971
    %v5993 = vadd.f32 %v5824, %v5975
    %v5994 = vadd.f32 %v4452, %v5967
    %v5995 = vadd.f32 %v4454, %v5971
    %v5996 = vadd.f32 %v5829, %v5975
    %v5997 = vadd.f32 %v4458, %v5967
    %v5998 = vadd.f32 %v4460, %v5971
    %v5999 = vadd.f32 %v5834, %v5975
    %v6000 = vadd.f32 %v4464, %v5967
    %v6001 = vadd.f32 %v4466, %v5971
    %v6002 = vadd.f32 %v5839, %v5975
    %v6003 = vadd.f32 %v4470, %v5967
    %v6004 = vadd.f32 %v4472, %v5971
    %v6005 = vadd.f32 %v5844, %v5975
    %v6006 = vadd.f32 %v4476, %v5967
    %v6007 = vadd.f32 %v4478, %v5971
    %v6008 = vadd.f32 %v5849, %v5975
    %v6009 = vadd.f32 %v4482, %v5967
    %v6010 = vadd.f32 %v4484, %v5971
    %v6011 = vadd.f32 %v5854, %v5975
    %v6012 = vadd.f32 %v4488, %v5967
    %v6013 = vadd.f32 %v4490, %v5971
    %v6014 = vadd.f32 %v5859, %v5975
    %v6015 = vadd.f32 %v4494, %v5967
    %v6016 = vadd.f32 %v4496, %v5971
    %v6017 = vadd.f32 %v5864, %v5975
    %v6018 = vadd.f32 %v4500, %v5967
    %v6019 = vadd.f32 %v4502, %v5971
    %v6020 = vadd.f32 %v5869, %v5975
    %v6021 = vadd.f32 %v4506, %v5967
    %v6022 = vadd.f32 %v4508, %v5971
    %v6023 = vadd.f32 %v5874, %v5975
    %v6024 = vadd.f32 %v4512, %v5967
    %v6025 = vadd.f32 %v4514, %v5971
    %v6026 = vadd.f32 %v5879, %v5975
    %v6027 = vadd.f32 %v4518, %v5967
    %v6028 = vadd.f32 %v4520, %v5971
    %v6029 = vadd.f32 %v5884, %v5975
    %v6030 = vadd.f32 %v4524, %v5967
    %v6031 = vadd.f32 %v4526, %v5971
    %v6032 = vadd.f32 %v5889, %v5975
    %v6033 = vadd.f32 %v4530, %v5967
    %v6034 = vadd.f32 %v4532, %v5971
    %v6035 = vadd.f32 %v5894, %v5975
    %v6036 = vadd.f32 %v4536, %v5967
    %v6037 = vadd.f32 %v4538, %v5971
    %v6038 = vadd.f32 %v5899, %v5975
    %v6039 = vadd.f32 %v4542, %v5967
    %v6040 = vadd.f32 %v4544, %v5971
    %v6041 = vadd.f32 %v5904, %v5975
    %v6042 = vadd.f32 %v4548, %v5967
    %v6043 = vadd.f32 %v4550, %v5971
    %v6044 = vadd.f32 %v5909, %v5975
    %v6045 = vadd.f32 %v4554, %v5967
    %v6046 = vadd.f32 %v4556, %v5971
    %v6047 = vadd.f32 %v5914, %v5975
    %v6048 = vadd.f32 %v4560, %v5967
    %v6049 = vadd.f32 %v4562, %v5971
    %v6050 = vadd.f32 %v5919, %v5975
    %v6051 = vadd.f32 %v4566, %v5967
    %v6052 = vadd.f32 %v4568, %v5971
    %v6053 = vadd.f32 %v5924, %v5975
    %v6054 = vadd.f32 %v4572, %v5967
    %v6055 = vadd.f32 %v4574, %v5971
    %v6056 = vadd.f32 %v5929, %v5975
    %v6057 = vadd.f32 %v4578, %v5967
    %v6058 = vadd.f32 %v4580, %v5971
    %v6059 = vadd.f32 %v5934, %v5975
    %v6060 = vadd.f32 %v4584, %v5967
    %v6061 = vadd.f32 %v4586, %v5971
    %v6062 = vadd.f32 %v5939, %v5975
    %v6063 = vadd.f32 %v4590, %v5967
    %v6064 = vadd.f32 %v4592, %v5971
    %v6065 = vadd.f32 %v5944, %v5975
    %v6066 = vadd.f32 %v4596, %v5967
    %v6067 = vadd.f32 %v4598, %v5971
    %v6068 = vadd.f32 %v5949, %v5975
    %v6069 = vadd.f32 %v4602, %v5967
    %v6070 = vadd.f32 %v4604, %v5971
    %v6071 = vadd.f32 %v5954, %v5975
    %v6072 = vadd.f32 %v4608, %v5967
    %v6073 = vadd.f32 %v4610, %v5971
    %v6074 = vadd.f32 %v5959, %v5975
    %6171 = vrot.lane.b32.xlu0 %v5979, 112
    %v6172 = vpop.permute.xlu0 %6171
    %6173 = vrot.lane.b32.xlu0 %v5980, 112
    %v6174 = vpop.permute.xlu0 %6173
    %6175 = vrot.lane.b32.xlu0 %v5981, 112
    %v6176 = vpop.permute.xlu0 %6175
    %6177 = vrot.lane.b32.xlu0 %v5982, 112
    %v6178 = vpop.permute.xlu0 %6177
    %6179 = vrot.lane.b32.xlu0 %v5983, 112
    %v6180 = vpop.permute.xlu0 %6179
    %6181 = vrot.lane.b32.xlu0 %v5984, 112
    %v6182 = vpop.permute.xlu0 %6181
    %6183 = vrot.lane.b32.xlu0 %v5985, 112
    %v6184 = vpop.permute.xlu0 %6183
    %6185 = vrot.lane.b32.xlu0 %v5986, 112
    %v6186 = vpop.permute.xlu0 %6185
    %6187 = vrot.lane.b32.xlu0 %v5987, 112
    %v6188 = vpop.permute.xlu0 %6187
    %6189 = vrot.lane.b32.xlu0 %v5988, 112
    %v6190 = vpop.permute.xlu0 %6189
    %6191 = vrot.lane.b32.xlu0 %v5989, 112
    %v6192 = vpop.permute.xlu0 %6191
    %6193 = vrot.lane.b32.xlu0 %v5990, 112
    %v6194 = vpop.permute.xlu0 %6193
    %6195 = vrot.lane.b32.xlu0 %v5991, 112
    %v6196 = vpop.permute.xlu0 %6195
    %6197 = vrot.lane.b32.xlu0 %v5992, 112
    %v6198 = vpop.permute.xlu0 %6197
    %6199 = vrot.lane.b32.xlu0 %v5993, 112
    %v6200 = vpop.permute.xlu0 %6199
    %6201 = vrot.lane.b32.xlu0 %v5994, 112
    %v6202 = vpop.permute.xlu0 %6201
    %6203 = vrot.lane.b32.xlu0 %v5995, 112
    %v6204 = vpop.permute.xlu0 %6203
    %6205 = vrot.lane.b32.xlu0 %v5996, 112
    %v6206 = vpop.permute.xlu0 %6205
    %6207 = vrot.lane.b32.xlu0 %v5997, 112
    %v6208 = vpop.permute.xlu0 %6207
    %6209 = vrot.lane.b32.xlu0 %v5998, 112
    %v6210 = vpop.permute.xlu0 %6209
    %6211 = vrot.lane.b32.xlu0 %v5999, 112
    %v6212 = vpop.permute.xlu0 %6211
    %6213 = vrot.lane.b32.xlu0 %v6000, 112
    %v6214 = vpop.permute.xlu0 %6213
    %6215 = vrot.lane.b32.xlu0 %v6001, 112
    %v6216 = vpop.permute.xlu0 %6215
    %6217 = vrot.lane.b32.xlu0 %v6002, 112
    %v6218 = vpop.permute.xlu0 %6217
    %6219 = vrot.lane.b32.xlu0 %v6003, 112
    %v6220 = vpop.permute.xlu0 %6219
    %6221 = vrot.lane.b32.xlu0 %v6004, 112
    %v6222 = vpop.permute.xlu0 %6221
    %6223 = vrot.lane.b32.xlu0 %v6005, 112
    %v6224 = vpop.permute.xlu0 %6223
    %6225 = vrot.lane.b32.xlu0 %v6006, 112
    %v6226 = vpop.permute.xlu0 %6225
    %6227 = vrot.lane.b32.xlu0 %v6007, 112
    %v6228 = vpop.permute.xlu0 %6227
    %6229 = vrot.lane.b32.xlu0 %v6008, 112
    %v6230 = vpop.permute.xlu0 %6229
    %6231 = vrot.lane.b32.xlu0 %v6009, 112
    %v6232 = vpop.permute.xlu0 %6231
    %6233 = vrot.lane.b32.xlu0 %v6010, 112
    %v6234 = vpop.permute.xlu0 %6233
    %6235 = vrot.lane.b32.xlu0 %v6011, 112
    %v6236 = vpop.permute.xlu0 %6235
    %6237 = vrot.lane.b32.xlu0 %v6012, 112
    %v6238 = vpop.permute.xlu0 %6237
    %6239 = vrot.lane.b32.xlu0 %v6013, 112
    %v6240 = vpop.permute.xlu0 %6239
    %6241 = vrot.lane.b32.xlu0 %v6014, 112
    %v6242 = vpop.permute.xlu0 %6241
    %6243 = vrot.lane.b32.xlu0 %v6015, 112
    %v6244 = vpop.permute.xlu0 %6243
    %6245 = vrot.lane.b32.xlu0 %v6016, 112
    %v6246 = vpop.permute.xlu0 %6245
    %6247 = vrot.lane.b32.xlu0 %v6017, 112
    %v6248 = vpop.permute.xlu0 %6247
    %6249 = vrot.lane.b32.xlu0 %v6018, 112
    %v6250 = vpop.permute.xlu0 %6249
    %6251 = vrot.lane.b32.xlu0 %v6019, 112
    %v6252 = vpop.permute.xlu0 %6251
    %6253 = vrot.lane.b32.xlu0 %v6020, 112
    %v6254 = vpop.permute.xlu0 %6253
    %6255 = vrot.lane.b32.xlu0 %v6021, 112
    %v6256 = vpop.permute.xlu0 %6255
    %6257 = vrot.lane.b32.xlu0 %v6022, 112
    %v6258 = vpop.permute.xlu0 %6257
    %6259 = vrot.lane.b32.xlu0 %v6023, 112
    %v6260 = vpop.permute.xlu0 %6259
    %6261 = vrot.lane.b32.xlu0 %v6024, 112
    %v6262 = vpop.permute.xlu0 %6261
    %6263 = vrot.lane.b32.xlu0 %v6025, 112
    %v6264 = vpop.permute.xlu0 %6263
    %6265 = vrot.lane.b32.xlu0 %v6026, 112
    %v6266 = vpop.permute.xlu0 %6265
    %6267 = vrot.lane.b32.xlu0 %v6027, 112
    %v6268 = vpop.permute.xlu0 %6267
    %6269 = vrot.lane.b32.xlu0 %v6028, 112
    %v6270 = vpop.permute.xlu0 %6269
    %6271 = vrot.lane.b32.xlu0 %v6029, 112
    %v6272 = vpop.permute.xlu0 %6271
    %6273 = vrot.lane.b32.xlu0 %v6030, 112
    %v6274 = vpop.permute.xlu0 %6273
    %6275 = vrot.lane.b32.xlu0 %v6031, 112
    %v6276 = vpop.permute.xlu0 %6275
    %6277 = vrot.lane.b32.xlu0 %v6032, 112
    %v6278 = vpop.permute.xlu0 %6277
    %6279 = vrot.lane.b32.xlu0 %v6033, 112
    %v6280 = vpop.permute.xlu0 %6279
    %6281 = vrot.lane.b32.xlu0 %v6034, 112
    %v6282 = vpop.permute.xlu0 %6281
    %6283 = vrot.lane.b32.xlu0 %v6035, 112
    %v6284 = vpop.permute.xlu0 %6283
    %6285 = vrot.lane.b32.xlu0 %v6036, 112
    %v6286 = vpop.permute.xlu0 %6285
    %6287 = vrot.lane.b32.xlu0 %v6037, 112
    %v6288 = vpop.permute.xlu0 %6287
    %6289 = vrot.lane.b32.xlu0 %v6038, 112
    %v6290 = vpop.permute.xlu0 %6289
    %6291 = vrot.lane.b32.xlu0 %v6039, 112
    %v6292 = vpop.permute.xlu0 %6291
    %6293 = vrot.lane.b32.xlu0 %v6040, 112
    %v6294 = vpop.permute.xlu0 %6293
    %6295 = vrot.lane.b32.xlu0 %v6041, 112
    %v6296 = vpop.permute.xlu0 %6295
    %6297 = vrot.lane.b32.xlu0 %v6042, 112
    %v6298 = vpop.permute.xlu0 %6297
    %6299 = vrot.lane.b32.xlu0 %v6043, 112
    %v6300 = vpop.permute.xlu0 %6299
    %6301 = vrot.lane.b32.xlu0 %v6044, 112
    %v6302 = vpop.permute.xlu0 %6301
    %6303 = vrot.lane.b32.xlu0 %v6045, 112
    %v6304 = vpop.permute.xlu0 %6303
    %6305 = vrot.lane.b32.xlu0 %v6046, 112
    %v6306 = vpop.permute.xlu0 %6305
    %6307 = vrot.lane.b32.xlu0 %v6047, 112
    %v6308 = vpop.permute.xlu0 %6307
    %6309 = vrot.lane.b32.xlu0 %v6048, 112
    %v6310 = vpop.permute.xlu0 %6309
    %6311 = vrot.lane.b32.xlu0 %v6049, 112
    %v6312 = vpop.permute.xlu0 %6311
    %6313 = vrot.lane.b32.xlu0 %v6050, 112
    %v6314 = vpop.permute.xlu0 %6313
    %6315 = vrot.lane.b32.xlu0 %v6051, 112
    %v6316 = vpop.permute.xlu0 %6315
    %6317 = vrot.lane.b32.xlu0 %v6052, 112
    %v6318 = vpop.permute.xlu0 %6317
    %6319 = vrot.lane.b32.xlu0 %v6053, 112
    %v6320 = vpop.permute.xlu0 %6319
    %6321 = vrot.lane.b32.xlu0 %v6054, 112
    %v6322 = vpop.permute.xlu0 %6321
    %6323 = vrot.lane.b32.xlu0 %v6055, 112
    %v6324 = vpop.permute.xlu0 %6323
    %6325 = vrot.lane.b32.xlu0 %v6056, 112
    %v6326 = vpop.permute.xlu0 %6325
    %6327 = vrot.lane.b32.xlu0 %v6057, 112
    %v6328 = vpop.permute.xlu0 %6327
    %6329 = vrot.lane.b32.xlu0 %v6058, 112
    %v6330 = vpop.permute.xlu0 %6329
    %6331 = vrot.lane.b32.xlu0 %v6059, 112
    %v6332 = vpop.permute.xlu0 %6331
    %6333 = vrot.lane.b32.xlu0 %v6060, 112
    %v6334 = vpop.permute.xlu0 %6333
    %6335 = vrot.lane.b32.xlu0 %v6061, 112
    %v6336 = vpop.permute.xlu0 %6335
    %6337 = vrot.lane.b32.xlu0 %v6062, 112
    %v6338 = vpop.permute.xlu0 %6337
    %6339 = vrot.lane.b32.xlu0 %v6063, 112
    %v6340 = vpop.permute.xlu0 %6339
    %6341 = vrot.lane.b32.xlu0 %v6064, 112
    %v6342 = vpop.permute.xlu0 %6341
    %6343 = vrot.lane.b32.xlu0 %v6065, 112
    %v6344 = vpop.permute.xlu0 %6343
    %6345 = vrot.lane.b32.xlu0 %v6066, 112
    %v6346 = vpop.permute.xlu0 %6345
    %6347 = vrot.lane.b32.xlu0 %v6067, 112
    %v6348 = vpop.permute.xlu0 %6347
    %6349 = vrot.lane.b32.xlu0 %v6068, 112
    %v6350 = vpop.permute.xlu0 %6349
    %6351 = vrot.lane.b32.xlu0 %v6069, 112
    %v6352 = vpop.permute.xlu0 %6351
    %6353 = vrot.lane.b32.xlu0 %v6070, 112
    %v6354 = vpop.permute.xlu0 %6353
    %6355 = vrot.lane.b32.xlu0 %v6071, 112
    %v6356 = vpop.permute.xlu0 %6355
    %6357 = vrot.lane.b32.xlu0 %v6072, 112
    %v6358 = vpop.permute.xlu0 %6357
    %6359 = vrot.lane.b32.xlu0 %v6073, 112
    %v6360 = vpop.permute.xlu0 %6359
    %6361 = vrot.lane.b32.xlu0 %v6074, 112
    %v6362 = vpop.permute.xlu0 %6361
    %v6363 = vsel %vm2199, %v6172, %v6174
    %v6364 = vsel %vm2199, %v6174, %v6176
    %v6365 = vsel %vm2199, %v6178, %v6180
    %v6366 = vsel %vm2199, %v6180, %v6182
    %v6367 = vsel %vm2199, %v6184, %v6186
    %v6368 = vsel %vm2199, %v6186, %v6188
    %v6369 = vsel %vm2199, %v6190, %v6192
    %v6370 = vsel %vm2199, %v6192, %v6194
    %v6371 = vsel %vm2199, %v6196, %v6198
    %v6372 = vsel %vm2199, %v6198, %v6200
    %v6373 = vsel %vm2199, %v6202, %v6204
    %v6374 = vsel %vm2199, %v6204, %v6206
    %v6375 = vsel %vm2199, %v6208, %v6210
    %v6376 = vsel %vm2199, %v6210, %v6212
    %v6377 = vsel %vm2199, %v6214, %v6216
    %v6378 = vsel %vm2199, %v6216, %v6218
    %v6379 = vsel %vm2199, %v6220, %v6222
    %v6380 = vsel %vm2199, %v6222, %v6224
    %v6381 = vsel %vm2199, %v6226, %v6228
    %v6382 = vsel %vm2199, %v6228, %v6230
    %v6383 = vsel %vm2199, %v6232, %v6234
    %v6384 = vsel %vm2199, %v6234, %v6236
    %v6385 = vsel %vm2199, %v6238, %v6240
    %v6386 = vsel %vm2199, %v6240, %v6242
    %v6387 = vsel %vm2199, %v6244, %v6246
    %v6388 = vsel %vm2199, %v6246, %v6248
    %v6389 = vsel %vm2199, %v6250, %v6252
    %v6390 = vsel %vm2199, %v6252, %v6254
    %v6391 = vsel %vm2199, %v6256, %v6258
    %v6392 = vsel %vm2199, %v6258, %v6260
    %v6393 = vsel %vm2199, %v6262, %v6264
    %v6394 = vsel %vm2199, %v6264, %v6266
    %v6395 = vsel %vm2199, %v6268, %v6270
    %v6396 = vsel %vm2199, %v6270, %v6272
    %v6397 = vsel %vm2199, %v6274, %v6276
    %v6398 = vsel %vm2199, %v6276, %v6278
    %v6399 = vsel %vm2199, %v6280, %v6282
    %v6400 = vsel %vm2199, %v6282, %v6284
    %v6401 = vsel %vm2199, %v6286, %v6288
    %v6402 = vsel %vm2199, %v6288, %v6290
    %v6403 = vsel %vm2199, %v6292, %v6294
    %v6404 = vsel %vm2199, %v6294, %v6296
    %v6405 = vsel %vm2199, %v6298, %v6300
    %v6406 = vsel %vm2199, %v6300, %v6302
    %v6407 = vsel %vm2199, %v6304, %v6306
    %v6408 = vsel %vm2199, %v6306, %v6308
    %v6409 = vsel %vm2199, %v6310, %v6312
    %v6410 = vsel %vm2199, %v6312, %v6314
    %v6411 = vsel %vm2199, %v6316, %v6318
    %v6412 = vsel %vm2199, %v6318, %v6320
    %v6413 = vsel %vm2199, %v6322, %v6324
    %v6414 = vsel %vm2199, %v6324, %v6326
    %v6415 = vsel %vm2199, %v6328, %v6330
    %v6416 = vsel %vm2199, %v6330, %v6332
    %v6417 = vsel %vm2199, %v6334, %v6336
    %v6418 = vsel %vm2199, %v6336, %v6338
    %v6419 = vsel %vm2199, %v6340, %v6342
    %v6420 = vsel %vm2199, %v6342, %v6344
    %v6421 = vsel %vm2199, %v6346, %v6348
    %v6422 = vsel %vm2199, %v6348, %v6350
    %v6423 = vsel %vm2199, %v6352, %v6354
    %v6424 = vsel %vm2199, %v6354, %v6356
    %v6425 = vsel %vm2199, %v6358, %v6360
    %v6426 = vsel %vm2199, %v6360, %v6362
    %6491 = vst [vmem:[#allocation2] sm:$0xff] %v6363
    %6492 = vst [vmem:[#allocation2 + $0x8] sm:$0xff] %v6364
    %6493 = vst [vmem:[#allocation2 + $0x10] sm:$0xff] %v6365
    %6494 = vst [vmem:[#allocation2 + $0x18] sm:$0xff] %v6366
    %6495 = vst [vmem:[#allocation2 + $0x20] sm:$0xff] %v6367
    %6496 = vst [vmem:[#allocation2 + $0x28] sm:$0xff] %v6368
    %6497 = vst [vmem:[#allocation2 + $0x30] sm:$0xff] %v6369
    %6498 = vst [vmem:[#allocation2 + $0x38] sm:$0xff] %v6370
    %6499 = vst [vmem:[#allocation2 + $0x40] sm:$0xff] %v6371
    %6500 = vst [vmem:[#allocation2 + $0x48] sm:$0xff] %v6372
    %6501 = vst [vmem:[#allocation2 + $0x50] sm:$0xff] %v6373
    %6502 = vst [vmem:[#allocation2 + $0x58] sm:$0xff] %v6374
    %6503 = vst [vmem:[#allocation2 + $0x60] sm:$0xff] %v6375
    %6504 = vst [vmem:[#allocation2 + $0x68] sm:$0xff] %v6376
    %6505 = vst [vmem:[#allocation2 + $0x70] sm:$0xff] %v6377
    %6506 = vst [vmem:[#allocation2 + $0x78] sm:$0xff] %v6378
    %6507 = vst [vmem:[#allocation2 + $0x80] sm:$0xff] %v6379
    %6508 = vst [vmem:[#allocation2 + $0x88] sm:$0xff] %v6380
    %6509 = vst [vmem:[#allocation2 + $0x90] sm:$0xff] %v6381
    %6510 = vst [vmem:[#allocation2 + $0x98] sm:$0xff] %v6382
    %6511 = vst [vmem:[#allocation2 + $0xa0] sm:$0xff] %v6383
    %6512 = vst [vmem:[#allocation2 + $0xa8] sm:$0xff] %v6384
    %6513 = vst [vmem:[#allocation2 + $0xb0] sm:$0xff] %v6385
    %6514 = vst [vmem:[#allocation2 + $0xb8] sm:$0xff] %v6386
    %6515 = vst [vmem:[#allocation2 + $0xc0] sm:$0xff] %v6387
    %6516 = vst [vmem:[#allocation2 + $0xc8] sm:$0xff] %v6388
    %6517 = vst [vmem:[#allocation2 + $0xd0] sm:$0xff] %v6389
    %6518 = vst [vmem:[#allocation2 + $0xd8] sm:$0xff] %v6390
    %6519 = vst [vmem:[#allocation2 + $0xe0] sm:$0xff] %v6391
    %6520 = vst [vmem:[#allocation2 + $0xe8] sm:$0xff] %v6392
    %6521 = vst [vmem:[#allocation2 + $0xf0] sm:$0xff] %v6393
    %6522 = vst [vmem:[#allocation2 + $0xf8] sm:$0xff] %v6394
    %6523 = vst [vmem:[#allocation2 + $0x100] sm:$0xff] %v6395
    %6524 = vst [vmem:[#allocation2 + $0x108] sm:$0xff] %v6396
    %6525 = vst [vmem:[#allocation2 + $0x110] sm:$0xff] %v6397
    %6526 = vst [vmem:[#allocation2 + $0x118] sm:$0xff] %v6398
    %6527 = vst [vmem:[#allocation2 + $0x120] sm:$0xff] %v6399
    %6528 = vst [vmem:[#allocation2 + $0x128] sm:$0xff] %v6400
    %6529 = vst [vmem:[#allocation2 + $0x130] sm:$0xff] %v6401
    %6530 = vst [vmem:[#allocation2 + $0x138] sm:$0xff] %v6402
    %6531 = vst [vmem:[#allocation2 + $0x140] sm:$0xff] %v6403
    %6532 = vst [vmem:[#allocation2 + $0x148] sm:$0xff] %v6404
    %6533 = vst [vmem:[#allocation2 + $0x150] sm:$0xff] %v6405
    %6534 = vst [vmem:[#allocation2 + $0x158] sm:$0xff] %v6406
    %6535 = vst [vmem:[#allocation2 + $0x160] sm:$0xff] %v6407
    %6536 = vst [vmem:[#allocation2 + $0x168] sm:$0xff] %v6408
    %6537 = vst [vmem:[#allocation2 + $0x170] sm:$0xff] %v6409
    %6538 = vst [vmem:[#allocation2 + $0x178] sm:$0xff] %v6410
    %6539 = vst [vmem:[#allocation2 + $0x180] sm:$0xff] %v6411
    %6540 = vst [vmem:[#allocation2 + $0x188] sm:$0xff] %v6412
    %6541 = vst [vmem:[#allocation2 + $0x190] sm:$0xff] %v6413
    %6542 = vst [vmem:[#allocation2 + $0x198] sm:$0xff] %v6414
    %6543 = vst [vmem:[#allocation2 + $0x1a0] sm:$0xff] %v6415
    %6544 = vst [vmem:[#allocation2 + $0x1a8] sm:$0xff] %v6416
    %6545 = vst [vmem:[#allocation2 + $0x1b0] sm:$0xff] %v6417
    %6546 = vst [vmem:[#allocation2 + $0x1b8] sm:$0xff] %v6418
    %6547 = vst [vmem:[#allocation2 + $0x1c0] sm:$0xff] %v6419
    %6548 = vst [vmem:[#allocation2 + $0x1c8] sm:$0xff] %v6420
    %6549 = vst [vmem:[#allocation2 + $0x1d0] sm:$0xff] %v6421
    %6550 = vst [vmem:[#allocation2 + $0x1d8] sm:$0xff] %v6422
    %6551 = vst [vmem:[#allocation2 + $0x1e0] sm:$0xff] %v6423
    %6552 = vst [vmem:[#allocation2 + $0x1e8] sm:$0xff] %v6424
    %6553 = vst [vmem:[#allocation2 + $0x1f0] sm:$0xff] %v6425
    %6554 = vst [vmem:[#allocation2 + $0x1f8] sm:$0xff] %v6426
    // Predicated region
    $region22: #{tpu_custom_call.1} parent=1 // pred_check
      _
    $region23: #{tpu_custom_call.1} parent=1 // pred_check_branch
      %6556 = sbr.rel (0) target = $region25
    $region24: #{tpu_custom_call.1} parent=1 // pred_region
      %s6558 = ssub.s32 8192, 8192
      %6559 = vsyncadd [#allocation3], %s6558
      %s6560 = sshll.u32 [#allocation2], 4
      %s6561 = int_to_ptr.vmem [resolvable:$true] %s6560
      %6566 = dma.vmem_to_hbm [thread:$0]  %s6561, 8192, %s5, [#allocation3], 256, 256, 16
    $region25: #{tpu_custom_call.1} parent=1 // pred_fallthru
      _
    // Predicated region
    $region26: #{tpu_custom_call.1} parent=1 // pred_check
      _
    $region27: #{tpu_custom_call.1} parent=1 // pred_check_branch
      %6568 = sbr.rel (0) target = $region29
    $region28: #{tpu_custom_call.1} parent=1 // pred_region
      %6569 = dma.done [#allocation3], 8192
    $region29: #{tpu_custom_call.1} parent=1 // pred_fallthru
      _
    %6570 = vsyncpa [#allocation3], 1

</llo_original>
